<compile_context>
chip_gen: v7x
topology: tpu7x:2x2x1
jax: 0.10.0
libtpu: 0.0.40
codegen_flags: <defaults>
</compile_context>

<pallas_src>
import functools

import jax
import jax.numpy as jnp
from jax.experimental import pallas as pl
from jax.experimental.pallas import tpu as pltpu

LANE = 128
_X_RESIDENT_MAX_BYTES = 8 * 1024 * 1024   # keep K-side x VMEM-resident below this
_VMEM_LIMIT_BYTES = 64 * 1024 * 1024      # <= physical VMEM on v5e/v6e/v7x


def _round_up(x, m):
    return ((x + m - 1) // m) * m


def _pad_and_tiles(n):
    """Pad N to a multiple of 256 and pick the largest row/K tiles dividing it.

    Large tiles (TM<=1024, TK<=2048 -> adj tile <= 2 MiB int8, double-buffered
    4 MiB) keep the kernel HBM-bound instead of grid-step-overhead-bound and fit
    comfortably within v7x's scoped VMEM.  TM is halved (when possible) so the
    'parallel' row axis has >= 2 tiles for the v7x megacore.
    """
    n_pad = _round_up(max(n, 256), 256)
    tk = 256
    for cand in (2048, 1024, 512, 256):
        if n_pad % cand == 0:
            tk = cand
            break
    tm = min(1024, tk)                 # tm divides tk, hence divides n_pad
    if n_pad // tm < 2 and tm > 256:
        tm //= 2                       # keep >=2 row tiles for megacore sharding
    return n_pad, tm, tk


def _sage_layer1_kernel(x_row_ref, adj_ref, x_col_ref, w_self_ref, w_neigh_ref,
                        o_ref, deg_inv_ref, acc_ref, deg_ref, *, tk, x_resident):
    """GraphSageConv + ReLU; also emits deg_inv = 1/(rowsum(adj)+1) for reuse."""
    k = pl.program_id(1)

    @pl.when(k == 0)
    def _init():
        acc_ref[...] = jnp.zeros_like(acc_ref)
        deg_ref[...] = jnp.zeros_like(deg_ref)

    # int8 adjacency tile -> bf16 right before the MXU (upcast hides under DMA).
    adj = adj_ref[...].astype(jnp.bfloat16)
    if x_resident:
        start = pl.multiple_of(k * tk, tk)
        x_blk = x_col_ref[pl.ds(start, tk), :]
    else:
        x_blk = x_col_ref[...]
    acc_ref[...] += jnp.dot(adj, x_blk, preferred_element_type=jnp.float32)
    # Partial row-degree accumulation (f32 for exactness at high degrees).
    deg_ref[...] += jnp.sum(adj_ref[...].astype(jnp.float32), axis=1,
                            keepdims=True)

    @pl.when(k == pl.num_programs(1) - 1)
    def _finalize():
        deg_inv = 1.0 / (deg_ref[...] + 1.0)
        deg_inv_ref[...] = deg_inv
        neigh = (acc_ref[...] * deg_inv).astype(jnp.bfloat16)
        out = jnp.dot(x_row_ref[...], w_self_ref[...],
                      preferred_element_type=jnp.float32)
        out += jnp.dot(neigh, w_neigh_ref[...],
                       preferred_element_type=jnp.float32)
        o_ref[...] = jnp.maximum(out, 0.0).astype(o_ref.dtype)


def _sage_layer2_kernel(x_row_ref, adj_ref, x_col_ref, w_self_ref, w_neigh_ref,
                        deg_inv_ref, o_ref, acc_ref, *, tk, x_resident):
    """GraphSageConv + ReLU, reusing the deg_inv produced by layer 1."""
    k = pl.program_id(1)

    @pl.when(k == 0)
    def _init():
        acc_ref[...] = jnp.zeros_like(acc_ref)

    adj = adj_ref[...].astype(jnp.bfloat16)
    if x_resident:
        start = pl.multiple_of(k * tk, tk)
        x_blk = x_col_ref[pl.ds(start, tk), :]
    else:
        x_blk = x_col_ref[...]
    acc_ref[...] += jnp.dot(adj, x_blk, preferred_element_type=jnp.float32)

    @pl.when(k == pl.num_programs(1) - 1)
    def _finalize():
        neigh = (acc_ref[...] * deg_inv_ref[...]).astype(jnp.bfloat16)
        out = jnp.dot(x_row_ref[...], w_self_ref[...],
                      preferred_element_type=jnp.float32)
        out += jnp.dot(neigh, w_neigh_ref[...],
                       preferred_element_type=jnp.float32)
        o_ref[...] = jnp.maximum(out, 0.0).astype(o_ref.dtype)


def _common_specs(n_pad, fp, hp, tm, tk, x_resident):
    x_row_spec = pl.BlockSpec((tm, fp), lambda i, k: (i, 0))      # self path (read once)
    adj_spec = pl.BlockSpec((tm, tk), lambda i, k: (i, k))        # int8 adjacency tile
    if x_resident:
        # Full x kept VMEM-resident across the whole grid; sliced with pl.ds.
        x_col_spec = pl.BlockSpec((n_pad, fp), lambda i, k: (0, 0))
    else:
        x_col_spec = pl.BlockSpec((tk, fp), lambda i, k: (k, 0))
    w_spec = pl.BlockSpec((fp, hp), lambda i, k: (0, 0))          # VMEM resident
    return x_row_spec, adj_spec, x_col_spec, w_spec


def sage_layer1(x, adj_i8, w_self, w_neigh, *, tm, tk, x_resident,
                out_dtype=jnp.bfloat16):
    n_pad, fp = x.shape
    hp = w_self.shape[1]
    grid = (n_pad // tm, n_pad // tk)
    x_row_spec, adj_spec, x_col_spec, w_spec = _common_specs(
        n_pad, fp, hp, tm, tk, x_resident)
    kernel = functools.partial(_sage_layer1_kernel, tk=tk, x_resident=x_resident)
    return pl.pallas_call(
        kernel,
        out_shape=(jax.ShapeDtypeStruct((n_pad, hp), out_dtype),
                   jax.ShapeDtypeStruct((n_pad, 1), jnp.float32)),
        grid_spec=pltpu.PrefetchScalarGridSpec(
            num_scalar_prefetch=0,
            grid=grid,
            in_specs=[x_row_spec, adj_spec, x_col_spec, w_spec, w_spec],
            out_specs=[pl.BlockSpec((tm, hp), lambda i, k: (i, 0)),
                       pl.BlockSpec((tm, 1), lambda i, k: (i, 0))],
            scratch_shapes=[pltpu.VMEM((tm, fp), jnp.float32),   # adj@x accumulator
                            pltpu.VMEM((tm, 1), jnp.float32)]),  # row-degree accumulator
        compiler_params=pltpu.CompilerParams(
            dimension_semantics=("parallel", "arbitrary"),
            vmem_limit_bytes=_VMEM_LIMIT_BYTES),
    )(x, adj_i8, x, w_self, w_neigh)


def sage_layer2(x, adj_i8, deg_inv, w_self, w_neigh, *, tm, tk, x_resident,
                out_dtype=jnp.float32):
    n_pad, fp = x.shape
    hp = w_self.shape[1]
    grid = (n_pad // tm, n_pad // tk)
    x_row_spec, adj_spec, x_col_spec, w_spec = _common_specs(
        n_pad, fp, hp, tm, tk, x_resident)
    kernel = functools.partial(_sage_layer2_kernel, tk=tk, x_resident=x_resident)
    return pl.pallas_call(
        kernel,
        out_shape=jax.ShapeDtypeStruct((n_pad, hp), out_dtype),
        grid_spec=pltpu.PrefetchScalarGridSpec(
            num_scalar_prefetch=0,
            grid=grid,
            in_specs=[x_row_spec, adj_spec, x_col_spec, w_spec, w_spec,
                      pl.BlockSpec((tm, 1), lambda i, k: (i, 0))],
            out_specs=pl.BlockSpec((tm, hp), lambda i, k: (i, 0)),
            scratch_shapes=[pltpu.VMEM((tm, fp), jnp.float32)]),
        compiler_params=pltpu.CompilerParams(
            dimension_semantics=("parallel", "arbitrary"),
            vmem_limit_bytes=_VMEM_LIMIT_BYTES),
    )(x, adj_i8, x, w_self, w_neigh, deg_inv)


def init_params(key, nfeat, nhid):
    """Params mirroring GraphSageConv.reset_parameters (normal_ init, no bias),
    split into self/neigh halves, transposed, lane-padded, cast to bf16."""
    k1, k2 = jax.random.split(key)
    fp = _round_up(max(nfeat, LANE), LANE)
    hp = _round_up(max(nhid, LANE), LANE)

    # PyTorch nn.Linear weight shape: (out_features, 2*in_features), init N(0, 1).
    w1 = jax.random.normal(k1, (nhid, 2 * nfeat), dtype=jnp.float32)
    w2 = jax.random.normal(k2, (nhid, 2 * nhid), dtype=jnp.float32)

    def split_pad(w, fin, fin_pad):
        w_self = jnp.transpose(w[:, :fin])     # (fin, nhid): multiplies features
        w_neigh = jnp.transpose(w[:, fin:])    # (fin, nhid): multiplies neigh
        pad = ((0, fin_pad - fin), (0, hp - nhid))
        return (jnp.pad(w_self, pad).astype(jnp.bfloat16),
                jnp.pad(w_neigh, pad).astype(jnp.bfloat16))

    w1s, w1n = split_pad(w1, nfeat, fp)
    w2s, w2n = split_pad(w2, nhid, hp)
    return {"w1_self": w1s, "w1_neigh": w1n, "w2_self": w2s, "w2_neigh": w2n}


@functools.partial(jax.jit, static_argnames=("nhid",))
def graphsage_forward(x, adj, params, *, nhid):
    n, f = x.shape
    n_pad, tm, tk = _pad_and_tiles(n)
    fp = params["w1_self"].shape[0]
    hp = params["w2_self"].shape[0]
    x_resident = n_pad * max(fp, hp) * 2 <= _X_RESIDENT_MAX_BYTES

    # int8 adjacency (binary 0/1 edges are exact in int8), zero-padded; features
    # bf16, zero-padded.  Padded rows/cols are all-zero so they contribute nothing
    # and deg_inv = 1 on padded rows multiplies a zero accumulator.
    adj_i8 = jnp.pad(adj, ((0, n_pad - n), (0, n_pad - n))).astype(jnp.int8)
    x_p = jnp.pad(x, ((0, n_pad - n), (0, fp - f))).astype(jnp.bfloat16)

    # layer 1: relu(sage1(x, adj)); deg_inv = 1/(deg+1) computed in-kernel.
    h, deg_inv = sage_layer1(x_p, adj_i8, params["w1_self"], params["w1_neigh"],
                             tm=tm, tk=tk, x_resident=x_resident,
                             out_dtype=jnp.bfloat16)
    # layer 2: relu(sage2(h, adj)) reusing deg_inv; dropout is identity (inference).
    out = sage_layer2(h, adj_i8, deg_inv, params["w2_self"], params["w2_neigh"],
                      tm=tm, tk=tk, x_resident=x_resident,
                      out_dtype=jnp.float32)
    return out[:n, :nhid]


def _reference_forward(x, adj, params, nfeat, nhid):
    """Pure-JAX f32 reference (same padded bf16 weights, math in f32)."""
    def layer(x, adj, w_s, w_n, fin):
        deg = jnp.sum(adj, axis=1, keepdims=True) + 1.0
        neigh = (adj @ x) / deg
        ws = w_s.astype(jnp.float32)[:fin, :nhid]
        wn = w_n.astype(jnp.float32)[:fin, :nhid]
        return jnp.maximum(x @ ws + neigh @ wn, 0.0)

    h = layer(x, adj, params["w1_self"], params["w1_neigh"], nfeat)
    h = layer(h, adj, params["w2_self"], params["w2_neigh"], nhid)
    return h


if __name__ == "__main__":
    key = jax.random.PRNGKey(0)
    k_x, k_adj, k_p = jax.random.split(key, 3)

    N, NFEAT, NHID = 16, 8, 32   # small graph: 16 nodes, 8 input feats, 32 hidden

    x = jax.random.normal(k_x, (N, NFEAT), dtype=jnp.float32)
    # symmetric binary adjacency (dense)
    a = (jax.random.uniform(k_adj, (N, N)) < 0.3).astype(jnp.float32)
    adj = jnp.maximum(a, a.T)

    params = init_params(k_p, NFEAT, NHID)

    out = graphsage_forward(x, adj, params, nhid=NHID)
    jax.block_until_ready(out)

    assert out.shape == (N, NHID)
    assert out.dtype == jnp.float32

    # Hard accuracy check vs pure-JAX f32 reference (bf16 activations in the
    # kernel -> small, bounded deviation).
    ref = _reference_forward(x, adj, params, NFEAT, NHID)
    max_err = float(jnp.max(jnp.abs(out - ref)))
    ref_scale = float(jnp.max(jnp.abs(ref))) + 1e-6
    rel_err = max_err / ref_scale
    print(f"max_abs_err_vs_f32_ref={max_err:.4f} rel_err={rel_err:.5f}")
    assert rel_err < 2e-2, f"numerical mismatch: rel_err={rel_err}"

    print("KERNEL_OK")
</pallas_src>

<mosaic_0001>
module attributes {stable_mosaic.version = 11 : i64} {
  func.func @_sage_layer1_kernel(%arg0: i32, %arg1: i32, %arg2: memref<256x128xbf16, #tpu.memory_space<vmem>>, %arg3: memref<256x256xi8, #tpu.memory_space<vmem>>, %arg4: memref<256x128xbf16, #tpu.memory_space<vmem>>, %arg5: memref<128x128xbf16, #tpu.memory_space<vmem>>, %arg6: memref<128x128xbf16, #tpu.memory_space<vmem>>, %arg7: memref<256x128xbf16, #tpu.memory_space<vmem>>, %arg8: memref<256x1xf32, #tpu.memory_space<vmem>>, %arg9: memref<256x128xf32, #tpu.memory_space<vmem>>, %arg10: memref<256x1xf32, #tpu.memory_space<vmem>>) attributes {dimension_semantics = [#tpu.dimension_semantics<parallel>, #tpu.dimension_semantics<arbitrary>], iteration_bounds = array<i64: 1, 1>, scalar_prefetch = 0 : i64, scratch_operands = 2 : i64, tpu.core_type = #tpu.core_type<tc>, window_params = [{transform_indices = @transform_0, window_bounds = array<i64: 256, 128>}, {transform_indices = @transform_1, window_bounds = array<i64: 256, 256>}, {pipeline_mode = #tpu.pipeline_mode<synchronous>, transform_indices = @transform_2, window_bounds = array<i64: 256, 128>}, {pipeline_mode = #tpu.pipeline_mode<synchronous>, transform_indices = @transform_3, window_bounds = array<i64: 128, 128>}, {pipeline_mode = #tpu.pipeline_mode<synchronous>, transform_indices = @transform_4, window_bounds = array<i64: 128, 128>}, {transform_indices = @transform_5, window_bounds = array<i64: 256, 128>}, {transform_indices = @transform_6, window_bounds = array<i64: 256, 1>}]} {
    %c0_i32 = arith.constant 0 : i32
    %0 = arith.cmpi eq, %arg1, %c0_i32 : i32
    %1 = arith.extui %0 : i1 to i32
    %c0_i32_0 = arith.constant 0 : i32
    %2 = arith.cmpi ne, %1, %c0_i32_0 : i32
    scf.if %2 {
      %cst_16 = arith.constant 0.000000e+00 : f32
      %23 = vector.broadcast %cst_16 : f32 to vector<256x128xf32>
      %c0_17 = arith.constant 0 : index
      %c0_18 = arith.constant 0 : index
      %24 = vector.load %arg9[%c0_17, %c0_18] : memref<256x128xf32, #tpu.memory_space<vmem>>, vector<256x128xf32>
      tpu.vector_store %arg9[%c0_17, %c0_18], %23 {strides = array<i32>} : memref<256x128xf32, #tpu.memory_space<vmem>>, vector<256x128xf32>,
      %cst_19 = arith.constant 0.000000e+00 : f32
      %25 = vector.broadcast %cst_19 : f32 to vector<256x1xf32>
      %c0_20 = arith.constant 0 : index
      %c0_21 = arith.constant 0 : index
      %26 = vector.load %arg10[%c0_20, %c0_21] : memref<256x1xf32, #tpu.memory_space<vmem>>, vector<256x1xf32>
      tpu.vector_store %arg10[%c0_20, %c0_21], %25 {strides = array<i32>} : memref<256x1xf32, #tpu.memory_space<vmem>>, vector<256x1xf32>,
    } else {
    }
    %c0 = arith.constant 0 : index
    %c0_1 = arith.constant 0 : index
    %3 = vector.load %arg3[%c0, %c0_1] : memref<256x256xi8, #tpu.memory_space<vmem>>, vector<256x256xi8>
    %4 = arith.sitofp %3 : vector<256x256xi8> to vector<256x256xbf16>
    %c256_i32 = arith.constant 256 : i32
    %5 = arith.muli %arg1, %c256_i32 : i32
    %6 = tpu.assume_multiple %5, 256 : i32
    %7 = arith.index_cast %6 : i32 to index
    %c0_2 = arith.constant 0 : index
    %8 = vector.load %arg4[%7, %c0_2] : memref<256x128xbf16, #tpu.memory_space<vmem>>, vector<256x128xbf16>
    %c0_3 = arith.constant 0 : index
    %c0_4 = arith.constant 0 : index
    %9 = vector.load %arg9[%c0_3, %c0_4] : memref<256x128xf32, #tpu.memory_space<vmem>>, vector<256x128xf32>
    %cst = arith.constant dense<0.000000e+00> : vector<256x128xf32>
    %10 = tpu.matmul %4, %8, %cst {dimension_numbers = #tpu.dot_dimension_numbers<[1], [0], [0], [1], [0, 0, 1, 1], [], []>} : vector<256x256xbf16>, vector<256x128xbf16>, vector<256x128xf32> -> vector<256x128xf32>
    %11 = arith.addf %9, %10 : vector<256x128xf32>
    %c0_5 = arith.constant 0 : index
    %c0_6 = arith.constant 0 : index
    %12 = vector.load %arg9[%c0_5, %c0_6] : memref<256x128xf32, #tpu.memory_space<vmem>>, vector<256x128xf32>
    tpu.vector_store %arg9[%c0_5, %c0_6], %11 {strides = array<i32>} : memref<256x128xf32, #tpu.memory_space<vmem>>, vector<256x128xf32>,
    %c0_7 = arith.constant 0 : index
    %c0_8 = arith.constant 0 : index
    %13 = vector.load %arg10[%c0_7, %c0_8] : memref<256x1xf32, #tpu.memory_space<vmem>>, vector<256x1xf32>
    %c0_9 = arith.constant 0 : index
    %c0_10 = arith.constant 0 : index
    %14 = vector.load %arg3[%c0_9, %c0_10] : memref<256x256xi8, #tpu.memory_space<vmem>>, vector<256x256xi8>
    %15 = arith.sitofp %14 : vector<256x256xi8> to vector<256x256xf32>
    %cst_11 = arith.constant dense<0.000000e+00> : vector<256xf32>
    %16 = vector.multi_reduction <add>, %15, %cst_11 [1] : vector<256x256xf32> to vector<256xf32>
    %17 = vector.shape_cast %16 : vector<256xf32> to vector<256x1xf32>
    %18 = arith.addf %13, %17 : vector<256x1xf32>
    %c0_12 = arith.constant 0 : index
    %c0_13 = arith.constant 0 : index
    %19 = vector.load %arg10[%c0_12, %c0_13] : memref<256x1xf32, #tpu.memory_space<vmem>>, vector<256x1xf32>
    tpu.vector_store %arg10[%c0_12, %c0_13], %18 {strides = array<i32>} : memref<256x1xf32, #tpu.memory_space<vmem>>, vector<256x1xf32>,
    %c0_i32_14 = arith.constant 0 : i32
    %20 = arith.cmpi eq, %arg1, %c0_i32_14 : i32
    %21 = arith.extui %20 : i1 to i32
    %c0_i32_15 = arith.constant 0 : i32
    %22 = arith.cmpi ne, %21, %c0_i32_15 : i32
    scf.if %22 {
      %c0_16 = arith.constant 0 : index
      %c0_17 = arith.constant 0 : index
      %23 = vector.load %arg10[%c0_16, %c0_17] : memref<256x1xf32, #tpu.memory_space<vmem>>, vector<256x1xf32>
      %cst_18 = arith.constant 1.000000e+00 : f32
      %24 = vector.broadcast %cst_18 : f32 to vector<256x1xf32>
      %25 = arith.addf %23, %24 : vector<256x1xf32>
      %cst_19 = arith.constant 1.000000e+00 : f32
      %26 = vector.broadcast %cst_19 : f32 to vector<256x1xf32>
      %27 = arith.divf %26, %25 : vector<256x1xf32>
      %c0_20 = arith.constant 0 : index
      %c0_21 = arith.constant 0 : index
      %28 = vector.load %arg8[%c0_20, %c0_21] : memref<256x1xf32, #tpu.memory_space<vmem>>, vector<256x1xf32>
      tpu.vector_store %arg8[%c0_20, %c0_21], %27 {strides = array<i32>} : memref<256x1xf32, #tpu.memory_space<vmem>>, vector<256x1xf32>,
      %c0_22 = arith.constant 0 : index
      %c0_23 = arith.constant 0 : index
      %29 = vector.load %arg9[%c0_22, %c0_23] : memref<256x128xf32, #tpu.memory_space<vmem>>, vector<256x128xf32>
      %30 = vector.broadcast %27 : vector<256x1xf32> to vector<256x128xf32>
      %31 = arith.mulf %29, %30 : vector<256x128xf32>
      %32 = arith.truncf %31 : vector<256x128xf32> to vector<256x128xbf16>
      %c0_24 = arith.constant 0 : index
      %c0_25 = arith.constant 0 : index
      %33 = vector.load %arg2[%c0_24, %c0_25] : memref<256x128xbf16, #tpu.memory_space<vmem>>, vector<256x128xbf16>
      %c0_26 = arith.constant 0 : index
      %c0_27 = arith.constant 0 : index
      %34 = vector.load %arg5[%c0_26, %c0_27] : memref<128x128xbf16, #tpu.memory_space<vmem>>, vector<128x128xbf16>
      %cst_28 = arith.constant dense<0.000000e+00> : vector<256x128xf32>
      %35 = tpu.matmul %33, %34, %cst_28 {dimension_numbers = #tpu.dot_dimension_numbers<[1], [0], [0], [1], [0, 0, 1, 1], [], []>} : vector<256x128xbf16>, vector<128x128xbf16>, vector<256x128xf32> -> vector<256x128xf32>
      %c0_29 = arith.constant 0 : index
      %c0_30 = arith.constant 0 : index
      %36 = vector.load %arg6[%c0_29, %c0_30] : memref<128x128xbf16, #tpu.memory_space<vmem>>, vector<128x128xbf16>
      %cst_31 = arith.constant dense<0.000000e+00> : vector<256x128xf32>
      %37 = tpu.matmul %32, %36, %cst_31 {dimension_numbers = #tpu.dot_dimension_numbers<[1], [0], [0], [1], [0, 0, 1, 1], [], []>} : vector<256x128xbf16>, vector<128x128xbf16>, vector<256x128xf32> -> vector<256x128xf32>
      %38 = arith.addf %35, %37 : vector<256x128xf32>
      %cst_32 = arith.constant 0.000000e+00 : f32
      %39 = vector.broadcast %cst_32 : f32 to vector<256x128xf32>
      %40 = arith.maximumf %38, %39 : vector<256x128xf32>
      %41 = arith.truncf %40 : vector<256x128xf32> to vector<256x128xbf16>
      %c0_33 = arith.constant 0 : index
      %c0_34 = arith.constant 0 : index
      %42 = vector.load %arg7[%c0_33, %c0_34] : memref<256x128xbf16, #tpu.memory_space<vmem>>, vector<256x128xbf16>
      tpu.vector_store %arg7[%c0_33, %c0_34], %41 {strides = array<i32>} : memref<256x128xbf16, #tpu.memory_space<vmem>>, vector<256x128xbf16>,
    } else {
    }
    return
  }
  func.func @transform_0(%arg0: i32, %arg1: i32) -> (i32, i32) {
    %c0_i32 = arith.constant 0 : i32
    %c0_i32_0 = arith.constant 0 : i32
    return %arg0, %c0_i32 : i32, i32
  }
  func.func @transform_1(%arg0: i32, %arg1: i32) -> (i32, i32) {
    %c0_i32 = arith.constant 0 : i32
    return %arg0, %arg1 : i32, i32
  }
  func.func @transform_2(%arg0: i32, %arg1: i32) -> (i32, i32) {
    %c0_i32 = arith.constant 0 : i32
    %c0_i32_0 = arith.constant 0 : i32
    %c0_i32_1 = arith.constant 0 : i32
    return %c0_i32, %c0_i32_0 : i32, i32
  }
  func.func @transform_3(%arg0: i32, %arg1: i32) -> (i32, i32) {
    %c0_i32 = arith.constant 0 : i32
    %c0_i32_0 = arith.constant 0 : i32
    %c0_i32_1 = arith.constant 0 : i32
    return %c0_i32, %c0_i32_0 : i32, i32
  }
  func.func @transform_4(%arg0: i32, %arg1: i32) -> (i32, i32) {
    %c0_i32 = arith.constant 0 : i32
    %c0_i32_0 = arith.constant 0 : i32
    %c0_i32_1 = arith.constant 0 : i32
    return %c0_i32, %c0_i32_0 : i32, i32
  }
  func.func @transform_5(%arg0: i32, %arg1: i32) -> (i32, i32) {
    %c0_i32 = arith.constant 0 : i32
    %c0_i32_0 = arith.constant 0 : i32
    return %arg0, %c0_i32 : i32, i32
  }
  func.func @transform_6(%arg0: i32, %arg1: i32) -> (i32, i32) {
    %c0_i32 = arith.constant 0 : i32
    %c0_i32_0 = arith.constant 0 : i32
    return %arg0, %c0_i32 : i32, i32
  }
}

module attributes {stable_mosaic.version = 11 : i64} {
  func.func @_sage_layer2_kernel(%arg0: i32, %arg1: i32, %arg2: memref<256x128xbf16, #tpu.memory_space<vmem>>, %arg3: memref<256x256xi8, #tpu.memory_space<vmem>>, %arg4: memref<256x128xbf16, #tpu.memory_space<vmem>>, %arg5: memref<128x128xbf16, #tpu.memory_space<vmem>>, %arg6: memref<128x128xbf16, #tpu.memory_space<vmem>>, %arg7: memref<256x1xf32, #tpu.memory_space<vmem>>, %arg8: memref<256x128xf32, #tpu.memory_space<vmem>>, %arg9: memref<256x128xf32, #tpu.memory_space<vmem>>) attributes {dimension_semantics = [#tpu.dimension_semantics<parallel>, #tpu.dimension_semantics<arbitrary>], iteration_bounds = array<i64: 1, 1>, scalar_prefetch = 0 : i64, scratch_operands = 1 : i64, tpu.core_type = #tpu.core_type<tc>, window_params = [{transform_indices = @transform_0, window_bounds = array<i64: 256, 128>}, {transform_indices = @transform_1, window_bounds = array<i64: 256, 256>}, {pipeline_mode = #tpu.pipeline_mode<synchronous>, transform_indices = @transform_2, window_bounds = array<i64: 256, 128>}, {pipeline_mode = #tpu.pipeline_mode<synchronous>, transform_indices = @transform_3, window_bounds = array<i64: 128, 128>}, {pipeline_mode = #tpu.pipeline_mode<synchronous>, transform_indices = @transform_4, window_bounds = array<i64: 128, 128>}, {transform_indices = @transform_5, window_bounds = array<i64: 256, 1>}, {transform_indices = @transform_6, window_bounds = array<i64: 256, 128>}]} {
    %c0_i32 = arith.constant 0 : i32
    %0 = arith.cmpi eq, %arg1, %c0_i32 : i32
    %1 = arith.extui %0 : i1 to i32
    %c0_i32_0 = arith.constant 0 : i32
    %2 = arith.cmpi ne, %1, %c0_i32_0 : i32
    scf.if %2 {
      %cst_9 = arith.constant 0.000000e+00 : f32
      %16 = vector.broadcast %cst_9 : f32 to vector<256x128xf32>
      %c0_10 = arith.constant 0 : index
      %c0_11 = arith.constant 0 : index
      %17 = vector.load %arg9[%c0_10, %c0_11] : memref<256x128xf32, #tpu.memory_space<vmem>>, vector<256x128xf32>
      tpu.vector_store %arg9[%c0_10, %c0_11], %16 {strides = array<i32>} : memref<256x128xf32, #tpu.memory_space<vmem>>, vector<256x128xf32>,
    } else {
    }
    %c0 = arith.constant 0 : index
    %c0_1 = arith.constant 0 : index
    %3 = vector.load %arg3[%c0, %c0_1] : memref<256x256xi8, #tpu.memory_space<vmem>>, vector<256x256xi8>
    %4 = arith.sitofp %3 : vector<256x256xi8> to vector<256x256xbf16>
    %c256_i32 = arith.constant 256 : i32
    %5 = arith.muli %arg1, %c256_i32 : i32
    %6 = tpu.assume_multiple %5, 256 : i32
    %7 = arith.index_cast %6 : i32 to index
    %c0_2 = arith.constant 0 : index
    %8 = vector.load %arg4[%7, %c0_2] : memref<256x128xbf16, #tpu.memory_space<vmem>>, vector<256x128xbf16>
    %c0_3 = arith.constant 0 : index
    %c0_4 = arith.constant 0 : index
    %9 = vector.load %arg9[%c0_3, %c0_4] : memref<256x128xf32, #tpu.memory_space<vmem>>, vector<256x128xf32>
    %cst = arith.constant dense<0.000000e+00> : vector<256x128xf32>
    %10 = tpu.matmul %4, %8, %cst {dimension_numbers = #tpu.dot_dimension_numbers<[1], [0], [0], [1], [0, 0, 1, 1], [], []>} : vector<256x256xbf16>, vector<256x128xbf16>, vector<256x128xf32> -> vector<256x128xf32>
    %11 = arith.addf %9, %10 : vector<256x128xf32>
    %c0_5 = arith.constant 0 : index
    %c0_6 = arith.constant 0 : index
    %12 = vector.load %arg9[%c0_5, %c0_6] : memref<256x128xf32, #tpu.memory_space<vmem>>, vector<256x128xf32>
    tpu.vector_store %arg9[%c0_5, %c0_6], %11 {strides = array<i32>} : memref<256x128xf32, #tpu.memory_space<vmem>>, vector<256x128xf32>,
    %c0_i32_7 = arith.constant 0 : i32
    %13 = arith.cmpi eq, %arg1, %c0_i32_7 : i32
    %14 = arith.extui %13 : i1 to i32
    %c0_i32_8 = arith.constant 0 : i32
    %15 = arith.cmpi ne, %14, %c0_i32_8 : i32
    scf.if %15 {
      %c0_9 = arith.constant 0 : index
      %c0_10 = arith.constant 0 : index
      %16 = vector.load %arg9[%c0_9, %c0_10] : memref<256x128xf32, #tpu.memory_space<vmem>>, vector<256x128xf32>
      %c0_11 = arith.constant 0 : index
      %c0_12 = arith.constant 0 : index
      %17 = vector.load %arg7[%c0_11, %c0_12] : memref<256x1xf32, #tpu.memory_space<vmem>>, vector<256x1xf32>
      %18 = vector.broadcast %17 : vector<256x1xf32> to vector<256x128xf32>
      %19 = arith.mulf %16, %18 : vector<256x128xf32>
      %20 = arith.truncf %19 : vector<256x128xf32> to vector<256x128xbf16>
      %c0_13 = arith.constant 0 : index
      %c0_14 = arith.constant 0 : index
      %21 = vector.load %arg2[%c0_13, %c0_14] : memref<256x128xbf16, #tpu.memory_space<vmem>>, vector<256x128xbf16>
      %c0_15 = arith.constant 0 : index
      %c0_16 = arith.constant 0 : index
      %22 = vector.load %arg5[%c0_15, %c0_16] : memref<128x128xbf16, #tpu.memory_space<vmem>>, vector<128x128xbf16>
      %cst_17 = arith.constant dense<0.000000e+00> : vector<256x128xf32>
      %23 = tpu.matmul %21, %22, %cst_17 {dimension_numbers = #tpu.dot_dimension_numbers<[1], [0], [0], [1], [0, 0, 1, 1], [], []>} : vector<256x128xbf16>, vector<128x128xbf16>, vector<256x128xf32> -> vector<256x128xf32>
      %c0_18 = arith.constant 0 : index
      %c0_19 = arith.constant 0 : index
      %24 = vector.load %arg6[%c0_18, %c0_19] : memref<128x128xbf16, #tpu.memory_space<vmem>>, vector<128x128xbf16>
      %cst_20 = arith.constant dense<0.000000e+00> : vector<256x128xf32>
      %25 = tpu.matmul %20, %24, %cst_20 {dimension_numbers = #tpu.dot_dimension_numbers<[1], [0], [0], [1], [0, 0, 1, 1], [], []>} : vector<256x128xbf16>, vector<128x128xbf16>, vector<256x128xf32> -> vector<256x128xf32>
      %26 = arith.addf %23, %25 : vector<256x128xf32>
      %cst_21 = arith.constant 0.000000e+00 : f32
      %27 = vector.broadcast %cst_21 : f32 to vector<256x128xf32>
      %28 = arith.maximumf %26, %27 : vector<256x128xf32>
      %c0_22 = arith.constant 0 : index
      %c0_23 = arith.constant 0 : index
      %29 = vector.load %arg8[%c0_22, %c0_23] : memref<256x128xf32, #tpu.memory_space<vmem>>, vector<256x128xf32>
      tpu.vector_store %arg8[%c0_22, %c0_23], %28 {strides = array<i32>} : memref<256x128xf32, #tpu.memory_space<vmem>>, vector<256x128xf32>,
    } else {
    }
    return
  }
  func.func @transform_0(%arg0: i32, %arg1: i32) -> (i32, i32) {
    %c0_i32 = arith.constant 0 : i32
    %c0_i32_0 = arith.constant 0 : i32
    return %arg0, %c0_i32 : i32, i32
  }
  func.func @transform_1(%arg0: i32, %arg1: i32) -> (i32, i32) {
    %c0_i32 = arith.constant 0 : i32
    return %arg0, %arg1 : i32, i32
  }
  func.func @transform_2(%arg0: i32, %arg1: i32) -> (i32, i32) {
    %c0_i32 = arith.constant 0 : i32
    %c0_i32_0 = arith.constant 0 : i32
    %c0_i32_1 = arith.constant 0 : i32
    return %c0_i32, %c0_i32_0 : i32, i32
  }
  func.func @transform_3(%arg0: i32, %arg1: i32) -> (i32, i32) {
    %c0_i32 = arith.constant 0 : i32
    %c0_i32_0 = arith.constant 0 : i32
    %c0_i32_1 = arith.constant 0 : i32
    return %c0_i32, %c0_i32_0 : i32, i32
  }
  func.func @transform_4(%arg0: i32, %arg1: i32) -> (i32, i32) {
    %c0_i32 = arith.constant 0 : i32
    %c0_i32_0 = arith.constant 0 : i32
    %c0_i32_1 = arith.constant 0 : i32
    return %c0_i32, %c0_i32_0 : i32, i32
  }
  func.func @transform_5(%arg0: i32, %arg1: i32) -> (i32, i32) {
    %c0_i32 = arith.constant 0 : i32
    %c0_i32_0 = arith.constant 0 : i32
    return %arg0, %c0_i32 : i32, i32
  }
  func.func @transform_6(%arg0: i32, %arg1: i32) -> (i32, i32) {
    %c0_i32 = arith.constant 0 : i32
    %c0_i32_0 = arith.constant 0 : i32
    return %arg0, %c0_i32 : i32, i32
  }
}

</mosaic_0001>

<llo_original>
// kernel: graphsage_forward.3
$region0: #{graphsage_forward.3}
  #allocation0 [shape = 'u32[]', space=smem, size = 0x4, offset = 0x4, fixed_abs, tag = 'smem constant byte address 0x4 - core index']
  #allocation1 [shape = 'u32[144,128]{1,0:T(1,128)}', space=vmem, size = 0x12000, scoped, tag = 'internal scratch']
  #allocation2 [shape = 'f32[256,128]{1,0:T(8,128)}', space=vmem, size = 0x20000, scoped, tag = 'scratch operand']
  %s0 = inlined_call_operand.hbm [shape: bf16[256,128], index: 0, kind: input, shape index: {}, may-alias: {0,2}]
  %s1 = inlined_call_operand.hbm [shape: s8[256,256], index: 1, kind: input, shape index: {}]
  %s2 = inlined_call_operand.hbm [shape: bf16[256,128], index: 2, kind: input, shape index: {}, may-alias: {0,2}]
  %s3 = inlined_call_operand.hbm [shape: bf16[128,128], index: 3, kind: input, shape index: {}]
  %s4 = inlined_call_operand.hbm [shape: bf16[128,128], index: 4, kind: input, shape index: {}]
  %s5 = inlined_call_operand.hbm [shape: f32[256,1], index: 5, kind: input, shape index: {}]
  %s6 = inlined_call_operand.hbm [shape: f32[256,128], index: 6, kind: output, shape index: {}]
  %s7 = sld [smem:[#allocation0]]
  $region66: #{graphsage_forward.3} parent=0
    _
  %s9 = ssub.s32 1, %s7
  %s10 = scalar_select 0, %s9, %s7
  $region1: #{graphsage_forward.3} parent=0
    #allocation3 [shape = 'u8[65536]{0}', space=vmem, size = 0x10000, scoped, tag = 'input window, operand 0, single buffered']
    #allocation4 [shape = 's32[1]{0}', space=sflag, size = 0x4, scoped, tag = 'scoped memory for graphsage_forward.3']
    #allocation5 [shape = 's32[1]{0}', space=sflag, size = 0x4, scoped, tag = 'scoped memory for graphsage_forward.3']
    #allocation6 [shape = 'u8[65536]{0}', space=vmem, size = 0x10000, scoped, tag = 'input window, operand 1, single buffered']
    #allocation7 [shape = 's32[1]{0}', space=sflag, size = 0x4, scoped, tag = 'scoped memory for graphsage_forward.3']
    #allocation8 [shape = 'u8[65536]{0}', space=vmem, size = 0x10000, scoped, tag = 'input window, operand 2, single buffered']
    #allocation9 [shape = 'u8[32768]{0}', space=vmem, size = 0x8000, scoped, tag = 'input window, operand 3, single buffered']
    #allocation10 [shape = 's32[1]{0}', space=sflag, size = 0x4, scoped, tag = 'scoped memory for graphsage_forward.3']
    #allocation11 [shape = 'u8[32768]{0}', space=vmem, size = 0x8000, scoped, tag = 'input window, operand 4, single buffered']
    #allocation12 [shape = 'u8[131072]{0}', space=vmem, size = 0x20000, scoped, tag = 'input window, operand 5, single buffered']
    #allocation13 [shape = 's32[1]{0}', space=sflag, size = 0x4, scoped, tag = 'scoped memory for graphsage_forward.3']
    #allocation14 [shape = 'u8[131072]{0}', space=vmem, size = 0x20000, scoped, tag = 'output window, operand 0, single buffered']
    %11 = vsyncpa [#allocation4], 0
    %12 = vsyncpa [#allocation7], 0
    %13 = vsyncpa [#allocation10], 0
    %14 = vsyncpa [#allocation13], 0
    %15 = vsyncpa [#allocation5], 0
    // Predicated region
    $region2: #{graphsage_forward.3} parent=1 // pred_check
      _
    $region3: #{graphsage_forward.3} parent=1 // pred_check_branch
      %17 = sbr.rel (0) target = $region5
    $region4: #{graphsage_forward.3} parent=1 // pred_region
      %s19 = ssub.s32 2048, 2048
      %20 = vsyncadd [#allocation4], %s19
      %s21 = sshll.u32 [#allocation3], 4
      %s22 = int_to_ptr.vmem [resolvable:$true] %s21
      %27 = dma.hbm_to_vmem [thread:$0]  %s0, 2048, %s22, [#allocation4], 64, 64, 4
    $region5: #{graphsage_forward.3} parent=1 // pred_fallthru
      _
    // Predicated region
    $region6: #{graphsage_forward.3} parent=1 // pred_check
      _
    $region7: #{graphsage_forward.3} parent=1 // pred_check_branch
      %29 = sbr.rel (0) target = $region9
    $region8: #{graphsage_forward.3} parent=1 // pred_region
      %s31 = ssub.s32 2048, 2048
      %32 = vsyncadd [#allocation7], %s31
      %s33 = sshll.u32 [#allocation6], 4
      %s34 = int_to_ptr.vmem [resolvable:$true] %s33
      %39 = dma.hbm_to_vmem [thread:$0]  %s1, 2048, %s34, [#allocation7], 256, 256, 16
    $region9: #{graphsage_forward.3} parent=1 // pred_fallthru
      _
    // Predicated region
    $region10: #{graphsage_forward.3} parent=1 // pred_check
      _
    $region11: #{graphsage_forward.3} parent=1 // pred_check_branch
      %41 = sbr.rel (0) target = $region13
    $region12: #{graphsage_forward.3} parent=1 // pred_region
      %s43 = ssub.s32 2048, 2048
      %44 = vsyncadd [#allocation7], %s43
      %s45 = sshll.u32 [#allocation8], 4
      %s46 = int_to_ptr.vmem [resolvable:$true] %s45
      %51 = dma.hbm_to_vmem [thread:$0]  %s2, 2048, %s46, [#allocation7], 64, 64, 4
    $region13: #{graphsage_forward.3} parent=1 // pred_fallthru
      _
    // Predicated region
    $region14: #{graphsage_forward.3} parent=1 // pred_check
      _
    $region15: #{graphsage_forward.3} parent=1 // pred_check_branch
      %53 = sbr.rel (0) target = $region17
    $region16: #{graphsage_forward.3} parent=1 // pred_region
      %s55 = ssub.s32 1024, 1024
      %56 = vsyncadd [#allocation10], %s55
      %s57 = sshll.u32 [#allocation9], 4
      %s58 = int_to_ptr.vmem [resolvable:$true] %s57
      %63 = dma.hbm_to_vmem [thread:$0]  %s3, 1024, %s58, [#allocation10], 64, 64, 4
    $region17: #{graphsage_forward.3} parent=1 // pred_fallthru
      _
    // Predicated region
    $region18: #{graphsage_forward.3} parent=1 // pred_check
      _
    $region19: #{graphsage_forward.3} parent=1 // pred_check_branch
      %65 = sbr.rel (0) target = $region21
    $region20: #{graphsage_forward.3} parent=1 // pred_region
      %s67 = ssub.s32 1024, 1024
      %68 = vsyncadd [#allocation10], %s67
      %s69 = sshll.u32 [#allocation11], 4
      %s70 = int_to_ptr.vmem [resolvable:$true] %s69
      %75 = dma.hbm_to_vmem [thread:$0]  %s4, 1024, %s70, [#allocation10], 64, 64, 4
    $region21: #{graphsage_forward.3} parent=1 // pred_fallthru
      _
    // Predicated region
    $region22: #{graphsage_forward.3} parent=1 // pred_check
      _
    $region23: #{graphsage_forward.3} parent=1 // pred_check_branch
      %77 = sbr.rel (0) target = $region25
    $region24: #{graphsage_forward.3} parent=1 // pred_region
      %s79 = ssub.s32 4096, 4096
      %80 = vsyncadd [#allocation13], %s79
      %s81 = sshll.u32 [#allocation12], 4
      %s82 = int_to_ptr.vmem [resolvable:$true] %s81
      %87 = dma.hbm_to_vmem [thread:$0]  %s5, 4096, %s82, [#allocation13], 128, 128, 8
    $region25: #{graphsage_forward.3} parent=1 // pred_fallthru
      _
    // Predicated region
    $region26: #{graphsage_forward.3} parent=1 // pred_check
      _
    $region27: #{graphsage_forward.3} parent=1 // pred_check_branch
      %89 = sbr.rel (0) target = $region29
    $region28: #{graphsage_forward.3} parent=1 // pred_region
      %90 = dma.done [#allocation4], 2048
    $region29: #{graphsage_forward.3} parent=1 // pred_fallthru
      _
    // Predicated region
    $region30: #{graphsage_forward.3} parent=1 // pred_check
      _
    $region31: #{graphsage_forward.3} parent=1 // pred_check_branch
      %92 = sbr.rel (0) target = $region33
    $region32: #{graphsage_forward.3} parent=1 // pred_region
      %93 = dma.done [#allocation7], 2048
    $region33: #{graphsage_forward.3} parent=1 // pred_fallthru
      _
    // Predicated region
    $region34: #{graphsage_forward.3} parent=1 // pred_check
      _
    $region35: #{graphsage_forward.3} parent=1 // pred_check_branch
      %95 = sbr.rel (0) target = $region37
    $region36: #{graphsage_forward.3} parent=1 // pred_region
      %96 = dma.done [#allocation7], 2048
    $region37: #{graphsage_forward.3} parent=1 // pred_fallthru
      _
    // Predicated region
    $region38: #{graphsage_forward.3} parent=1 // pred_check
      _
    $region39: #{graphsage_forward.3} parent=1 // pred_check_branch
      %98 = sbr.rel (0) target = $region41
    $region40: #{graphsage_forward.3} parent=1 // pred_region
      %99 = dma.done [#allocation10], 1024
    $region41: #{graphsage_forward.3} parent=1 // pred_fallthru
      _
    // Predicated region
    $region42: #{graphsage_forward.3} parent=1 // pred_check
      _
    $region43: #{graphsage_forward.3} parent=1 // pred_check_branch
      %101 = sbr.rel (0) target = $region45
    $region44: #{graphsage_forward.3} parent=1 // pred_region
      %102 = dma.done [#allocation10], 1024
    $region45: #{graphsage_forward.3} parent=1 // pred_fallthru
      _
    // Predicated region
    $region46: #{graphsage_forward.3} parent=1 // pred_check
      _
    $region47: #{graphsage_forward.3} parent=1 // pred_check_branch
      %104 = sbr.rel (0) target = $region49
    $region48: #{graphsage_forward.3} parent=1 // pred_region
      %105 = dma.done [#allocation13], 4096
    $region49: #{graphsage_forward.3} parent=1 // pred_fallthru
      _
    %p107 = scmp.eq.s32.totalorder 0, 0
    // Predicated region
    $region50: #{graphsage_forward.3} parent=1 // pred_check
      %p108 = pneg %p107
    $region51: #{graphsage_forward.3} parent=1 // pred_check_branch
      %110 = sbr.rel (%p108) target = $region53
    $region52: #{graphsage_forward.3} parent=1 // pred_region
      %111 = vst [vmem:[#allocation2] sm:$0xff] 0.0
      %112 = vst [vmem:[#allocation2 + $0x8] sm:$0xff] 0.0
      %113 = vst [vmem:[#allocation2 + $0x10] sm:$0xff] 0.0
      %114 = vst [vmem:[#allocation2 + $0x18] sm:$0xff] 0.0
      %115 = vst [vmem:[#allocation2 + $0x20] sm:$0xff] 0.0
      %116 = vst [vmem:[#allocation2 + $0x28] sm:$0xff] 0.0
      %117 = vst [vmem:[#allocation2 + $0x30] sm:$0xff] 0.0
      %118 = vst [vmem:[#allocation2 + $0x38] sm:$0xff] 0.0
      %119 = vst [vmem:[#allocation2 + $0x40] sm:$0xff] 0.0
      %120 = vst [vmem:[#allocation2 + $0x48] sm:$0xff] 0.0
      %121 = vst [vmem:[#allocation2 + $0x50] sm:$0xff] 0.0
      %122 = vst [vmem:[#allocation2 + $0x58] sm:$0xff] 0.0
      %123 = vst [vmem:[#allocation2 + $0x60] sm:$0xff] 0.0
      %124 = vst [vmem:[#allocation2 + $0x68] sm:$0xff] 0.0
      %125 = vst [vmem:[#allocation2 + $0x70] sm:$0xff] 0.0
      %126 = vst [vmem:[#allocation2 + $0x78] sm:$0xff] 0.0
      %127 = vst [vmem:[#allocation2 + $0x80] sm:$0xff] 0.0
      %128 = vst [vmem:[#allocation2 + $0x88] sm:$0xff] 0.0
      %129 = vst [vmem:[#allocation2 + $0x90] sm:$0xff] 0.0
      %130 = vst [vmem:[#allocation2 + $0x98] sm:$0xff] 0.0
      %131 = vst [vmem:[#allocation2 + $0xa0] sm:$0xff] 0.0
      %132 = vst [vmem:[#allocation2 + $0xa8] sm:$0xff] 0.0
      %133 = vst [vmem:[#allocation2 + $0xb0] sm:$0xff] 0.0
      %134 = vst [vmem:[#allocation2 + $0xb8] sm:$0xff] 0.0
      %135 = vst [vmem:[#allocation2 + $0xc0] sm:$0xff] 0.0
      %136 = vst [vmem:[#allocation2 + $0xc8] sm:$0xff] 0.0
      %137 = vst [vmem:[#allocation2 + $0xd0] sm:$0xff] 0.0
      %138 = vst [vmem:[#allocation2 + $0xd8] sm:$0xff] 0.0
      %139 = vst [vmem:[#allocation2 + $0xe0] sm:$0xff] 0.0
      %140 = vst [vmem:[#allocation2 + $0xe8] sm:$0xff] 0.0
      %141 = vst [vmem:[#allocation2 + $0xf0] sm:$0xff] 0.0
      %142 = vst [vmem:[#allocation2 + $0xf8] sm:$0xff] 0.0
    $region53: #{graphsage_forward.3} parent=1 // pred_fallthru
      _
    %v143 = vld [vmem:[#allocation6] sm:$0xff]
    %v144 = vld [vmem:[#allocation6 + $0x8] sm:$0xff]
    %v145 = vld [vmem:[#allocation6 + $0x10] sm:$0xff]
    %v146 = vld [vmem:[#allocation6 + $0x18] sm:$0xff]
    %v147 = vld [vmem:[#allocation6 + $0x20] sm:$0xff]
    %v148 = vld [vmem:[#allocation6 + $0x28] sm:$0xff]
    %v149 = vld [vmem:[#allocation6 + $0x30] sm:$0xff]
    %v150 = vld [vmem:[#allocation6 + $0x38] sm:$0xff]
    %v151 = vld [vmem:[#allocation6 + $0x40] sm:$0xff]
    %v152 = vld [vmem:[#allocation6 + $0x48] sm:$0xff]
    %v153 = vld [vmem:[#allocation6 + $0x50] sm:$0xff]
    %v154 = vld [vmem:[#allocation6 + $0x58] sm:$0xff]
    %v155 = vld [vmem:[#allocation6 + $0x60] sm:$0xff]
    %v156 = vld [vmem:[#allocation6 + $0x68] sm:$0xff]
    %v157 = vld [vmem:[#allocation6 + $0x70] sm:$0xff]
    %v158 = vld [vmem:[#allocation6 + $0x78] sm:$0xff]
    %v159 = vunpack.c.l.s8.bf16 %v143
    %v160 = vunpack.c.l.s8.bf16 %v144
    %v161 = vunpack.c.h.s8.bf16 %v143
    %v162 = vunpack.c.h.s8.bf16 %v144
    %v163 = vunpack.c.l.s8.bf16 %v145
    %v164 = vunpack.c.l.s8.bf16 %v146
    %v165 = vunpack.c.h.s8.bf16 %v145
    %v166 = vunpack.c.h.s8.bf16 %v146
    %v167 = vunpack.c.l.s8.bf16 %v147
    %v168 = vunpack.c.l.s8.bf16 %v148
    %v169 = vunpack.c.h.s8.bf16 %v147
    %v170 = vunpack.c.h.s8.bf16 %v148
    %v171 = vunpack.c.l.s8.bf16 %v149
    %v172 = vunpack.c.l.s8.bf16 %v150
    %v173 = vunpack.c.h.s8.bf16 %v149
    %v174 = vunpack.c.h.s8.bf16 %v150
    %v175 = vunpack.c.l.s8.bf16 %v151
    %v176 = vunpack.c.l.s8.bf16 %v152
    %v177 = vunpack.c.h.s8.bf16 %v151
    %v178 = vunpack.c.h.s8.bf16 %v152
    %v179 = vunpack.c.l.s8.bf16 %v153
    %v180 = vunpack.c.l.s8.bf16 %v154
    %v181 = vunpack.c.h.s8.bf16 %v153
    %v182 = vunpack.c.h.s8.bf16 %v154
    %v183 = vunpack.c.l.s8.bf16 %v155
    %v184 = vunpack.c.l.s8.bf16 %v156
    %v185 = vunpack.c.h.s8.bf16 %v155
    %v186 = vunpack.c.h.s8.bf16 %v156
    %v187 = vunpack.c.l.s8.bf16 %v157
    %v188 = vunpack.c.l.s8.bf16 %v158
    %v189 = vunpack.c.h.s8.bf16 %v157
    %v190 = vunpack.c.h.s8.bf16 %v158
    %s191 = smul.u32 0, 256
    %s192 = sshra.s32 %s191, 3
    %s193 = sand.u32 %s191, 7
    %s194 = smul.addr %s192, 4
    %s195 = scalar_lea.vmem [#allocation8], %s194
    %v196 = vld [vmem:[%s195] sm:$0xf]
    %v197 = vld [vmem:[%s195 + $0x4] sm:$0xf]
    %v198 = vld [vmem:[%s195 + $0x8] sm:$0xf]
    %v199 = vld [vmem:[%s195 + $0xc] sm:$0xf]
    %v200 = vld [vmem:[%s195 + $0x10] sm:$0xf]
    %v201 = vld [vmem:[%s195 + $0x14] sm:$0xf]
    %v202 = vld [vmem:[%s195 + $0x18] sm:$0xf]
    %v203 = vld [vmem:[%s195 + $0x1c] sm:$0xf]
    %v204 = vld [vmem:[%s195 + $0x20] sm:$0xf]
    %v205 = vld [vmem:[%s195 + $0x24] sm:$0xf]
    %v206 = vld [vmem:[%s195 + $0x28] sm:$0xf]
    %v207 = vld [vmem:[%s195 + $0x2c] sm:$0xf]
    %v208 = vld [vmem:[%s195 + $0x30] sm:$0xf]
    %v209 = vld [vmem:[%s195 + $0x34] sm:$0xf]
    %v210 = vld [vmem:[%s195 + $0x38] sm:$0xf]
    %v211 = vld [vmem:[%s195 + $0x3c] sm:$0xf]
    %v212 = vld [vmem:[%s195 + $0x40] sm:$0xf]
    %v213 = vld [vmem:[%s195 + $0x44] sm:$0xf]
    %v214 = vld [vmem:[%s195 + $0x48] sm:$0xf]
    %v215 = vld [vmem:[%s195 + $0x4c] sm:$0xf]
    %v216 = vld [vmem:[%s195 + $0x50] sm:$0xf]
    %v217 = vld [vmem:[%s195 + $0x54] sm:$0xf]
    %v218 = vld [vmem:[%s195 + $0x58] sm:$0xf]
    %v219 = vld [vmem:[%s195 + $0x5c] sm:$0xf]
    %v220 = vld [vmem:[%s195 + $0x60] sm:$0xf]
    %v221 = vld [vmem:[%s195 + $0x64] sm:$0xf]
    %v222 = vld [vmem:[%s195 + $0x68] sm:$0xf]
    %v223 = vld [vmem:[%s195 + $0x6c] sm:$0xf]
    %v224 = vld [vmem:[%s195 + $0x70] sm:$0xf]
    %v225 = vld [vmem:[%s195 + $0x74] sm:$0xf]
    %v226 = vld [vmem:[%s195 + $0x78] sm:$0xf]
    %v227 = vld [vmem:[%s195 + $0x7c] sm:$0xf]
    %v228 = vld [vmem:[#allocation2] sm:$0xff]
    %v229 = vld [vmem:[#allocation2 + $0x8] sm:$0xff]
    %v230 = vld [vmem:[#allocation2 + $0x10] sm:$0xff]
    %v231 = vld [vmem:[#allocation2 + $0x18] sm:$0xff]
    %v232 = vld [vmem:[#allocation2 + $0x20] sm:$0xff]
    %v233 = vld [vmem:[#allocation2 + $0x28] sm:$0xff]
    %v234 = vld [vmem:[#allocation2 + $0x30] sm:$0xff]
    %v235 = vld [vmem:[#allocation2 + $0x38] sm:$0xff]
    %v236 = vld [vmem:[#allocation2 + $0x40] sm:$0xff]
    %v237 = vld [vmem:[#allocation2 + $0x48] sm:$0xff]
    %v238 = vld [vmem:[#allocation2 + $0x50] sm:$0xff]
    %v239 = vld [vmem:[#allocation2 + $0x58] sm:$0xff]
    %v240 = vld [vmem:[#allocation2 + $0x60] sm:$0xff]
    %v241 = vld [vmem:[#allocation2 + $0x68] sm:$0xff]
    %v242 = vld [vmem:[#allocation2 + $0x70] sm:$0xff]
    %v243 = vld [vmem:[#allocation2 + $0x78] sm:$0xff]
    %v244 = vld [vmem:[#allocation2 + $0x80] sm:$0xff]
    %v245 = vld [vmem:[#allocation2 + $0x88] sm:$0xff]
    %v246 = vld [vmem:[#allocation2 + $0x90] sm:$0xff]
    %v247 = vld [vmem:[#allocation2 + $0x98] sm:$0xff]
    %v248 = vld [vmem:[#allocation2 + $0xa0] sm:$0xff]
    %v249 = vld [vmem:[#allocation2 + $0xa8] sm:$0xff]
    %v250 = vld [vmem:[#allocation2 + $0xb0] sm:$0xff]
    %v251 = vld [vmem:[#allocation2 + $0xb8] sm:$0xff]
    %v252 = vld [vmem:[#allocation2 + $0xc0] sm:$0xff]
    %v253 = vld [vmem:[#allocation2 + $0xc8] sm:$0xff]
    %v254 = vld [vmem:[#allocation2 + $0xd0] sm:$0xff]
    %v255 = vld [vmem:[#allocation2 + $0xd8] sm:$0xff]
    %v256 = vld [vmem:[#allocation2 + $0xe0] sm:$0xff]
    %v257 = vld [vmem:[#allocation2 + $0xe8] sm:$0xff]
    %v258 = vld [vmem:[#allocation2 + $0xf0] sm:$0xff]
    %v259 = vld [vmem:[#allocation2 + $0xf8] sm:$0xff]
    %v292 = vunpack.c.l.b16 %v196
    %v293 = vunpack.c.l.b16 %v197
    %v294 = vunpack.c.l.b16 %v198
    %v295 = vunpack.c.l.b16 %v199
    %v296 = vunpack.c.l.b16 %v200
    %v297 = vunpack.c.l.b16 %v201
    %v298 = vunpack.c.l.b16 %v202
    %v299 = vunpack.c.l.b16 %v203
    %v300 = vunpack.c.l.b16 %v204
    %v301 = vunpack.c.l.b16 %v205
    %v302 = vunpack.c.l.b16 %v206
    %v303 = vunpack.c.l.b16 %v207
    %v304 = vunpack.c.l.b16 %v208
    %v305 = vunpack.c.l.b16 %v209
    %v306 = vunpack.c.l.b16 %v210
    %v307 = vunpack.c.l.b16 %v211
    %v308 = vunpack.c.l.b16 %v212
    %v309 = vunpack.c.l.b16 %v213
    %v310 = vunpack.c.l.b16 %v214
    %v311 = vunpack.c.l.b16 %v215
    %v312 = vunpack.c.l.b16 %v216
    %v313 = vunpack.c.l.b16 %v217
    %v314 = vunpack.c.l.b16 %v218
    %v315 = vunpack.c.l.b16 %v219
    %v316 = vunpack.c.l.b16 %v220
    %v317 = vunpack.c.l.b16 %v221
    %v318 = vunpack.c.l.b16 %v222
    %v319 = vunpack.c.l.b16 %v223
    %v320 = vunpack.c.l.b16 %v224
    %v321 = vunpack.c.l.b16 %v225
    %v322 = vunpack.c.l.b16 %v226
    %v323 = vunpack.c.l.b16 %v227
    %v324 = vpack.c.b16 %v293, %v292
    %v325 = vpack.c.b16 %v295, %v294
    %v326 = vpack.c.b16 %v297, %v296
    %v327 = vpack.c.b16 %v299, %v298
    %v328 = vpack.c.b16 %v301, %v300
    %v329 = vpack.c.b16 %v303, %v302
    %v330 = vpack.c.b16 %v305, %v304
    %v331 = vpack.c.b16 %v307, %v306
    %v332 = vpack.c.b16 %v309, %v308
    %v333 = vpack.c.b16 %v311, %v310
    %v334 = vpack.c.b16 %v313, %v312
    %v335 = vpack.c.b16 %v315, %v314
    %v336 = vpack.c.b16 %v317, %v316
    %v337 = vpack.c.b16 %v319, %v318
    %v338 = vpack.c.b16 %v321, %v320
    %v339 = vpack.c.b16 %v323, %v322
    %356 = vmatprep.subr.bf16.mxu0 0
    %357 = vmatpush1.bf16.msra.mxu0 %v324
    %358 = vmatprep.subr.bf16.mxu0 0
    %359 = vmatpush1.bf16.msra.mxu0 %v325
    %360 = vmatprep.subr.bf16.mxu0 0
    %361 = vmatpush1.bf16.msra.mxu0 %v326
    %362 = vmatprep.subr.bf16.mxu0 0
    %363 = vmatpush1.bf16.msra.mxu0 %v327
    %364 = vmatprep.subr.bf16.mxu0 0
    %365 = vmatpush1.bf16.msra.mxu0 %v328
    %366 = vmatprep.subr.bf16.mxu0 0
    %367 = vmatpush1.bf16.msra.mxu0 %v329
    %368 = vmatprep.subr.bf16.mxu0 0
    %369 = vmatpush1.bf16.msra.mxu0 %v330
    %370 = vmatprep.subr.bf16.mxu0 0
    %371 = vmatpush1.bf16.msra.mxu0 %v331
    %372 = vmatprep.subr.bf16.mxu0 0
    %373 = vmatpush1.bf16.msra.mxu0 %v332
    %374 = vmatprep.subr.bf16.mxu0 0
    %375 = vmatpush1.bf16.msra.mxu0 %v333
    %376 = vmatprep.subr.bf16.mxu0 0
    %377 = vmatpush1.bf16.msra.mxu0 %v334
    %378 = vmatprep.subr.bf16.mxu0 0
    %379 = vmatpush1.bf16.msra.mxu0 %v335
    %380 = vmatprep.subr.bf16.mxu0 0
    %381 = vmatpush1.bf16.msra.mxu0 %v336
    %382 = vmatprep.subr.bf16.mxu0 0
    %383 = vmatpush1.bf16.msra.mxu0 %v337
    %384 = vmatprep.subr.bf16.mxu0 0
    %385 = vmatpush1.bf16.msra.mxu0 %v338
    %386 = vmatprep.subr.bf16.mxu0 0
    %387 = vmatpush1.bf16.msra.mxu0 %v339
    %388 = vmatprep.mubr.bf16.mxu0 %v160
    %389 = vmatmul.mubr.bf16.gmra.mrb[0].mxu0 %v159
    %v390 = vpop.f32.mrb[0].mxu0
    %v391 = vadd.f32 0.0, %v390
    %v392 = vpop.f32.mrb[0].mxu0
    %v393 = vpop.f32.mrb[0].mxu0
    %v394 = vadd.f32 0.0, %v393
    %v395 = vpop.f32.mrb[0].mxu0
    %396 = vmatprep.mubr.bf16.mxu0 %v162
    %397 = vmatmul.mubr.bf16.gmra.mrb[0].mxu0 %v161
    %v398 = vpop.f32.mrb[0].mxu0
    %v399 = vadd.f32 0.0, %v398
    %v400 = vpop.f32.mrb[0].mxu0
    %v401 = vpop.f32.mrb[0].mxu0
    %v402 = vadd.f32 0.0, %v401
    %v403 = vpop.f32.mrb[0].mxu0
    %404 = vmatprep.mubr.bf16.mxu0 %v164
    %405 = vmatmul.mubr.bf16.gmra.mrb[0].mxu0 %v163
    %v406 = vpop.f32.mrb[0].mxu0
    %v407 = vadd.f32 0.0, %v406
    %v408 = vpop.f32.mrb[0].mxu0
    %v409 = vpop.f32.mrb[0].mxu0
    %v410 = vadd.f32 0.0, %v409
    %v411 = vpop.f32.mrb[0].mxu0
    %412 = vmatprep.mubr.bf16.mxu0 %v166
    %413 = vmatmul.mubr.bf16.gmra.mrb[0].mxu0 %v165
    %v414 = vpop.f32.mrb[0].mxu0
    %v415 = vadd.f32 0.0, %v414
    %v416 = vpop.f32.mrb[0].mxu0
    %v417 = vpop.f32.mrb[0].mxu0
    %v418 = vadd.f32 0.0, %v417
    %v419 = vpop.f32.mrb[0].mxu0
    %420 = vmatprep.mubr.bf16.mxu0 %v168
    %421 = vmatmul.mubr.bf16.gmra.mrb[0].mxu0 %v167
    %v422 = vpop.f32.mrb[0].mxu0
    %v423 = vadd.f32 0.0, %v422
    %v424 = vpop.f32.mrb[0].mxu0
    %v425 = vpop.f32.mrb[0].mxu0
    %v426 = vadd.f32 0.0, %v425
    %v427 = vpop.f32.mrb[0].mxu0
    %428 = vmatprep.mubr.bf16.mxu0 %v170
    %429 = vmatmul.mubr.bf16.gmra.mrb[0].mxu0 %v169
    %v430 = vpop.f32.mrb[0].mxu0
    %v431 = vadd.f32 0.0, %v430
    %v432 = vpop.f32.mrb[0].mxu0
    %v433 = vpop.f32.mrb[0].mxu0
    %v434 = vadd.f32 0.0, %v433
    %v435 = vpop.f32.mrb[0].mxu0
    %436 = vmatprep.mubr.bf16.mxu0 %v172
    %437 = vmatmul.mubr.bf16.gmra.mrb[0].mxu0 %v171
    %v438 = vpop.f32.mrb[0].mxu0
    %v439 = vadd.f32 0.0, %v438
    %v440 = vpop.f32.mrb[0].mxu0
    %v441 = vpop.f32.mrb[0].mxu0
    %v442 = vadd.f32 0.0, %v441
    %v443 = vpop.f32.mrb[0].mxu0
    %444 = vmatprep.mubr.bf16.mxu0 %v174
    %445 = vmatmul.mubr.bf16.gmra.mrb[0].mxu0 %v173
    %v446 = vpop.f32.mrb[0].mxu0
    %v447 = vadd.f32 0.0, %v446
    %v448 = vpop.f32.mrb[0].mxu0
    %v449 = vpop.f32.mrb[0].mxu0
    %v450 = vadd.f32 0.0, %v449
    %v451 = vpop.f32.mrb[0].mxu0
    %452 = vmatprep.mubr.bf16.mxu0 %v176
    %453 = vmatmul.mubr.bf16.gmra.mrb[0].mxu0 %v175
    %v454 = vpop.f32.mrb[0].mxu0
    %v455 = vadd.f32 0.0, %v454
    %v456 = vpop.f32.mrb[0].mxu0
    %v457 = vpop.f32.mrb[0].mxu0
    %v458 = vadd.f32 0.0, %v457
    %v459 = vpop.f32.mrb[0].mxu0
    %460 = vmatprep.mubr.bf16.mxu0 %v178
    %461 = vmatmul.mubr.bf16.gmra.mrb[0].mxu0 %v177
    %v462 = vpop.f32.mrb[0].mxu0
    %v463 = vadd.f32 0.0, %v462
    %v464 = vpop.f32.mrb[0].mxu0
    %v465 = vpop.f32.mrb[0].mxu0
    %v466 = vadd.f32 0.0, %v465
    %v467 = vpop.f32.mrb[0].mxu0
    %468 = vmatprep.mubr.bf16.mxu0 %v180
    %469 = vmatmul.mubr.bf16.gmra.mrb[0].mxu0 %v179
    %v470 = vpop.f32.mrb[0].mxu0
    %v471 = vadd.f32 0.0, %v470
    %v472 = vpop.f32.mrb[0].mxu0
    %v473 = vpop.f32.mrb[0].mxu0
    %v474 = vadd.f32 0.0, %v473
    %v475 = vpop.f32.mrb[0].mxu0
    %476 = vmatprep.mubr.bf16.mxu0 %v182
    %477 = vmatmul.mubr.bf16.gmra.mrb[0].mxu0 %v181
    %v478 = vpop.f32.mrb[0].mxu0
    %v479 = vadd.f32 0.0, %v478
    %v480 = vpop.f32.mrb[0].mxu0
    %v481 = vpop.f32.mrb[0].mxu0
    %v482 = vadd.f32 0.0, %v481
    %v483 = vpop.f32.mrb[0].mxu0
    %484 = vmatprep.mubr.bf16.mxu0 %v184
    %485 = vmatmul.mubr.bf16.gmra.mrb[0].mxu0 %v183
    %v486 = vpop.f32.mrb[0].mxu0
    %v487 = vadd.f32 0.0, %v486
    %v488 = vpop.f32.mrb[0].mxu0
    %v489 = vpop.f32.mrb[0].mxu0
    %v490 = vadd.f32 0.0, %v489
    %v491 = vpop.f32.mrb[0].mxu0
    %492 = vmatprep.mubr.bf16.mxu0 %v186
    %493 = vmatmul.mubr.bf16.gmra.mrb[0].mxu0 %v185
    %v494 = vpop.f32.mrb[0].mxu0
    %v495 = vadd.f32 0.0, %v494
    %v496 = vpop.f32.mrb[0].mxu0
    %v497 = vpop.f32.mrb[0].mxu0
    %v498 = vadd.f32 0.0, %v497
    %v499 = vpop.f32.mrb[0].mxu0
    %500 = vmatprep.mubr.bf16.mxu0 %v188
    %501 = vmatmul.mubr.bf16.gmra.mrb[0].mxu0 %v187
    %v502 = vpop.f32.mrb[0].mxu0
    %v503 = vadd.f32 0.0, %v502
    %v504 = vpop.f32.mrb[0].mxu0
    %v505 = vpop.f32.mrb[0].mxu0
    %v506 = vadd.f32 0.0, %v505
    %v507 = vpop.f32.mrb[0].mxu0
    %508 = vmatprep.mubr.bf16.mxu0 %v190
    %509 = vmatmul.mubr.bf16.gmra.mrb[0].mxu0 %v189
    %v510 = vpop.f32.mrb[0].mxu0
    %v511 = vadd.f32 0.0, %v510
    %v512 = vpop.f32.mrb[0].mxu0
    %v513 = vpop.f32.mrb[0].mxu0
    %v514 = vadd.f32 0.0, %v513
    %v515 = vpop.f32.mrb[0].mxu0
    %516 = vdwg.mxu0
    %v517 = vadd.f32 %v228, %v391
    %v518 = vadd.f32 %v229, %v394
    %v519 = vadd.f32 %v230, %v399
    %v520 = vadd.f32 %v231, %v402
    %v521 = vadd.f32 %v232, %v407
    %v522 = vadd.f32 %v233, %v410
    %v523 = vadd.f32 %v234, %v415
    %v524 = vadd.f32 %v235, %v418
    %v525 = vadd.f32 %v236, %v423
    %v526 = vadd.f32 %v237, %v426
    %v527 = vadd.f32 %v238, %v431
    %v528 = vadd.f32 %v239, %v434
    %v529 = vadd.f32 %v240, %v439
    %v530 = vadd.f32 %v241, %v442
    %v531 = vadd.f32 %v242, %v447
    %v532 = vadd.f32 %v243, %v450
    %v533 = vadd.f32 %v244, %v455
    %v534 = vadd.f32 %v245, %v458
    %v535 = vadd.f32 %v246, %v463
    %v536 = vadd.f32 %v247, %v466
    %v537 = vadd.f32 %v248, %v471
    %v538 = vadd.f32 %v249, %v474
    %v539 = vadd.f32 %v250, %v479
    %v540 = vadd.f32 %v251, %v482
    %v541 = vadd.f32 %v252, %v487
    %v542 = vadd.f32 %v253, %v490
    %v543 = vadd.f32 %v254, %v495
    %v544 = vadd.f32 %v255, %v498
    %v545 = vadd.f32 %v256, %v503
    %v546 = vadd.f32 %v257, %v506
    %v547 = vadd.f32 %v258, %v511
    %v548 = vadd.f32 %v259, %v514
    %549 = vst [vmem:[#allocation2] sm:$0xff] %v517
    %550 = vst [vmem:[#allocation2 + $0x8] sm:$0xff] %v518
    %551 = vst [vmem:[#allocation2 + $0x10] sm:$0xff] %v519
    %552 = vst [vmem:[#allocation2 + $0x18] sm:$0xff] %v520
    %553 = vst [vmem:[#allocation2 + $0x20] sm:$0xff] %v521
    %554 = vst [vmem:[#allocation2 + $0x28] sm:$0xff] %v522
    %555 = vst [vmem:[#allocation2 + $0x30] sm:$0xff] %v523
    %556 = vst [vmem:[#allocation2 + $0x38] sm:$0xff] %v524
    %557 = vst [vmem:[#allocation2 + $0x40] sm:$0xff] %v525
    %558 = vst [vmem:[#allocation2 + $0x48] sm:$0xff] %v526
    %559 = vst [vmem:[#allocation2 + $0x50] sm:$0xff] %v527
    %560 = vst [vmem:[#allocation2 + $0x58] sm:$0xff] %v528
    %561 = vst [vmem:[#allocation2 + $0x60] sm:$0xff] %v529
    %562 = vst [vmem:[#allocation2 + $0x68] sm:$0xff] %v530
    %563 = vst [vmem:[#allocation2 + $0x70] sm:$0xff] %v531
    %564 = vst [vmem:[#allocation2 + $0x78] sm:$0xff] %v532
    %565 = vst [vmem:[#allocation2 + $0x80] sm:$0xff] %v533
    %566 = vst [vmem:[#allocation2 + $0x88] sm:$0xff] %v534
    %567 = vst [vmem:[#allocation2 + $0x90] sm:$0xff] %v535
    %568 = vst [vmem:[#allocation2 + $0x98] sm:$0xff] %v536
    %569 = vst [vmem:[#allocation2 + $0xa0] sm:$0xff] %v537
    %570 = vst [vmem:[#allocation2 + $0xa8] sm:$0xff] %v538
    %571 = vst [vmem:[#allocation2 + $0xb0] sm:$0xff] %v539
    %572 = vst [vmem:[#allocation2 + $0xb8] sm:$0xff] %v540
    %573 = vst [vmem:[#allocation2 + $0xc0] sm:$0xff] %v541
    %574 = vst [vmem:[#allocation2 + $0xc8] sm:$0xff] %v542
    %575 = vst [vmem:[#allocation2 + $0xd0] sm:$0xff] %v543
    %576 = vst [vmem:[#allocation2 + $0xd8] sm:$0xff] %v544
    %577 = vst [vmem:[#allocation2 + $0xe0] sm:$0xff] %v545
    %578 = vst [vmem:[#allocation2 + $0xe8] sm:$0xff] %v546
    %579 = vst [vmem:[#allocation2 + $0xf0] sm:$0xff] %v547
    %580 = vst [vmem:[#allocation2 + $0xf8] sm:$0xff] %v548
    // Predicated region
    $region54: #{graphsage_forward.3} parent=1 // pred_check
      %p581 = pneg %p107
    $region55: #{graphsage_forward.3} parent=1 // pred_check_branch
      %583 = sbr.rel (%p581) target = $region57
    $region56: #{graphsage_forward.3} parent=1 // pred_region
      %v584 = vld [vmem:[#allocation2] sm:$0xff]
      %v585 = vld [vmem:[#allocation2 + $0x8] sm:$0xff]
      %v586 = vld [vmem:[#allocation2 + $0x10] sm:$0xff]
      %v587 = vld [vmem:[#allocation2 + $0x18] sm:$0xff]
      %v588 = vld [vmem:[#allocation2 + $0x20] sm:$0xff]
      %v589 = vld [vmem:[#allocation2 + $0x28] sm:$0xff]
      %v590 = vld [vmem:[#allocation2 + $0x30] sm:$0xff]
      %v591 = vld [vmem:[#allocation2 + $0x38] sm:$0xff]
      %v592 = vld [vmem:[#allocation2 + $0x40] sm:$0xff]
      %v593 = vld [vmem:[#allocation2 + $0x48] sm:$0xff]
      %v594 = vld [vmem:[#allocation2 + $0x50] sm:$0xff]
      %v595 = vld [vmem:[#allocation2 + $0x58] sm:$0xff]
      %v596 = vld [vmem:[#allocation2 + $0x60] sm:$0xff]
      %v597 = vld [vmem:[#allocation2 + $0x68] sm:$0xff]
      %v598 = vld [vmem:[#allocation2 + $0x70] sm:$0xff]
      %v599 = vld [vmem:[#allocation2 + $0x78] sm:$0xff]
      %v600 = vld [vmem:[#allocation2 + $0x80] sm:$0xff]
      %v601 = vld [vmem:[#allocation2 + $0x88] sm:$0xff]
      %v602 = vld [vmem:[#allocation2 + $0x90] sm:$0xff]
      %v603 = vld [vmem:[#allocation2 + $0x98] sm:$0xff]
      %v604 = vld [vmem:[#allocation2 + $0xa0] sm:$0xff]
      %v605 = vld [vmem:[#allocation2 + $0xa8] sm:$0xff]
      %v606 = vld [vmem:[#allocation2 + $0xb0] sm:$0xff]
      %v607 = vld [vmem:[#allocation2 + $0xb8] sm:$0xff]
      %v608 = vld [vmem:[#allocation2 + $0xc0] sm:$0xff]
      %v609 = vld [vmem:[#allocation2 + $0xc8] sm:$0xff]
      %v610 = vld [vmem:[#allocation2 + $0xd0] sm:$0xff]
      %v611 = vld [vmem:[#allocation2 + $0xd8] sm:$0xff]
      %v612 = vld [vmem:[#allocation2 + $0xe0] sm:$0xff]
      %v613 = vld [vmem:[#allocation2 + $0xe8] sm:$0xff]
      %v614 = vld [vmem:[#allocation2 + $0xf0] sm:$0xff]
      %v615 = vld [vmem:[#allocation2 + $0xf8] sm:$0xff]
      %v616 = vld [vmem:[#allocation12] sm:$0xff]
      %v617 = vld [vmem:[#allocation12 + $0x8] sm:$0xff]
      %v618 = vld [vmem:[#allocation12 + $0x10] sm:$0xff]
      %v619 = vld [vmem:[#allocation12 + $0x18] sm:$0xff]
      %v620 = vld [vmem:[#allocation12 + $0x20] sm:$0xff]
      %v621 = vld [vmem:[#allocation12 + $0x28] sm:$0xff]
      %v622 = vld [vmem:[#allocation12 + $0x30] sm:$0xff]
      %v623 = vld [vmem:[#allocation12 + $0x38] sm:$0xff]
      %v624 = vld [vmem:[#allocation12 + $0x40] sm:$0xff]
      %v625 = vld [vmem:[#allocation12 + $0x48] sm:$0xff]
      %v626 = vld [vmem:[#allocation12 + $0x50] sm:$0xff]
      %v627 = vld [vmem:[#allocation12 + $0x58] sm:$0xff]
      %v628 = vld [vmem:[#allocation12 + $0x60] sm:$0xff]
      %v629 = vld [vmem:[#allocation12 + $0x68] sm:$0xff]
      %v630 = vld [vmem:[#allocation12 + $0x70] sm:$0xff]
      %v631 = vld [vmem:[#allocation12 + $0x78] sm:$0xff]
      %v632 = vld [vmem:[#allocation12 + $0x80] sm:$0xff]
      %v633 = vld [vmem:[#allocation12 + $0x88] sm:$0xff]
      %v634 = vld [vmem:[#allocation12 + $0x90] sm:$0xff]
      %v635 = vld [vmem:[#allocation12 + $0x98] sm:$0xff]
      %v636 = vld [vmem:[#allocation12 + $0xa0] sm:$0xff]
      %v637 = vld [vmem:[#allocation12 + $0xa8] sm:$0xff]
      %v638 = vld [vmem:[#allocation12 + $0xb0] sm:$0xff]
      %v639 = vld [vmem:[#allocation12 + $0xb8] sm:$0xff]
      %v640 = vld [vmem:[#allocation12 + $0xc0] sm:$0xff]
      %v641 = vld [vmem:[#allocation12 + $0xc8] sm:$0xff]
      %v642 = vld [vmem:[#allocation12 + $0xd0] sm:$0xff]
      %v643 = vld [vmem:[#allocation12 + $0xd8] sm:$0xff]
      %v644 = vld [vmem:[#allocation12 + $0xe0] sm:$0xff]
      %v645 = vld [vmem:[#allocation12 + $0xe8] sm:$0xff]
      %v646 = vld [vmem:[#allocation12 + $0xf0] sm:$0xff]
      %v647 = vld [vmem:[#allocation12 + $0xf8] sm:$0xff]
      %649 = vset.pattern.permute.xlu0 0
      %650 = vperm.xlu0 %649, %v616
      %v651 = vpop.permute.xlu0 %650
      %654 = vset.pattern.permute.xlu0 0
      %655 = vperm.xlu0 %654, %v617
      %v656 = vpop.permute.xlu0 %655
      %659 = vset.pattern.permute.xlu0 0
      %660 = vperm.xlu0 %659, %v618
      %v661 = vpop.permute.xlu0 %660
      %664 = vset.pattern.permute.xlu0 0
      %665 = vperm.xlu0 %664, %v619
      %v666 = vpop.permute.xlu0 %665
      %669 = vset.pattern.permute.xlu0 0
      %670 = vperm.xlu0 %669, %v620
      %v671 = vpop.permute.xlu0 %670
      %674 = vset.pattern.permute.xlu0 0
      %675 = vperm.xlu0 %674, %v621
      %v676 = vpop.permute.xlu0 %675
      %679 = vset.pattern.permute.xlu0 0
      %680 = vperm.xlu0 %679, %v622
      %v681 = vpop.permute.xlu0 %680
      %684 = vset.pattern.permute.xlu0 0
      %685 = vperm.xlu0 %684, %v623
      %v686 = vpop.permute.xlu0 %685
      %689 = vset.pattern.permute.xlu0 0
      %690 = vperm.xlu0 %689, %v624
      %v691 = vpop.permute.xlu0 %690
      %694 = vset.pattern.permute.xlu0 0
      %695 = vperm.xlu0 %694, %v625
      %v696 = vpop.permute.xlu0 %695
      %699 = vset.pattern.permute.xlu0 0
      %700 = vperm.xlu0 %699, %v626
      %v701 = vpop.permute.xlu0 %700
      %704 = vset.pattern.permute.xlu0 0
      %705 = vperm.xlu0 %704, %v627
      %v706 = vpop.permute.xlu0 %705
      %709 = vset.pattern.permute.xlu0 0
      %710 = vperm.xlu0 %709, %v628
      %v711 = vpop.permute.xlu0 %710
      %714 = vset.pattern.permute.xlu0 0
      %715 = vperm.xlu0 %714, %v629
      %v716 = vpop.permute.xlu0 %715
      %719 = vset.pattern.permute.xlu0 0
      %720 = vperm.xlu0 %719, %v630
      %v721 = vpop.permute.xlu0 %720
      %724 = vset.pattern.permute.xlu0 0
      %725 = vperm.xlu0 %724, %v631
      %v726 = vpop.permute.xlu0 %725
      %729 = vset.pattern.permute.xlu0 0
      %730 = vperm.xlu0 %729, %v632
      %v731 = vpop.permute.xlu0 %730
      %734 = vset.pattern.permute.xlu0 0
      %735 = vperm.xlu0 %734, %v633
      %v736 = vpop.permute.xlu0 %735
      %739 = vset.pattern.permute.xlu0 0
      %740 = vperm.xlu0 %739, %v634
      %v741 = vpop.permute.xlu0 %740
      %744 = vset.pattern.permute.xlu0 0
      %745 = vperm.xlu0 %744, %v635
      %v746 = vpop.permute.xlu0 %745
      %749 = vset.pattern.permute.xlu0 0
      %750 = vperm.xlu0 %749, %v636
      %v751 = vpop.permute.xlu0 %750
      %754 = vset.pattern.permute.xlu0 0
      %755 = vperm.xlu0 %754, %v637
      %v756 = vpop.permute.xlu0 %755
      %759 = vset.pattern.permute.xlu0 0
      %760 = vperm.xlu0 %759, %v638
      %v761 = vpop.permute.xlu0 %760
      %764 = vset.pattern.permute.xlu0 0
      %765 = vperm.xlu0 %764, %v639
      %v766 = vpop.permute.xlu0 %765
      %769 = vset.pattern.permute.xlu0 0
      %770 = vperm.xlu0 %769, %v640
      %v771 = vpop.permute.xlu0 %770
      %774 = vset.pattern.permute.xlu0 0
      %775 = vperm.xlu0 %774, %v641
      %v776 = vpop.permute.xlu0 %775
      %779 = vset.pattern.permute.xlu0 0
      %780 = vperm.xlu0 %779, %v642
      %v781 = vpop.permute.xlu0 %780
      %784 = vset.pattern.permute.xlu0 0
      %785 = vperm.xlu0 %784, %v643
      %v786 = vpop.permute.xlu0 %785
      %789 = vset.pattern.permute.xlu0 0
      %790 = vperm.xlu0 %789, %v644
      %v791 = vpop.permute.xlu0 %790
      %794 = vset.pattern.permute.xlu0 0
      %795 = vperm.xlu0 %794, %v645
      %v796 = vpop.permute.xlu0 %795
      %799 = vset.pattern.permute.xlu0 0
      %800 = vperm.xlu0 %799, %v646
      %v801 = vpop.permute.xlu0 %800
      %804 = vset.pattern.permute.xlu0 0
      %805 = vperm.xlu0 %804, %v647
      %v806 = vpop.permute.xlu0 %805
      %v808 = vmul.f32 %v584, %v651
      %v809 = vmul.f32 %v585, %v656
      %v810 = vmul.f32 %v586, %v661
      %v811 = vmul.f32 %v587, %v666
      %v812 = vmul.f32 %v588, %v671
      %v813 = vmul.f32 %v589, %v676
      %v814 = vmul.f32 %v590, %v681
      %v815 = vmul.f32 %v591, %v686
      %v816 = vmul.f32 %v592, %v691
      %v817 = vmul.f32 %v593, %v696
      %v818 = vmul.f32 %v594, %v701
      %v819 = vmul.f32 %v595, %v706
      %v820 = vmul.f32 %v596, %v711
      %v821 = vmul.f32 %v597, %v716
      %v822 = vmul.f32 %v598, %v721
      %v823 = vmul.f32 %v599, %v726
      %v824 = vmul.f32 %v600, %v731
      %v825 = vmul.f32 %v601, %v736
      %v826 = vmul.f32 %v602, %v741
      %v827 = vmul.f32 %v603, %v746
      %v828 = vmul.f32 %v604, %v751
      %v829 = vmul.f32 %v605, %v756
      %v830 = vmul.f32 %v606, %v761
      %v831 = vmul.f32 %v607, %v766
      %v832 = vmul.f32 %v608, %v771
      %v833 = vmul.f32 %v609, %v776
      %v834 = vmul.f32 %v610, %v781
      %v835 = vmul.f32 %v611, %v786
      %v836 = vmul.f32 %v612, %v791
      %v837 = vmul.f32 %v613, %v796
      %v838 = vmul.f32 %v614, %v801
      %v839 = vmul.f32 %v615, %v806
      %v840 = vpack.c.bf16 %v809, %v808
      %v841 = vpack.c.bf16 %v811, %v810
      %v842 = vpack.c.bf16 %v813, %v812
      %v843 = vpack.c.bf16 %v815, %v814
      %v844 = vpack.c.bf16 %v817, %v816
      %v845 = vpack.c.bf16 %v819, %v818
      %v846 = vpack.c.bf16 %v821, %v820
      %v847 = vpack.c.bf16 %v823, %v822
      %v848 = vpack.c.bf16 %v825, %v824
      %v849 = vpack.c.bf16 %v827, %v826
      %v850 = vpack.c.bf16 %v829, %v828
      %v851 = vpack.c.bf16 %v831, %v830
      %v852 = vpack.c.bf16 %v833, %v832
      %v853 = vpack.c.bf16 %v835, %v834
      %v854 = vpack.c.bf16 %v837, %v836
      %v855 = vpack.c.bf16 %v839, %v838
      %v856 = vld [vmem:[#allocation3] sm:$0xf]
      %v857 = vld [vmem:[#allocation3 + $0x4] sm:$0xf]
      %v858 = vld [vmem:[#allocation3 + $0x8] sm:$0xf]
      %v859 = vld [vmem:[#allocation3 + $0xc] sm:$0xf]
      %v860 = vld [vmem:[#allocation3 + $0x10] sm:$0xf]
      %v861 = vld [vmem:[#allocation3 + $0x14] sm:$0xf]
      %v862 = vld [vmem:[#allocation3 + $0x18] sm:$0xf]
      %v863 = vld [vmem:[#allocation3 + $0x1c] sm:$0xf]
      %v864 = vld [vmem:[#allocation3 + $0x20] sm:$0xf]
      %v865 = vld [vmem:[#allocation3 + $0x24] sm:$0xf]
      %v866 = vld [vmem:[#allocation3 + $0x28] sm:$0xf]
      %v867 = vld [vmem:[#allocation3 + $0x2c] sm:$0xf]
      %v868 = vld [vmem:[#allocation3 + $0x30] sm:$0xf]
      %v869 = vld [vmem:[#allocation3 + $0x34] sm:$0xf]
      %v870 = vld [vmem:[#allocation3 + $0x38] sm:$0xf]
      %v871 = vld [vmem:[#allocation3 + $0x3c] sm:$0xf]
      %v872 = vld [vmem:[#allocation3 + $0x40] sm:$0xf]
      %v873 = vld [vmem:[#allocation3 + $0x44] sm:$0xf]
      %v874 = vld [vmem:[#allocation3 + $0x48] sm:$0xf]
      %v875 = vld [vmem:[#allocation3 + $0x4c] sm:$0xf]
      %v876 = vld [vmem:[#allocation3 + $0x50] sm:$0xf]
      %v877 = vld [vmem:[#allocation3 + $0x54] sm:$0xf]
      %v878 = vld [vmem:[#allocation3 + $0x58] sm:$0xf]
      %v879 = vld [vmem:[#allocation3 + $0x5c] sm:$0xf]
      %v880 = vld [vmem:[#allocation3 + $0x60] sm:$0xf]
      %v881 = vld [vmem:[#allocation3 + $0x64] sm:$0xf]
      %v882 = vld [vmem:[#allocation3 + $0x68] sm:$0xf]
      %v883 = vld [vmem:[#allocation3 + $0x6c] sm:$0xf]
      %v884 = vld [vmem:[#allocation3 + $0x70] sm:$0xf]
      %v885 = vld [vmem:[#allocation3 + $0x74] sm:$0xf]
      %v886 = vld [vmem:[#allocation3 + $0x78] sm:$0xf]
      %v887 = vld [vmem:[#allocation3 + $0x7c] sm:$0xf]
      %v888 = vld [vmem:[#allocation9] sm:$0xf]
      %v889 = vld [vmem:[#allocation9 + $0x4] sm:$0xf]
      %v890 = vld [vmem:[#allocation9 + $0x8] sm:$0xf]
      %v891 = vld [vmem:[#allocation9 + $0xc] sm:$0xf]
      %v892 = vld [vmem:[#allocation9 + $0x10] sm:$0xf]
      %v893 = vld [vmem:[#allocation9 + $0x14] sm:$0xf]
      %v894 = vld [vmem:[#allocation9 + $0x18] sm:$0xf]
      %v895 = vld [vmem:[#allocation9 + $0x1c] sm:$0xf]
      %v896 = vld [vmem:[#allocation9 + $0x20] sm:$0xf]
      %v897 = vld [vmem:[#allocation9 + $0x24] sm:$0xf]
      %v898 = vld [vmem:[#allocation9 + $0x28] sm:$0xf]
      %v899 = vld [vmem:[#allocation9 + $0x2c] sm:$0xf]
      %v900 = vld [vmem:[#allocation9 + $0x30] sm:$0xf]
      %v901 = vld [vmem:[#allocation9 + $0x34] sm:$0xf]
      %v902 = vld [vmem:[#allocation9 + $0x38] sm:$0xf]
      %v903 = vld [vmem:[#allocation9 + $0x3c] sm:$0xf]
      %v904 = vld [vmem:[#allocation11] sm:$0xf]
      %v905 = vld [vmem:[#allocation11 + $0x4] sm:$0xf]
      %v906 = vld [vmem:[#allocation11 + $0x8] sm:$0xf]
      %v907 = vld [vmem:[#allocation11 + $0xc] sm:$0xf]
      %v908 = vld [vmem:[#allocation11 + $0x10] sm:$0xf]
      %v909 = vld [vmem:[#allocation11 + $0x14] sm:$0xf]
      %v910 = vld [vmem:[#allocation11 + $0x18] sm:$0xf]
      %v911 = vld [vmem:[#allocation11 + $0x1c] sm:$0xf]
      %v912 = vld [vmem:[#allocation11 + $0x20] sm:$0xf]
      %v913 = vld [vmem:[#allocation11 + $0x24] sm:$0xf]
      %v914 = vld [vmem:[#allocation11 + $0x28] sm:$0xf]
      %v915 = vld [vmem:[#allocation11 + $0x2c] sm:$0xf]
      %v916 = vld [vmem:[#allocation11 + $0x30] sm:$0xf]
      %v917 = vld [vmem:[#allocation11 + $0x34] sm:$0xf]
      %v918 = vld [vmem:[#allocation11 + $0x38] sm:$0xf]
      %v919 = vld [vmem:[#allocation11 + $0x3c] sm:$0xf]
      %v936 = vunpack.c.l.b16 %v904
      %v937 = vunpack.c.l.b16 %v905
      %v938 = vunpack.c.l.b16 %v906
      %v939 = vunpack.c.l.b16 %v907
      %v940 = vunpack.c.l.b16 %v908
      %v941 = vunpack.c.l.b16 %v909
      %v942 = vunpack.c.l.b16 %v910
      %v943 = vunpack.c.l.b16 %v911
      %v944 = vunpack.c.l.b16 %v912
      %v945 = vunpack.c.l.b16 %v913
      %v946 = vunpack.c.l.b16 %v914
      %v947 = vunpack.c.l.b16 %v915
      %v948 = vunpack.c.l.b16 %v916
      %v949 = vunpack.c.l.b16 %v917
      %v950 = vunpack.c.l.b16 %v918
      %v951 = vunpack.c.l.b16 %v919
      %v952 = vpack.c.b16 %v937, %v936
      %v953 = vpack.c.b16 %v939, %v938
      %v954 = vpack.c.b16 %v941, %v940
      %v955 = vpack.c.b16 %v943, %v942
      %v956 = vpack.c.b16 %v945, %v944
      %v957 = vpack.c.b16 %v947, %v946
      %v958 = vpack.c.b16 %v949, %v948
      %v959 = vpack.c.b16 %v951, %v950
      %968 = vmatprep.subr.bf16.mxu0 0
      %969 = vmatpush1.bf16.msra.mxu0 %v952
      %970 = vmatprep.subr.bf16.mxu0 0
      %971 = vmatpush1.bf16.msra.mxu0 %v953
      %972 = vmatprep.subr.bf16.mxu0 0
      %973 = vmatpush1.bf16.msra.mxu0 %v954
      %974 = vmatprep.subr.bf16.mxu0 0
      %975 = vmatpush1.bf16.msra.mxu0 %v955
      %976 = vmatprep.subr.bf16.mxu0 0
      %977 = vmatpush1.bf16.msra.mxu0 %v956
      %978 = vmatprep.subr.bf16.mxu0 0
      %979 = vmatpush1.bf16.msra.mxu0 %v957
      %980 = vmatprep.subr.bf16.mxu0 0
      %981 = vmatpush1.bf16.msra.mxu0 %v958
      %982 = vmatprep.subr.bf16.mxu0 0
      %983 = vmatpush1.bf16.msra.mxu0 %v959
      %984 = vmatprep.subr.bf16.mxu0 0
      %985 = vmatpush1.bf16.msra.mxu0 0
      %986 = vmatprep.subr.bf16.mxu0 0
      %987 = vmatpush1.bf16.msra.mxu0 0
      %988 = vmatprep.subr.bf16.mxu0 0
      %989 = vmatpush1.bf16.msra.mxu0 0
      %990 = vmatprep.subr.bf16.mxu0 0
      %991 = vmatpush1.bf16.msra.mxu0 0
      %992 = vmatprep.subr.bf16.mxu0 0
      %993 = vmatpush1.bf16.msra.mxu0 0
      %994 = vmatprep.subr.bf16.mxu0 0
      %995 = vmatpush1.bf16.msra.mxu0 0
      %996 = vmatprep.subr.bf16.mxu0 0
      %997 = vmatpush1.bf16.msra.mxu0 0
      %998 = vmatprep.subr.bf16.mxu0 0
      %999 = vmatpush1.bf16.msra.mxu0 0
      %1000 = vmatprep.mubr.bf16.mxu0 0
      %1001 = vmatmul.mubr.bf16.gmra.mrb[0].mxu0 %v840
      %v1002 = vpop.f32.mrb[0].mxu0
      %v1003 = vadd.f32 0.0, %v1002
      %v1004 = vpop.f32.mrb[0].mxu0
      %v1005 = vpop.f32.mrb[0].mxu0
      %v1006 = vadd.f32 0.0, %v1005
      %v1007 = vpop.f32.mrb[0].mxu0
      %1008 = vmatprep.mubr.bf16.mxu0 0
      %1009 = vmatmul.mubr.bf16.gmra.mrb[0].mxu0 %v841
      %v1010 = vpop.f32.mrb[0].mxu0
      %v1011 = vadd.f32 0.0, %v1010
      %v1012 = vpop.f32.mrb[0].mxu0
      %v1013 = vpop.f32.mrb[0].mxu0
      %v1014 = vadd.f32 0.0, %v1013
      %v1015 = vpop.f32.mrb[0].mxu0
      %1016 = vmatprep.mubr.bf16.mxu0 0
      %1017 = vmatmul.mubr.bf16.gmra.mrb[0].mxu0 %v842
      %v1018 = vpop.f32.mrb[0].mxu0
      %v1019 = vadd.f32 0.0, %v1018
      %v1020 = vpop.f32.mrb[0].mxu0
      %v1021 = vpop.f32.mrb[0].mxu0
      %v1022 = vadd.f32 0.0, %v1021
      %v1023 = vpop.f32.mrb[0].mxu0
      %1024 = vmatprep.mubr.bf16.mxu0 0
      %1025 = vmatmul.mubr.bf16.gmra.mrb[0].mxu0 %v843
      %v1026 = vpop.f32.mrb[0].mxu0
      %v1027 = vadd.f32 0.0, %v1026
      %v1028 = vpop.f32.mrb[0].mxu0
      %v1029 = vpop.f32.mrb[0].mxu0
      %v1030 = vadd.f32 0.0, %v1029
      %v1031 = vpop.f32.mrb[0].mxu0
      %1032 = vmatprep.mubr.bf16.mxu0 0
      %1033 = vmatmul.mubr.bf16.gmra.mrb[0].mxu0 %v844
      %v1034 = vpop.f32.mrb[0].mxu0
      %v1035 = vadd.f32 0.0, %v1034
      %v1036 = vpop.f32.mrb[0].mxu0
      %v1037 = vpop.f32.mrb[0].mxu0
      %v1038 = vadd.f32 0.0, %v1037
      %v1039 = vpop.f32.mrb[0].mxu0
      %1040 = vmatprep.mubr.bf16.mxu0 0
      %1041 = vmatmul.mubr.bf16.gmra.mrb[0].mxu0 %v845
      %v1042 = vpop.f32.mrb[0].mxu0
      %v1043 = vadd.f32 0.0, %v1042
      %v1044 = vpop.f32.mrb[0].mxu0
      %v1045 = vpop.f32.mrb[0].mxu0
      %v1046 = vadd.f32 0.0, %v1045
      %v1047 = vpop.f32.mrb[0].mxu0
      %1048 = vmatprep.mubr.bf16.mxu0 0
      %1049 = vmatmul.mubr.bf16.gmra.mrb[0].mxu0 %v846
      %v1050 = vpop.f32.mrb[0].mxu0
      %v1051 = vadd.f32 0.0, %v1050
      %v1052 = vpop.f32.mrb[0].mxu0
      %v1053 = vpop.f32.mrb[0].mxu0
      %v1054 = vadd.f32 0.0, %v1053
      %v1055 = vpop.f32.mrb[0].mxu0
      %1056 = vmatprep.mubr.bf16.mxu0 0
      %1057 = vmatmul.mubr.bf16.gmra.mrb[0].mxu0 %v847
      %v1058 = vpop.f32.mrb[0].mxu0
      %v1059 = vadd.f32 0.0, %v1058
      %v1060 = vpop.f32.mrb[0].mxu0
      %v1061 = vpop.f32.mrb[0].mxu0
      %v1062 = vadd.f32 0.0, %v1061
      %v1063 = vpop.f32.mrb[0].mxu0
      %1064 = vmatprep.mubr.bf16.mxu0 0
      %1065 = vmatmul.mubr.bf16.gmra.mrb[0].mxu0 %v848
      %v1066 = vpop.f32.mrb[0].mxu0
      %v1067 = vadd.f32 0.0, %v1066
      %v1068 = vpop.f32.mrb[0].mxu0
      %v1069 = vpop.f32.mrb[0].mxu0
      %v1070 = vadd.f32 0.0, %v1069
      %v1071 = vpop.f32.mrb[0].mxu0
      %1072 = vmatprep.mubr.bf16.mxu0 0
      %1073 = vmatmul.mubr.bf16.gmra.mrb[0].mxu0 %v849
      %v1074 = vpop.f32.mrb[0].mxu0
      %v1075 = vadd.f32 0.0, %v1074
      %v1076 = vpop.f32.mrb[0].mxu0
      %v1077 = vpop.f32.mrb[0].mxu0
      %v1078 = vadd.f32 0.0, %v1077
      %v1079 = vpop.f32.mrb[0].mxu0
      %1080 = vmatprep.mubr.bf16.mxu0 0
      %1081 = vmatmul.mubr.bf16.gmra.mrb[0].mxu0 %v850
      %v1082 = vpop.f32.mrb[0].mxu0
      %v1083 = vadd.f32 0.0, %v1082
      %v1084 = vpop.f32.mrb[0].mxu0
      %v1085 = vpop.f32.mrb[0].mxu0
      %v1086 = vadd.f32 0.0, %v1085
      %v1087 = vpop.f32.mrb[0].mxu0
      %1088 = vmatprep.mubr.bf16.mxu0 0
      %1089 = vmatmul.mubr.bf16.gmra.mrb[0].mxu0 %v851
      %v1090 = vpop.f32.mrb[0].mxu0
      %v1091 = vadd.f32 0.0, %v1090
      %v1092 = vpop.f32.mrb[0].mxu0
      %v1093 = vpop.f32.mrb[0].mxu0
      %v1094 = vadd.f32 0.0, %v1093
      %v1095 = vpop.f32.mrb[0].mxu0
      %1096 = vmatprep.mubr.bf16.mxu0 0
      %1097 = vmatmul.mubr.bf16.gmra.mrb[0].mxu0 %v852
      %v1098 = vpop.f32.mrb[0].mxu0
      %v1099 = vadd.f32 0.0, %v1098
      %v1100 = vpop.f32.mrb[0].mxu0
      %v1101 = vpop.f32.mrb[0].mxu0
      %v1102 = vadd.f32 0.0, %v1101
      %v1103 = vpop.f32.mrb[0].mxu0
      %1104 = vmatprep.mubr.bf16.mxu0 0
      %1105 = vmatmul.mubr.bf16.gmra.mrb[0].mxu0 %v853
      %v1106 = vpop.f32.mrb[0].mxu0
      %v1107 = vadd.f32 0.0, %v1106
      %v1108 = vpop.f32.mrb[0].mxu0
      %v1109 = vpop.f32.mrb[0].mxu0
      %v1110 = vadd.f32 0.0, %v1109
      %v1111 = vpop.f32.mrb[0].mxu0
      %1112 = vmatprep.mubr.bf16.mxu0 0
      %1113 = vmatmul.mubr.bf16.gmra.mrb[0].mxu0 %v854
      %v1114 = vpop.f32.mrb[0].mxu0
      %v1115 = vadd.f32 0.0, %v1114
      %v1116 = vpop.f32.mrb[0].mxu0
      %v1117 = vpop.f32.mrb[0].mxu0
      %v1118 = vadd.f32 0.0, %v1117
      %v1119 = vpop.f32.mrb[0].mxu0
      %1120 = vmatprep.mubr.bf16.mxu0 0
      %1121 = vmatmul.mubr.bf16.gmra.mrb[0].mxu0 %v855
      %v1122 = vpop.f32.mrb[0].mxu0
      %v1123 = vadd.f32 0.0, %v1122
      %v1124 = vpop.f32.mrb[0].mxu0
      %v1125 = vpop.f32.mrb[0].mxu0
      %v1126 = vadd.f32 0.0, %v1125
      %v1127 = vpop.f32.mrb[0].mxu0
      %1128 = vdwg.mxu0
      %v1161 = vunpack.c.l.b16 %v856
      %v1162 = vunpack.c.l.b16 %v857
      %v1163 = vunpack.c.l.b16 %v858
      %v1164 = vunpack.c.l.b16 %v859
      %v1165 = vunpack.c.l.b16 %v860
      %v1166 = vunpack.c.l.b16 %v861
      %v1167 = vunpack.c.l.b16 %v862
      %v1168 = vunpack.c.l.b16 %v863
      %v1169 = vunpack.c.l.b16 %v864
      %v1170 = vunpack.c.l.b16 %v865
      %v1171 = vunpack.c.l.b16 %v866
      %v1172 = vunpack.c.l.b16 %v867
      %v1173 = vunpack.c.l.b16 %v868
      %v1174 = vunpack.c.l.b16 %v869
      %v1175 = vunpack.c.l.b16 %v870
      %v1176 = vunpack.c.l.b16 %v871
      %v1177 = vunpack.c.l.b16 %v872
      %v1178 = vunpack.c.l.b16 %v873
      %v1179 = vunpack.c.l.b16 %v874
      %v1180 = vunpack.c.l.b16 %v875
      %v1181 = vunpack.c.l.b16 %v876
      %v1182 = vunpack.c.l.b16 %v877
      %v1183 = vunpack.c.l.b16 %v878
      %v1184 = vunpack.c.l.b16 %v879
      %v1185 = vunpack.c.l.b16 %v880
      %v1186 = vunpack.c.l.b16 %v881
      %v1187 = vunpack.c.l.b16 %v882
      %v1188 = vunpack.c.l.b16 %v883
      %v1189 = vunpack.c.l.b16 %v884
      %v1190 = vunpack.c.l.b16 %v885
      %v1191 = vunpack.c.l.b16 %v886
      %v1192 = vunpack.c.l.b16 %v887
      %v1193 = vpack.c.b16 %v1162, %v1161
      %v1194 = vpack.c.b16 %v1164, %v1163
      %v1195 = vpack.c.b16 %v1166, %v1165
      %v1196 = vpack.c.b16 %v1168, %v1167
      %v1197 = vpack.c.b16 %v1170, %v1169
      %v1198 = vpack.c.b16 %v1172, %v1171
      %v1199 = vpack.c.b16 %v1174, %v1173
      %v1200 = vpack.c.b16 %v1176, %v1175
      %v1201 = vpack.c.b16 %v1178, %v1177
      %v1202 = vpack.c.b16 %v1180, %v1179
      %v1203 = vpack.c.b16 %v1182, %v1181
      %v1204 = vpack.c.b16 %v1184, %v1183
      %v1205 = vpack.c.b16 %v1186, %v1185
      %v1206 = vpack.c.b16 %v1188, %v1187
      %v1207 = vpack.c.b16 %v1190, %v1189
      %v1208 = vpack.c.b16 %v1192, %v1191
      %v1241 = vunpack.c.l.b16 %v888
      %v1242 = vunpack.c.l.b16 %v889
      %v1243 = vunpack.c.l.b16 %v890
      %v1244 = vunpack.c.l.b16 %v891
      %v1245 = vunpack.c.l.b16 %v892
      %v1246 = vunpack.c.l.b16 %v893
      %v1247 = vunpack.c.l.b16 %v894
      %v1248 = vunpack.c.l.b16 %v895
      %v1249 = vunpack.c.l.b16 %v896
      %v1250 = vunpack.c.l.b16 %v897
      %v1251 = vunpack.c.l.b16 %v898
      %v1252 = vunpack.c.l.b16 %v899
      %v1253 = vunpack.c.l.b16 %v900
      %v1254 = vunpack.c.l.b16 %v901
      %v1255 = vunpack.c.l.b16 %v902
      %v1256 = vunpack.c.l.b16 %v903
      %v1257 = vpack.c.b16 %v1242, %v1241
      %v1258 = vpack.c.b16 %v1244, %v1243
      %v1259 = vpack.c.b16 %v1246, %v1245
      %v1260 = vpack.c.b16 %v1248, %v1247
      %v1261 = vpack.c.b16 %v1250, %v1249
      %v1262 = vpack.c.b16 %v1252, %v1251
      %v1263 = vpack.c.b16 %v1254, %v1253
      %v1264 = vpack.c.b16 %v1256, %v1255
      %1273 = vmatprep.subr.bf16.mxu0 0
      %1274 = vmatpush1.bf16.msra.mxu0 %v1257
      %1275 = vmatprep.subr.bf16.mxu0 0
      %1276 = vmatpush1.bf16.msra.mxu0 %v1258
      %1277 = vmatprep.subr.bf16.mxu0 0
      %1278 = vmatpush1.bf16.msra.mxu0 %v1259
      %1279 = vmatprep.subr.bf16.mxu0 0
      %1280 = vmatpush1.bf16.msra.mxu0 %v1260
      %1281 = vmatprep.subr.bf16.mxu0 0
      %1282 = vmatpush1.bf16.msra.mxu0 %v1261
      %1283 = vmatprep.subr.bf16.mxu0 0
      %1284 = vmatpush1.bf16.msra.mxu0 %v1262
      %1285 = vmatprep.subr.bf16.mxu0 0
      %1286 = vmatpush1.bf16.msra.mxu0 %v1263
      %1287 = vmatprep.subr.bf16.mxu0 0
      %1288 = vmatpush1.bf16.msra.mxu0 %v1264
      %1289 = vmatprep.subr.bf16.mxu0 0
      %1290 = vmatpush1.bf16.msra.mxu0 0
      %1291 = vmatprep.subr.bf16.mxu0 0
      %1292 = vmatpush1.bf16.msra.mxu0 0
      %1293 = vmatprep.subr.bf16.mxu0 0
      %1294 = vmatpush1.bf16.msra.mxu0 0
      %1295 = vmatprep.subr.bf16.mxu0 0
      %1296 = vmatpush1.bf16.msra.mxu0 0
      %1297 = vmatprep.subr.bf16.mxu0 0
      %1298 = vmatpush1.bf16.msra.mxu0 0
      %1299 = vmatprep.subr.bf16.mxu0 0
      %1300 = vmatpush1.bf16.msra.mxu0 0
      %1301 = vmatprep.subr.bf16.mxu0 0
      %1302 = vmatpush1.bf16.msra.mxu0 0
      %1303 = vmatprep.subr.bf16.mxu0 0
      %1304 = vmatpush1.bf16.msra.mxu0 0
      %1305 = vmatprep.mubr.bf16.mxu0 0
      %1306 = vmatmul.mubr.bf16.gmra.mrb[0].mxu0 %v1193
      %v1307 = vpop.f32.mrb[0].mxu0
      %v1308 = vadd.f32 %v1003, %v1307
      %v1309 = vpop.f32.mrb[0].mxu0
      %v1310 = vpop.f32.mrb[0].mxu0
      %v1311 = vadd.f32 %v1006, %v1310
      %v1312 = vpop.f32.mrb[0].mxu0
      %1313 = vmatprep.mubr.bf16.mxu0 0
      %1314 = vmatmul.mubr.bf16.gmra.mrb[0].mxu0 %v1194
      %v1315 = vpop.f32.mrb[0].mxu0
      %v1316 = vadd.f32 %v1011, %v1315
      %v1317 = vpop.f32.mrb[0].mxu0
      %v1318 = vpop.f32.mrb[0].mxu0
      %v1319 = vadd.f32 %v1014, %v1318
      %v1320 = vpop.f32.mrb[0].mxu0
      %1321 = vmatprep.mubr.bf16.mxu0 0
      %1322 = vmatmul.mubr.bf16.gmra.mrb[0].mxu0 %v1195
      %v1323 = vpop.f32.mrb[0].mxu0
      %v1324 = vadd.f32 %v1019, %v1323
      %v1325 = vpop.f32.mrb[0].mxu0
      %v1326 = vpop.f32.mrb[0].mxu0
      %v1327 = vadd.f32 %v1022, %v1326
      %v1328 = vpop.f32.mrb[0].mxu0
      %1329 = vmatprep.mubr.bf16.mxu0 0
      %1330 = vmatmul.mubr.bf16.gmra.mrb[0].mxu0 %v1196
      %v1331 = vpop.f32.mrb[0].mxu0
      %v1332 = vadd.f32 %v1027, %v1331
      %v1333 = vpop.f32.mrb[0].mxu0
      %v1334 = vpop.f32.mrb[0].mxu0
      %v1335 = vadd.f32 %v1030, %v1334
      %v1336 = vpop.f32.mrb[0].mxu0
      %1337 = vmatprep.mubr.bf16.mxu0 0
      %1338 = vmatmul.mubr.bf16.gmra.mrb[0].mxu0 %v1197
      %v1339 = vpop.f32.mrb[0].mxu0
      %v1340 = vadd.f32 %v1035, %v1339
      %v1341 = vpop.f32.mrb[0].mxu0
      %v1342 = vpop.f32.mrb[0].mxu0
      %v1343 = vadd.f32 %v1038, %v1342
      %v1344 = vpop.f32.mrb[0].mxu0
      %1345 = vmatprep.mubr.bf16.mxu0 0
      %1346 = vmatmul.mubr.bf16.gmra.mrb[0].mxu0 %v1198
      %v1347 = vpop.f32.mrb[0].mxu0
      %v1348 = vadd.f32 %v1043, %v1347
      %v1349 = vpop.f32.mrb[0].mxu0
      %v1350 = vpop.f32.mrb[0].mxu0
      %v1351 = vadd.f32 %v1046, %v1350
      %v1352 = vpop.f32.mrb[0].mxu0
      %1353 = vmatprep.mubr.bf16.mxu0 0
      %1354 = vmatmul.mubr.bf16.gmra.mrb[0].mxu0 %v1199
      %v1355 = vpop.f32.mrb[0].mxu0
      %v1356 = vadd.f32 %v1051, %v1355
      %v1357 = vpop.f32.mrb[0].mxu0
      %v1358 = vpop.f32.mrb[0].mxu0
      %v1359 = vadd.f32 %v1054, %v1358
      %v1360 = vpop.f32.mrb[0].mxu0
      %1361 = vmatprep.mubr.bf16.mxu0 0
      %1362 = vmatmul.mubr.bf16.gmra.mrb[0].mxu0 %v1200
      %v1363 = vpop.f32.mrb[0].mxu0
      %v1364 = vadd.f32 %v1059, %v1363
      %v1365 = vpop.f32.mrb[0].mxu0
      %v1366 = vpop.f32.mrb[0].mxu0
      %v1367 = vadd.f32 %v1062, %v1366
      %v1368 = vpop.f32.mrb[0].mxu0
      %1369 = vmatprep.mubr.bf16.mxu0 0
      %1370 = vmatmul.mubr.bf16.gmra.mrb[0].mxu0 %v1201
      %v1371 = vpop.f32.mrb[0].mxu0
      %v1372 = vadd.f32 %v1067, %v1371
      %v1373 = vpop.f32.mrb[0].mxu0
      %v1374 = vpop.f32.mrb[0].mxu0
      %v1375 = vadd.f32 %v1070, %v1374
      %v1376 = vpop.f32.mrb[0].mxu0
      %1377 = vmatprep.mubr.bf16.mxu0 0
      %1378 = vmatmul.mubr.bf16.gmra.mrb[0].mxu0 %v1202
      %v1379 = vpop.f32.mrb[0].mxu0
      %v1380 = vadd.f32 %v1075, %v1379
      %v1381 = vpop.f32.mrb[0].mxu0
      %v1382 = vpop.f32.mrb[0].mxu0
      %v1383 = vadd.f32 %v1078, %v1382
      %v1384 = vpop.f32.mrb[0].mxu0
      %1385 = vmatprep.mubr.bf16.mxu0 0
      %1386 = vmatmul.mubr.bf16.gmra.mrb[0].mxu0 %v1203
      %v1387 = vpop.f32.mrb[0].mxu0
      %v1388 = vadd.f32 %v1083, %v1387
      %v1389 = vpop.f32.mrb[0].mxu0
      %v1390 = vpop.f32.mrb[0].mxu0
      %v1391 = vadd.f32 %v1086, %v1390
      %v1392 = vpop.f32.mrb[0].mxu0
      %1393 = vmatprep.mubr.bf16.mxu0 0
      %1394 = vmatmul.mubr.bf16.gmra.mrb[0].mxu0 %v1204
      %v1395 = vpop.f32.mrb[0].mxu0
      %v1396 = vadd.f32 %v1091, %v1395
      %v1397 = vpop.f32.mrb[0].mxu0
      %v1398 = vpop.f32.mrb[0].mxu0
      %v1399 = vadd.f32 %v1094, %v1398
      %v1400 = vpop.f32.mrb[0].mxu0
      %1401 = vmatprep.mubr.bf16.mxu0 0
      %1402 = vmatmul.mubr.bf16.gmra.mrb[0].mxu0 %v1205
      %v1403 = vpop.f32.mrb[0].mxu0
      %v1404 = vadd.f32 %v1099, %v1403
      %v1405 = vpop.f32.mrb[0].mxu0
      %v1406 = vpop.f32.mrb[0].mxu0
      %v1407 = vadd.f32 %v1102, %v1406
      %v1408 = vpop.f32.mrb[0].mxu0
      %1409 = vmatprep.mubr.bf16.mxu0 0
      %1410 = vmatmul.mubr.bf16.gmra.mrb[0].mxu0 %v1206
      %v1411 = vpop.f32.mrb[0].mxu0
      %v1412 = vadd.f32 %v1107, %v1411
      %v1413 = vpop.f32.mrb[0].mxu0
      %v1414 = vpop.f32.mrb[0].mxu0
      %v1415 = vadd.f32 %v1110, %v1414
      %v1416 = vpop.f32.mrb[0].mxu0
      %1417 = vmatprep.mubr.bf16.mxu0 0
      %1418 = vmatmul.mubr.bf16.gmra.mrb[0].mxu0 %v1207
      %v1419 = vpop.f32.mrb[0].mxu0
      %v1420 = vadd.f32 %v1115, %v1419
      %v1421 = vpop.f32.mrb[0].mxu0
      %v1422 = vpop.f32.mrb[0].mxu0
      %v1423 = vadd.f32 %v1118, %v1422
      %v1424 = vpop.f32.mrb[0].mxu0
      %1425 = vmatprep.mubr.bf16.mxu0 0
      %1426 = vmatmul.mubr.bf16.gmra.mrb[0].mxu0 %v1208
      %v1427 = vpop.f32.mrb[0].mxu0
      %v1428 = vadd.f32 %v1123, %v1427
      %v1429 = vpop.f32.mrb[0].mxu0
      %v1430 = vpop.f32.mrb[0].mxu0
      %v1431 = vadd.f32 %v1126, %v1430
      %v1432 = vpop.f32.mrb[0].mxu0
      %1433 = vdwg.mxu0
      %v1434 = vmax.f32 %v1308, 0.0
      %v1435 = vmax.f32 %v1311, 0.0
      %v1436 = vmax.f32 %v1316, 0.0
      %v1437 = vmax.f32 %v1319, 0.0
      %v1438 = vmax.f32 %v1324, 0.0
      %v1439 = vmax.f32 %v1327, 0.0
      %v1440 = vmax.f32 %v1332, 0.0
      %v1441 = vmax.f32 %v1335, 0.0
      %v1442 = vmax.f32 %v1340, 0.0
      %v1443 = vmax.f32 %v1343, 0.0
      %v1444 = vmax.f32 %v1348, 0.0
      %v1445 = vmax.f32 %v1351, 0.0
      %v1446 = vmax.f32 %v1356, 0.0
      %v1447 = vmax.f32 %v1359, 0.0
      %v1448 = vmax.f32 %v1364, 0.0
      %v1449 = vmax.f32 %v1367, 0.0
      %v1450 = vmax.f32 %v1372, 0.0
      %v1451 = vmax.f32 %v1375, 0.0
      %v1452 = vmax.f32 %v1380, 0.0
      %v1453 = vmax.f32 %v1383, 0.0
      %v1454 = vmax.f32 %v1388, 0.0
      %v1455 = vmax.f32 %v1391, 0.0
      %v1456 = vmax.f32 %v1396, 0.0
      %v1457 = vmax.f32 %v1399, 0.0
      %v1458 = vmax.f32 %v1404, 0.0
      %v1459 = vmax.f32 %v1407, 0.0
      %v1460 = vmax.f32 %v1412, 0.0
      %v1461 = vmax.f32 %v1415, 0.0
      %v1462 = vmax.f32 %v1420, 0.0
      %v1463 = vmax.f32 %v1423, 0.0
      %v1464 = vmax.f32 %v1428, 0.0
      %v1465 = vmax.f32 %v1431, 0.0
      %1466 = vst [vmem:[#allocation14] sm:$0xff] %v1434
      %1467 = vst [vmem:[#allocation14 + $0x8] sm:$0xff] %v1435
      %1468 = vst [vmem:[#allocation14 + $0x10] sm:$0xff] %v1436
      %1469 = vst [vmem:[#allocation14 + $0x18] sm:$0xff] %v1437
      %1470 = vst [vmem:[#allocation14 + $0x20] sm:$0xff] %v1438
      %1471 = vst [vmem:[#allocation14 + $0x28] sm:$0xff] %v1439
      %1472 = vst [vmem:[#allocation14 + $0x30] sm:$0xff] %v1440
      %1473 = vst [vmem:[#allocation14 + $0x38] sm:$0xff] %v1441
      %1474 = vst [vmem:[#allocation14 + $0x40] sm:$0xff] %v1442
      %1475 = vst [vmem:[#allocation14 + $0x48] sm:$0xff] %v1443
      %1476 = vst [vmem:[#allocation14 + $0x50] sm:$0xff] %v1444
      %1477 = vst [vmem:[#allocation14 + $0x58] sm:$0xff] %v1445
      %1478 = vst [vmem:[#allocation14 + $0x60] sm:$0xff] %v1446
      %1479 = vst [vmem:[#allocation14 + $0x68] sm:$0xff] %v1447
      %1480 = vst [vmem:[#allocation14 + $0x70] sm:$0xff] %v1448
      %1481 = vst [vmem:[#allocation14 + $0x78] sm:$0xff] %v1449
      %1482 = vst [vmem:[#allocation14 + $0x80] sm:$0xff] %v1450
      %1483 = vst [vmem:[#allocation14 + $0x88] sm:$0xff] %v1451
      %1484 = vst [vmem:[#allocation14 + $0x90] sm:$0xff] %v1452
      %1485 = vst [vmem:[#allocation14 + $0x98] sm:$0xff] %v1453
      %1486 = vst [vmem:[#allocation14 + $0xa0] sm:$0xff] %v1454
      %1487 = vst [vmem:[#allocation14 + $0xa8] sm:$0xff] %v1455
      %1488 = vst [vmem:[#allocation14 + $0xb0] sm:$0xff] %v1456
      %1489 = vst [vmem:[#allocation14 + $0xb8] sm:$0xff] %v1457
      %1490 = vst [vmem:[#allocation14 + $0xc0] sm:$0xff] %v1458
      %1491 = vst [vmem:[#allocation14 + $0xc8] sm:$0xff] %v1459
      %1492 = vst [vmem:[#allocation14 + $0xd0] sm:$0xff] %v1460
      %1493 = vst [vmem:[#allocation14 + $0xd8] sm:$0xff] %v1461
      %1494 = vst [vmem:[#allocation14 + $0xe0] sm:$0xff] %v1462
      %1495 = vst [vmem:[#allocation14 + $0xe8] sm:$0xff] %v1463
      %1496 = vst [vmem:[#allocation14 + $0xf0] sm:$0xff] %v1464
      %1497 = vst [vmem:[#allocation14 + $0xf8] sm:$0xff] %v1465
    $region57: #{graphsage_forward.3} parent=1 // pred_fallthru
      _
    // Predicated region
    $region58: #{graphsage_forward.3} parent=1 // pred_check
      _
    $region59: #{graphsage_forward.3} parent=1 // pred_check_branch
      %1499 = sbr.rel (0) target = $region61
    $region60: #{graphsage_forward.3} parent=1 // pred_region
      %s1501 = ssub.s32 4096, 4096
      %1502 = vsyncadd [#allocation5], %s1501
      %s1503 = sshll.u32 [#allocation14], 4
      %s1504 = int_to_ptr.vmem [resolvable:$true] %s1503
      %1509 = dma.vmem_to_hbm [thread:$0]  %s1504, 4096, %s6, [#allocation5], 128, 128, 8
    $region61: #{graphsage_forward.3} parent=1 // pred_fallthru
      _
    // Predicated region
    $region62: #{graphsage_forward.3} parent=1 // pred_check
      _
    $region63: #{graphsage_forward.3} parent=1 // pred_check_branch
      %1511 = sbr.rel (0) target = $region65
    $region64: #{graphsage_forward.3} parent=1 // pred_region
      %1512 = dma.done [#allocation5], 4096
    $region65: #{graphsage_forward.3} parent=1 // pred_fallthru
      _
    %1513 = vsyncpa [#allocation4], 1
    %1514 = vsyncpa [#allocation7], 1
    %1515 = vsyncpa [#allocation10], 1
    %1516 = vsyncpa [#allocation13], 1
    %1517 = vsyncpa [#allocation5], 1

// kernel: graphsage_forward.2
$region0: #{graphsage_forward.2}
  #allocation0 [shape = 'u32[]', space=smem, size = 0x4, offset = 0x4, fixed_abs, tag = 'smem constant byte address 0x4 - core index']
  #allocation1 [shape = 'u32[144,128]{1,0:T(1,128)}', space=vmem, size = 0x12000, scoped, tag = 'internal scratch']
  #allocation2 [shape = 'f32[256,128]{1,0:T(8,128)}', space=vmem, size = 0x20000, scoped, tag = 'scratch operand']
  #allocation3 [shape = 'f32[256,1]{1,0:T(8,128)}', space=vmem, size = 0x20000, scoped, tag = 'scratch operand']
  %s0 = inlined_call_operand.hbm [shape: bf16[256,128], index: 0, kind: input, shape index: {}, may-alias: {0,2}]
  %s1 = inlined_call_operand.hbm [shape: s8[256,256], index: 1, kind: input, shape index: {}]
  %s2 = inlined_call_operand.hbm [shape: bf16[256,128], index: 2, kind: input, shape index: {}, may-alias: {0,2}]
  %s3 = inlined_call_operand.hbm [shape: bf16[128,128], index: 3, kind: input, shape index: {}]
  %s4 = inlined_call_operand.hbm [shape: bf16[128,128], index: 4, kind: input, shape index: {}]
  %s5 = inlined_call_operand.hbm [shape: bf16[256,128], index: 5, kind: output, shape index: {0}]
  %s6 = inlined_call_operand.hbm [shape: f32[256,1], index: 6, kind: output, shape index: {1}]
  %7 = xla_tuple %s5, %s6
  %s8 = sld [smem:[#allocation0]]
  $region66: #{graphsage_forward.2} parent=0
    _
  %s10 = ssub.s32 1, %s8
  %s11 = scalar_select 0, %s10, %s8
  $region1: #{graphsage_forward.2} parent=0
    #allocation4 [shape = 'u8[65536]{0}', space=vmem, size = 0x10000, scoped, tag = 'input window, operand 0, single buffered']
    #allocation5 [shape = 's32[1]{0}', space=sflag, size = 0x4, scoped, tag = 'scoped memory for graphsage_forward.2']
    #allocation6 [shape = 's32[1]{0}', space=sflag, size = 0x4, scoped, tag = 'scoped memory for graphsage_forward.2']
    #allocation7 [shape = 'u8[65536]{0}', space=vmem, size = 0x10000, scoped, tag = 'input window, operand 1, single buffered']
    #allocation8 [shape = 's32[1]{0}', space=sflag, size = 0x4, scoped, tag = 'scoped memory for graphsage_forward.2']
    #allocation9 [shape = 'u8[65536]{0}', space=vmem, size = 0x10000, scoped, tag = 'input window, operand 2, single buffered']
    #allocation10 [shape = 'u8[32768]{0}', space=vmem, size = 0x8000, scoped, tag = 'input window, operand 3, single buffered']
    #allocation11 [shape = 's32[1]{0}', space=sflag, size = 0x4, scoped, tag = 'scoped memory for graphsage_forward.2']
    #allocation12 [shape = 'u8[32768]{0}', space=vmem, size = 0x8000, scoped, tag = 'input window, operand 4, single buffered']
    #allocation13 [shape = 'u8[65536]{0}', space=vmem, size = 0x10000, scoped, tag = 'output window, operand 0, single buffered']
    #allocation14 [shape = 'u8[131072]{0}', space=vmem, size = 0x20000, scoped, tag = 'output window, operand 1, single buffered']
    #allocation15 [shape = 's32[1]{0}', space=sflag, size = 0x4, scoped, tag = 'scoped memory for graphsage_forward.2']
    %12 = vsyncpa [#allocation5], 0
    %13 = vsyncpa [#allocation8], 0
    %14 = vsyncpa [#allocation11], 0
    %15 = vsyncpa [#allocation6], 0
    %16 = vsyncpa [#allocation15], 0
    // Predicated region
    $region2: #{graphsage_forward.2} parent=1 // pred_check
      _
    $region3: #{graphsage_forward.2} parent=1 // pred_check_branch
      %18 = sbr.rel (0) target = $region5
    $region4: #{graphsage_forward.2} parent=1 // pred_region
      %s20 = ssub.s32 2048, 2048
      %21 = vsyncadd [#allocation5], %s20
      %s22 = sshll.u32 [#allocation4], 4
      %s23 = int_to_ptr.vmem [resolvable:$true] %s22
      %28 = dma.hbm_to_vmem [thread:$0]  %s0, 2048, %s23, [#allocation5], 64, 64, 4
    $region5: #{graphsage_forward.2} parent=1 // pred_fallthru
      _
    // Predicated region
    $region6: #{graphsage_forward.2} parent=1 // pred_check
      _
    $region7: #{graphsage_forward.2} parent=1 // pred_check_branch
      %30 = sbr.rel (0) target = $region9
    $region8: #{graphsage_forward.2} parent=1 // pred_region
      %s32 = ssub.s32 2048, 2048
      %33 = vsyncadd [#allocation8], %s32
      %s34 = sshll.u32 [#allocation7], 4
      %s35 = int_to_ptr.vmem [resolvable:$true] %s34
      %40 = dma.hbm_to_vmem [thread:$0]  %s1, 2048, %s35, [#allocation8], 256, 256, 16
    $region9: #{graphsage_forward.2} parent=1 // pred_fallthru
      _
    // Predicated region
    $region10: #{graphsage_forward.2} parent=1 // pred_check
      _
    $region11: #{graphsage_forward.2} parent=1 // pred_check_branch
      %42 = sbr.rel (0) target = $region13
    $region12: #{graphsage_forward.2} parent=1 // pred_region
      %s44 = ssub.s32 2048, 2048
      %45 = vsyncadd [#allocation8], %s44
      %s46 = sshll.u32 [#allocation9], 4
      %s47 = int_to_ptr.vmem [resolvable:$true] %s46
      %52 = dma.hbm_to_vmem [thread:$0]  %s2, 2048, %s47, [#allocation8], 64, 64, 4
    $region13: #{graphsage_forward.2} parent=1 // pred_fallthru
      _
    // Predicated region
    $region14: #{graphsage_forward.2} parent=1 // pred_check
      _
    $region15: #{graphsage_forward.2} parent=1 // pred_check_branch
      %54 = sbr.rel (0) target = $region17
    $region16: #{graphsage_forward.2} parent=1 // pred_region
      %s56 = ssub.s32 1024, 1024
      %57 = vsyncadd [#allocation11], %s56
      %s58 = sshll.u32 [#allocation10], 4
      %s59 = int_to_ptr.vmem [resolvable:$true] %s58
      %64 = dma.hbm_to_vmem [thread:$0]  %s3, 1024, %s59, [#allocation11], 64, 64, 4
    $region17: #{graphsage_forward.2} parent=1 // pred_fallthru
      _
    // Predicated region
    $region18: #{graphsage_forward.2} parent=1 // pred_check
      _
    $region19: #{graphsage_forward.2} parent=1 // pred_check_branch
      %66 = sbr.rel (0) target = $region21
    $region20: #{graphsage_forward.2} parent=1 // pred_region
      %s68 = ssub.s32 1024, 1024
      %69 = vsyncadd [#allocation11], %s68
      %s70 = sshll.u32 [#allocation12], 4
      %s71 = int_to_ptr.vmem [resolvable:$true] %s70
      %76 = dma.hbm_to_vmem [thread:$0]  %s4, 1024, %s71, [#allocation11], 64, 64, 4
    $region21: #{graphsage_forward.2} parent=1 // pred_fallthru
      _
    // Predicated region
    $region22: #{graphsage_forward.2} parent=1 // pred_check
      _
    $region23: #{graphsage_forward.2} parent=1 // pred_check_branch
      %78 = sbr.rel (0) target = $region25
    $region24: #{graphsage_forward.2} parent=1 // pred_region
      %79 = dma.done [#allocation5], 2048
    $region25: #{graphsage_forward.2} parent=1 // pred_fallthru
      _
    // Predicated region
    $region26: #{graphsage_forward.2} parent=1 // pred_check
      _
    $region27: #{graphsage_forward.2} parent=1 // pred_check_branch
      %81 = sbr.rel (0) target = $region29
    $region28: #{graphsage_forward.2} parent=1 // pred_region
      %82 = dma.done [#allocation8], 2048
    $region29: #{graphsage_forward.2} parent=1 // pred_fallthru
      _
    // Predicated region
    $region30: #{graphsage_forward.2} parent=1 // pred_check
      _
    $region31: #{graphsage_forward.2} parent=1 // pred_check_branch
      %84 = sbr.rel (0) target = $region33
    $region32: #{graphsage_forward.2} parent=1 // pred_region
      %85 = dma.done [#allocation8], 2048
    $region33: #{graphsage_forward.2} parent=1 // pred_fallthru
      _
    // Predicated region
    $region34: #{graphsage_forward.2} parent=1 // pred_check
      _
    $region35: #{graphsage_forward.2} parent=1 // pred_check_branch
      %87 = sbr.rel (0) target = $region37
    $region36: #{graphsage_forward.2} parent=1 // pred_region
      %88 = dma.done [#allocation11], 1024
    $region37: #{graphsage_forward.2} parent=1 // pred_fallthru
      _
    // Predicated region
    $region38: #{graphsage_forward.2} parent=1 // pred_check
      _
    $region39: #{graphsage_forward.2} parent=1 // pred_check_branch
      %90 = sbr.rel (0) target = $region41
    $region40: #{graphsage_forward.2} parent=1 // pred_region
      %91 = dma.done [#allocation11], 1024
    $region41: #{graphsage_forward.2} parent=1 // pred_fallthru
      _
    %p93 = scmp.eq.s32.totalorder 0, 0
    // Predicated region
    $region42: #{graphsage_forward.2} parent=1 // pred_check
      %p94 = pneg %p93
    $region43: #{graphsage_forward.2} parent=1 // pred_check_branch
      %96 = sbr.rel (%p94) target = $region45
    $region44: #{graphsage_forward.2} parent=1 // pred_region
      %97 = vst [vmem:[#allocation2] sm:$0xff] 0.0
      %98 = vst [vmem:[#allocation2 + $0x8] sm:$0xff] 0.0
      %99 = vst [vmem:[#allocation2 + $0x10] sm:$0xff] 0.0
      %100 = vst [vmem:[#allocation2 + $0x18] sm:$0xff] 0.0
      %101 = vst [vmem:[#allocation2 + $0x20] sm:$0xff] 0.0
      %102 = vst [vmem:[#allocation2 + $0x28] sm:$0xff] 0.0
      %103 = vst [vmem:[#allocation2 + $0x30] sm:$0xff] 0.0
      %104 = vst [vmem:[#allocation2 + $0x38] sm:$0xff] 0.0
      %105 = vst [vmem:[#allocation2 + $0x40] sm:$0xff] 0.0
      %106 = vst [vmem:[#allocation2 + $0x48] sm:$0xff] 0.0
      %107 = vst [vmem:[#allocation2 + $0x50] sm:$0xff] 0.0
      %108 = vst [vmem:[#allocation2 + $0x58] sm:$0xff] 0.0
      %109 = vst [vmem:[#allocation2 + $0x60] sm:$0xff] 0.0
      %110 = vst [vmem:[#allocation2 + $0x68] sm:$0xff] 0.0
      %111 = vst [vmem:[#allocation2 + $0x70] sm:$0xff] 0.0
      %112 = vst [vmem:[#allocation2 + $0x78] sm:$0xff] 0.0
      %113 = vst [vmem:[#allocation2 + $0x80] sm:$0xff] 0.0
      %114 = vst [vmem:[#allocation2 + $0x88] sm:$0xff] 0.0
      %115 = vst [vmem:[#allocation2 + $0x90] sm:$0xff] 0.0
      %116 = vst [vmem:[#allocation2 + $0x98] sm:$0xff] 0.0
      %117 = vst [vmem:[#allocation2 + $0xa0] sm:$0xff] 0.0
      %118 = vst [vmem:[#allocation2 + $0xa8] sm:$0xff] 0.0
      %119 = vst [vmem:[#allocation2 + $0xb0] sm:$0xff] 0.0
      %120 = vst [vmem:[#allocation2 + $0xb8] sm:$0xff] 0.0
      %121 = vst [vmem:[#allocation2 + $0xc0] sm:$0xff] 0.0
      %122 = vst [vmem:[#allocation2 + $0xc8] sm:$0xff] 0.0
      %123 = vst [vmem:[#allocation2 + $0xd0] sm:$0xff] 0.0
      %124 = vst [vmem:[#allocation2 + $0xd8] sm:$0xff] 0.0
      %125 = vst [vmem:[#allocation2 + $0xe0] sm:$0xff] 0.0
      %126 = vst [vmem:[#allocation2 + $0xe8] sm:$0xff] 0.0
      %127 = vst [vmem:[#allocation2 + $0xf0] sm:$0xff] 0.0
      %128 = vst [vmem:[#allocation2 + $0xf8] sm:$0xff] 0.0
      %vm129 = vcmask 7168
      %130 = vst.msk [vmem:[#allocation3] sm:$0xff] %vm129, 0.0
      %131 = vst.msk [vmem:[#allocation3 + $0x8] sm:$0xff] %vm129, 0.0
      %132 = vst.msk [vmem:[#allocation3 + $0x10] sm:$0xff] %vm129, 0.0
      %133 = vst.msk [vmem:[#allocation3 + $0x18] sm:$0xff] %vm129, 0.0
      %134 = vst.msk [vmem:[#allocation3 + $0x20] sm:$0xff] %vm129, 0.0
      %135 = vst.msk [vmem:[#allocation3 + $0x28] sm:$0xff] %vm129, 0.0
      %136 = vst.msk [vmem:[#allocation3 + $0x30] sm:$0xff] %vm129, 0.0
      %137 = vst.msk [vmem:[#allocation3 + $0x38] sm:$0xff] %vm129, 0.0
      %138 = vst.msk [vmem:[#allocation3 + $0x40] sm:$0xff] %vm129, 0.0
      %139 = vst.msk [vmem:[#allocation3 + $0x48] sm:$0xff] %vm129, 0.0
      %140 = vst.msk [vmem:[#allocation3 + $0x50] sm:$0xff] %vm129, 0.0
      %141 = vst.msk [vmem:[#allocation3 + $0x58] sm:$0xff] %vm129, 0.0
      %142 = vst.msk [vmem:[#allocation3 + $0x60] sm:$0xff] %vm129, 0.0
      %143 = vst.msk [vmem:[#allocation3 + $0x68] sm:$0xff] %vm129, 0.0
      %144 = vst.msk [vmem:[#allocation3 + $0x70] sm:$0xff] %vm129, 0.0
      %145 = vst.msk [vmem:[#allocation3 + $0x78] sm:$0xff] %vm129, 0.0
      %146 = vst.msk [vmem:[#allocation3 + $0x80] sm:$0xff] %vm129, 0.0
      %147 = vst.msk [vmem:[#allocation3 + $0x88] sm:$0xff] %vm129, 0.0
      %148 = vst.msk [vmem:[#allocation3 + $0x90] sm:$0xff] %vm129, 0.0
      %149 = vst.msk [vmem:[#allocation3 + $0x98] sm:$0xff] %vm129, 0.0
      %150 = vst.msk [vmem:[#allocation3 + $0xa0] sm:$0xff] %vm129, 0.0
      %151 = vst.msk [vmem:[#allocation3 + $0xa8] sm:$0xff] %vm129, 0.0
      %152 = vst.msk [vmem:[#allocation3 + $0xb0] sm:$0xff] %vm129, 0.0
      %153 = vst.msk [vmem:[#allocation3 + $0xb8] sm:$0xff] %vm129, 0.0
      %154 = vst.msk [vmem:[#allocation3 + $0xc0] sm:$0xff] %vm129, 0.0
      %155 = vst.msk [vmem:[#allocation3 + $0xc8] sm:$0xff] %vm129, 0.0
      %156 = vst.msk [vmem:[#allocation3 + $0xd0] sm:$0xff] %vm129, 0.0
      %157 = vst.msk [vmem:[#allocation3 + $0xd8] sm:$0xff] %vm129, 0.0
      %158 = vst.msk [vmem:[#allocation3 + $0xe0] sm:$0xff] %vm129, 0.0
      %159 = vst.msk [vmem:[#allocation3 + $0xe8] sm:$0xff] %vm129, 0.0
      %160 = vst.msk [vmem:[#allocation3 + $0xf0] sm:$0xff] %vm129, 0.0
      %161 = vst.msk [vmem:[#allocation3 + $0xf8] sm:$0xff] %vm129, 0.0
    $region45: #{graphsage_forward.2} parent=1 // pred_fallthru
      _
    %v162 = vld [vmem:[#allocation7] sm:$0xff]
    %v163 = vld [vmem:[#allocation7 + $0x8] sm:$0xff]
    %v164 = vld [vmem:[#allocation7 + $0x10] sm:$0xff]
    %v165 = vld [vmem:[#allocation7 + $0x18] sm:$0xff]
    %v166 = vld [vmem:[#allocation7 + $0x20] sm:$0xff]
    %v167 = vld [vmem:[#allocation7 + $0x28] sm:$0xff]
    %v168 = vld [vmem:[#allocation7 + $0x30] sm:$0xff]
    %v169 = vld [vmem:[#allocation7 + $0x38] sm:$0xff]
    %v170 = vld [vmem:[#allocation7 + $0x40] sm:$0xff]
    %v171 = vld [vmem:[#allocation7 + $0x48] sm:$0xff]
    %v172 = vld [vmem:[#allocation7 + $0x50] sm:$0xff]
    %v173 = vld [vmem:[#allocation7 + $0x58] sm:$0xff]
    %v174 = vld [vmem:[#allocation7 + $0x60] sm:$0xff]
    %v175 = vld [vmem:[#allocation7 + $0x68] sm:$0xff]
    %v176 = vld [vmem:[#allocation7 + $0x70] sm:$0xff]
    %v177 = vld [vmem:[#allocation7 + $0x78] sm:$0xff]
    %v178 = vunpack.c.l.s8.bf16 %v162
    %v179 = vunpack.c.l.s8.bf16 %v163
    %v180 = vunpack.c.h.s8.bf16 %v162
    %v181 = vunpack.c.h.s8.bf16 %v163
    %v182 = vunpack.c.l.s8.bf16 %v164
    %v183 = vunpack.c.l.s8.bf16 %v165
    %v184 = vunpack.c.h.s8.bf16 %v164
    %v185 = vunpack.c.h.s8.bf16 %v165
    %v186 = vunpack.c.l.s8.bf16 %v166
    %v187 = vunpack.c.l.s8.bf16 %v167
    %v188 = vunpack.c.h.s8.bf16 %v166
    %v189 = vunpack.c.h.s8.bf16 %v167
    %v190 = vunpack.c.l.s8.bf16 %v168
    %v191 = vunpack.c.l.s8.bf16 %v169
    %v192 = vunpack.c.h.s8.bf16 %v168
    %v193 = vunpack.c.h.s8.bf16 %v169
    %v194 = vunpack.c.l.s8.bf16 %v170
    %v195 = vunpack.c.l.s8.bf16 %v171
    %v196 = vunpack.c.h.s8.bf16 %v170
    %v197 = vunpack.c.h.s8.bf16 %v171
    %v198 = vunpack.c.l.s8.bf16 %v172
    %v199 = vunpack.c.l.s8.bf16 %v173
    %v200 = vunpack.c.h.s8.bf16 %v172
    %v201 = vunpack.c.h.s8.bf16 %v173
    %v202 = vunpack.c.l.s8.bf16 %v174
    %v203 = vunpack.c.l.s8.bf16 %v175
    %v204 = vunpack.c.h.s8.bf16 %v174
    %v205 = vunpack.c.h.s8.bf16 %v175
    %v206 = vunpack.c.l.s8.bf16 %v176
    %v207 = vunpack.c.l.s8.bf16 %v177
    %v208 = vunpack.c.h.s8.bf16 %v176
    %v209 = vunpack.c.h.s8.bf16 %v177
    %s210 = smul.u32 0, 256
    %s211 = sshra.s32 %s210, 3
    %s212 = sand.u32 %s210, 7
    %s213 = smul.addr %s211, 4
    %s214 = scalar_lea.vmem [#allocation9], %s213
    %v215 = vld [vmem:[%s214] sm:$0xf]
    %v216 = vld [vmem:[%s214 + $0x4] sm:$0xf]
    %v217 = vld [vmem:[%s214 + $0x8] sm:$0xf]
    %v218 = vld [vmem:[%s214 + $0xc] sm:$0xf]
    %v219 = vld [vmem:[%s214 + $0x10] sm:$0xf]
    %v220 = vld [vmem:[%s214 + $0x14] sm:$0xf]
    %v221 = vld [vmem:[%s214 + $0x18] sm:$0xf]
    %v222 = vld [vmem:[%s214 + $0x1c] sm:$0xf]
    %v223 = vld [vmem:[%s214 + $0x20] sm:$0xf]
    %v224 = vld [vmem:[%s214 + $0x24] sm:$0xf]
    %v225 = vld [vmem:[%s214 + $0x28] sm:$0xf]
    %v226 = vld [vmem:[%s214 + $0x2c] sm:$0xf]
    %v227 = vld [vmem:[%s214 + $0x30] sm:$0xf]
    %v228 = vld [vmem:[%s214 + $0x34] sm:$0xf]
    %v229 = vld [vmem:[%s214 + $0x38] sm:$0xf]
    %v230 = vld [vmem:[%s214 + $0x3c] sm:$0xf]
    %v231 = vld [vmem:[%s214 + $0x40] sm:$0xf]
    %v232 = vld [vmem:[%s214 + $0x44] sm:$0xf]
    %v233 = vld [vmem:[%s214 + $0x48] sm:$0xf]
    %v234 = vld [vmem:[%s214 + $0x4c] sm:$0xf]
    %v235 = vld [vmem:[%s214 + $0x50] sm:$0xf]
    %v236 = vld [vmem:[%s214 + $0x54] sm:$0xf]
    %v237 = vld [vmem:[%s214 + $0x58] sm:$0xf]
    %v238 = vld [vmem:[%s214 + $0x5c] sm:$0xf]
    %v239 = vld [vmem:[%s214 + $0x60] sm:$0xf]
    %v240 = vld [vmem:[%s214 + $0x64] sm:$0xf]
    %v241 = vld [vmem:[%s214 + $0x68] sm:$0xf]
    %v242 = vld [vmem:[%s214 + $0x6c] sm:$0xf]
    %v243 = vld [vmem:[%s214 + $0x70] sm:$0xf]
    %v244 = vld [vmem:[%s214 + $0x74] sm:$0xf]
    %v245 = vld [vmem:[%s214 + $0x78] sm:$0xf]
    %v246 = vld [vmem:[%s214 + $0x7c] sm:$0xf]
    %v247 = vld [vmem:[#allocation2] sm:$0xff]
    %v248 = vld [vmem:[#allocation2 + $0x8] sm:$0xff]
    %v249 = vld [vmem:[#allocation2 + $0x10] sm:$0xff]
    %v250 = vld [vmem:[#allocation2 + $0x18] sm:$0xff]
    %v251 = vld [vmem:[#allocation2 + $0x20] sm:$0xff]
    %v252 = vld [vmem:[#allocation2 + $0x28] sm:$0xff]
    %v253 = vld [vmem:[#allocation2 + $0x30] sm:$0xff]
    %v254 = vld [vmem:[#allocation2 + $0x38] sm:$0xff]
    %v255 = vld [vmem:[#allocation2 + $0x40] sm:$0xff]
    %v256 = vld [vmem:[#allocation2 + $0x48] sm:$0xff]
    %v257 = vld [vmem:[#allocation2 + $0x50] sm:$0xff]
    %v258 = vld [vmem:[#allocation2 + $0x58] sm:$0xff]
    %v259 = vld [vmem:[#allocation2 + $0x60] sm:$0xff]
    %v260 = vld [vmem:[#allocation2 + $0x68] sm:$0xff]
    %v261 = vld [vmem:[#allocation2 + $0x70] sm:$0xff]
    %v262 = vld [vmem:[#allocation2 + $0x78] sm:$0xff]
    %v263 = vld [vmem:[#allocation2 + $0x80] sm:$0xff]
    %v264 = vld [vmem:[#allocation2 + $0x88] sm:$0xff]
    %v265 = vld [vmem:[#allocation2 + $0x90] sm:$0xff]
    %v266 = vld [vmem:[#allocation2 + $0x98] sm:$0xff]
    %v267 = vld [vmem:[#allocation2 + $0xa0] sm:$0xff]
    %v268 = vld [vmem:[#allocation2 + $0xa8] sm:$0xff]
    %v269 = vld [vmem:[#allocation2 + $0xb0] sm:$0xff]
    %v270 = vld [vmem:[#allocation2 + $0xb8] sm:$0xff]
    %v271 = vld [vmem:[#allocation2 + $0xc0] sm:$0xff]
    %v272 = vld [vmem:[#allocation2 + $0xc8] sm:$0xff]
    %v273 = vld [vmem:[#allocation2 + $0xd0] sm:$0xff]
    %v274 = vld [vmem:[#allocation2 + $0xd8] sm:$0xff]
    %v275 = vld [vmem:[#allocation2 + $0xe0] sm:$0xff]
    %v276 = vld [vmem:[#allocation2 + $0xe8] sm:$0xff]
    %v277 = vld [vmem:[#allocation2 + $0xf0] sm:$0xff]
    %v278 = vld [vmem:[#allocation2 + $0xf8] sm:$0xff]
    %v311 = vunpack.c.l.b16 %v215
    %v312 = vunpack.c.l.b16 %v216
    %v313 = vunpack.c.l.b16 %v217
    %v314 = vunpack.c.l.b16 %v218
    %v315 = vunpack.c.l.b16 %v219
    %v316 = vunpack.c.l.b16 %v220
    %v317 = vunpack.c.l.b16 %v221
    %v318 = vunpack.c.l.b16 %v222
    %v319 = vunpack.c.l.b16 %v223
    %v320 = vunpack.c.l.b16 %v224
    %v321 = vunpack.c.l.b16 %v225
    %v322 = vunpack.c.l.b16 %v226
    %v323 = vunpack.c.l.b16 %v227
    %v324 = vunpack.c.l.b16 %v228
    %v325 = vunpack.c.l.b16 %v229
    %v326 = vunpack.c.l.b16 %v230
    %v327 = vunpack.c.l.b16 %v231
    %v328 = vunpack.c.l.b16 %v232
    %v329 = vunpack.c.l.b16 %v233
    %v330 = vunpack.c.l.b16 %v234
    %v331 = vunpack.c.l.b16 %v235
    %v332 = vunpack.c.l.b16 %v236
    %v333 = vunpack.c.l.b16 %v237
    %v334 = vunpack.c.l.b16 %v238
    %v335 = vunpack.c.l.b16 %v239
    %v336 = vunpack.c.l.b16 %v240
    %v337 = vunpack.c.l.b16 %v241
    %v338 = vunpack.c.l.b16 %v242
    %v339 = vunpack.c.l.b16 %v243
    %v340 = vunpack.c.l.b16 %v244
    %v341 = vunpack.c.l.b16 %v245
    %v342 = vunpack.c.l.b16 %v246
    %v343 = vpack.c.b16 %v312, %v311
    %v344 = vpack.c.b16 %v314, %v313
    %v345 = vpack.c.b16 %v316, %v315
    %v346 = vpack.c.b16 %v318, %v317
    %v347 = vpack.c.b16 %v320, %v319
    %v348 = vpack.c.b16 %v322, %v321
    %v349 = vpack.c.b16 %v324, %v323
    %v350 = vpack.c.b16 %v326, %v325
    %v351 = vpack.c.b16 %v328, %v327
    %v352 = vpack.c.b16 %v330, %v329
    %v353 = vpack.c.b16 %v332, %v331
    %v354 = vpack.c.b16 %v334, %v333
    %v355 = vpack.c.b16 %v336, %v335
    %v356 = vpack.c.b16 %v338, %v337
    %v357 = vpack.c.b16 %v340, %v339
    %v358 = vpack.c.b16 %v342, %v341
    %375 = vmatprep.subr.bf16.mxu0 0
    %376 = vmatpush1.bf16.msra.mxu0 %v343
    %377 = vmatprep.subr.bf16.mxu0 0
    %378 = vmatpush1.bf16.msra.mxu0 %v344
    %379 = vmatprep.subr.bf16.mxu0 0
    %380 = vmatpush1.bf16.msra.mxu0 %v345
    %381 = vmatprep.subr.bf16.mxu0 0
    %382 = vmatpush1.bf16.msra.mxu0 %v346
    %383 = vmatprep.subr.bf16.mxu0 0
    %384 = vmatpush1.bf16.msra.mxu0 %v347
    %385 = vmatprep.subr.bf16.mxu0 0
    %386 = vmatpush1.bf16.msra.mxu0 %v348
    %387 = vmatprep.subr.bf16.mxu0 0
    %388 = vmatpush1.bf16.msra.mxu0 %v349
    %389 = vmatprep.subr.bf16.mxu0 0
    %390 = vmatpush1.bf16.msra.mxu0 %v350
    %391 = vmatprep.subr.bf16.mxu0 0
    %392 = vmatpush1.bf16.msra.mxu0 %v351
    %393 = vmatprep.subr.bf16.mxu0 0
    %394 = vmatpush1.bf16.msra.mxu0 %v352
    %395 = vmatprep.subr.bf16.mxu0 0
    %396 = vmatpush1.bf16.msra.mxu0 %v353
    %397 = vmatprep.subr.bf16.mxu0 0
    %398 = vmatpush1.bf16.msra.mxu0 %v354
    %399 = vmatprep.subr.bf16.mxu0 0
    %400 = vmatpush1.bf16.msra.mxu0 %v355
    %401 = vmatprep.subr.bf16.mxu0 0
    %402 = vmatpush1.bf16.msra.mxu0 %v356
    %403 = vmatprep.subr.bf16.mxu0 0
    %404 = vmatpush1.bf16.msra.mxu0 %v357
    %405 = vmatprep.subr.bf16.mxu0 0
    %406 = vmatpush1.bf16.msra.mxu0 %v358
    %407 = vmatprep.mubr.bf16.mxu0 %v179
    %408 = vmatmul.mubr.bf16.gmra.mrb[0].mxu0 %v178
    %v409 = vpop.f32.mrb[0].mxu0
    %v410 = vadd.f32 0.0, %v409
    %v411 = vpop.f32.mrb[0].mxu0
    %v412 = vpop.f32.mrb[0].mxu0
    %v413 = vadd.f32 0.0, %v412
    %v414 = vpop.f32.mrb[0].mxu0
    %415 = vmatprep.mubr.bf16.mxu0 %v181
    %416 = vmatmul.mubr.bf16.gmra.mrb[0].mxu0 %v180
    %v417 = vpop.f32.mrb[0].mxu0
    %v418 = vadd.f32 0.0, %v417
    %v419 = vpop.f32.mrb[0].mxu0
    %v420 = vpop.f32.mrb[0].mxu0
    %v421 = vadd.f32 0.0, %v420
    %v422 = vpop.f32.mrb[0].mxu0
    %423 = vmatprep.mubr.bf16.mxu0 %v183
    %424 = vmatmul.mubr.bf16.gmra.mrb[0].mxu0 %v182
    %v425 = vpop.f32.mrb[0].mxu0
    %v426 = vadd.f32 0.0, %v425
    %v427 = vpop.f32.mrb[0].mxu0
    %v428 = vpop.f32.mrb[0].mxu0
    %v429 = vadd.f32 0.0, %v428
    %v430 = vpop.f32.mrb[0].mxu0
    %431 = vmatprep.mubr.bf16.mxu0 %v185
    %432 = vmatmul.mubr.bf16.gmra.mrb[0].mxu0 %v184
    %v433 = vpop.f32.mrb[0].mxu0
    %v434 = vadd.f32 0.0, %v433
    %v435 = vpop.f32.mrb[0].mxu0
    %v436 = vpop.f32.mrb[0].mxu0
    %v437 = vadd.f32 0.0, %v436
    %v438 = vpop.f32.mrb[0].mxu0
    %439 = vmatprep.mubr.bf16.mxu0 %v187
    %440 = vmatmul.mubr.bf16.gmra.mrb[0].mxu0 %v186
    %v441 = vpop.f32.mrb[0].mxu0
    %v442 = vadd.f32 0.0, %v441
    %v443 = vpop.f32.mrb[0].mxu0
    %v444 = vpop.f32.mrb[0].mxu0
    %v445 = vadd.f32 0.0, %v444
    %v446 = vpop.f32.mrb[0].mxu0
    %447 = vmatprep.mubr.bf16.mxu0 %v189
    %448 = vmatmul.mubr.bf16.gmra.mrb[0].mxu0 %v188
    %v449 = vpop.f32.mrb[0].mxu0
    %v450 = vadd.f32 0.0, %v449
    %v451 = vpop.f32.mrb[0].mxu0
    %v452 = vpop.f32.mrb[0].mxu0
    %v453 = vadd.f32 0.0, %v452
    %v454 = vpop.f32.mrb[0].mxu0
    %455 = vmatprep.mubr.bf16.mxu0 %v191
    %456 = vmatmul.mubr.bf16.gmra.mrb[0].mxu0 %v190
    %v457 = vpop.f32.mrb[0].mxu0
    %v458 = vadd.f32 0.0, %v457
    %v459 = vpop.f32.mrb[0].mxu0
    %v460 = vpop.f32.mrb[0].mxu0
    %v461 = vadd.f32 0.0, %v460
    %v462 = vpop.f32.mrb[0].mxu0
    %463 = vmatprep.mubr.bf16.mxu0 %v193
    %464 = vmatmul.mubr.bf16.gmra.mrb[0].mxu0 %v192
    %v465 = vpop.f32.mrb[0].mxu0
    %v466 = vadd.f32 0.0, %v465
    %v467 = vpop.f32.mrb[0].mxu0
    %v468 = vpop.f32.mrb[0].mxu0
    %v469 = vadd.f32 0.0, %v468
    %v470 = vpop.f32.mrb[0].mxu0
    %471 = vmatprep.mubr.bf16.mxu0 %v195
    %472 = vmatmul.mubr.bf16.gmra.mrb[0].mxu0 %v194
    %v473 = vpop.f32.mrb[0].mxu0
    %v474 = vadd.f32 0.0, %v473
    %v475 = vpop.f32.mrb[0].mxu0
    %v476 = vpop.f32.mrb[0].mxu0
    %v477 = vadd.f32 0.0, %v476
    %v478 = vpop.f32.mrb[0].mxu0
    %479 = vmatprep.mubr.bf16.mxu0 %v197
    %480 = vmatmul.mubr.bf16.gmra.mrb[0].mxu0 %v196
    %v481 = vpop.f32.mrb[0].mxu0
    %v482 = vadd.f32 0.0, %v481
    %v483 = vpop.f32.mrb[0].mxu0
    %v484 = vpop.f32.mrb[0].mxu0
    %v485 = vadd.f32 0.0, %v484
    %v486 = vpop.f32.mrb[0].mxu0
    %487 = vmatprep.mubr.bf16.mxu0 %v199
    %488 = vmatmul.mubr.bf16.gmra.mrb[0].mxu0 %v198
    %v489 = vpop.f32.mrb[0].mxu0
    %v490 = vadd.f32 0.0, %v489
    %v491 = vpop.f32.mrb[0].mxu0
    %v492 = vpop.f32.mrb[0].mxu0
    %v493 = vadd.f32 0.0, %v492
    %v494 = vpop.f32.mrb[0].mxu0
    %495 = vmatprep.mubr.bf16.mxu0 %v201
    %496 = vmatmul.mubr.bf16.gmra.mrb[0].mxu0 %v200
    %v497 = vpop.f32.mrb[0].mxu0
    %v498 = vadd.f32 0.0, %v497
    %v499 = vpop.f32.mrb[0].mxu0
    %v500 = vpop.f32.mrb[0].mxu0
    %v501 = vadd.f32 0.0, %v500
    %v502 = vpop.f32.mrb[0].mxu0
    %503 = vmatprep.mubr.bf16.mxu0 %v203
    %504 = vmatmul.mubr.bf16.gmra.mrb[0].mxu0 %v202
    %v505 = vpop.f32.mrb[0].mxu0
    %v506 = vadd.f32 0.0, %v505
    %v507 = vpop.f32.mrb[0].mxu0
    %v508 = vpop.f32.mrb[0].mxu0
    %v509 = vadd.f32 0.0, %v508
    %v510 = vpop.f32.mrb[0].mxu0
    %511 = vmatprep.mubr.bf16.mxu0 %v205
    %512 = vmatmul.mubr.bf16.gmra.mrb[0].mxu0 %v204
    %v513 = vpop.f32.mrb[0].mxu0
    %v514 = vadd.f32 0.0, %v513
    %v515 = vpop.f32.mrb[0].mxu0
    %v516 = vpop.f32.mrb[0].mxu0
    %v517 = vadd.f32 0.0, %v516
    %v518 = vpop.f32.mrb[0].mxu0
    %519 = vmatprep.mubr.bf16.mxu0 %v207
    %520 = vmatmul.mubr.bf16.gmra.mrb[0].mxu0 %v206
    %v521 = vpop.f32.mrb[0].mxu0
    %v522 = vadd.f32 0.0, %v521
    %v523 = vpop.f32.mrb[0].mxu0
    %v524 = vpop.f32.mrb[0].mxu0
    %v525 = vadd.f32 0.0, %v524
    %v526 = vpop.f32.mrb[0].mxu0
    %527 = vmatprep.mubr.bf16.mxu0 %v209
    %528 = vmatmul.mubr.bf16.gmra.mrb[0].mxu0 %v208
    %v529 = vpop.f32.mrb[0].mxu0
    %v530 = vadd.f32 0.0, %v529
    %v531 = vpop.f32.mrb[0].mxu0
    %v532 = vpop.f32.mrb[0].mxu0
    %v533 = vadd.f32 0.0, %v532
    %v534 = vpop.f32.mrb[0].mxu0
    %535 = vdwg.mxu0
    %v536 = vadd.f32 %v247, %v410
    %v537 = vadd.f32 %v248, %v413
    %v538 = vadd.f32 %v249, %v418
    %v539 = vadd.f32 %v250, %v421
    %v540 = vadd.f32 %v251, %v426
    %v541 = vadd.f32 %v252, %v429
    %v542 = vadd.f32 %v253, %v434
    %v543 = vadd.f32 %v254, %v437
    %v544 = vadd.f32 %v255, %v442
    %v545 = vadd.f32 %v256, %v445
    %v546 = vadd.f32 %v257, %v450
    %v547 = vadd.f32 %v258, %v453
    %v548 = vadd.f32 %v259, %v458
    %v549 = vadd.f32 %v260, %v461
    %v550 = vadd.f32 %v261, %v466
    %v551 = vadd.f32 %v262, %v469
    %v552 = vadd.f32 %v263, %v474
    %v553 = vadd.f32 %v264, %v477
    %v554 = vadd.f32 %v265, %v482
    %v555 = vadd.f32 %v266, %v485
    %v556 = vadd.f32 %v267, %v490
    %v557 = vadd.f32 %v268, %v493
    %v558 = vadd.f32 %v269, %v498
    %v559 = vadd.f32 %v270, %v501
    %v560 = vadd.f32 %v271, %v506
    %v561 = vadd.f32 %v272, %v509
    %v562 = vadd.f32 %v273, %v514
    %v563 = vadd.f32 %v274, %v517
    %v564 = vadd.f32 %v275, %v522
    %v565 = vadd.f32 %v276, %v525
    %v566 = vadd.f32 %v277, %v530
    %v567 = vadd.f32 %v278, %v533
    %568 = vst [vmem:[#allocation2] sm:$0xff] %v536
    %569 = vst [vmem:[#allocation2 + $0x8] sm:$0xff] %v537
    %570 = vst [vmem:[#allocation2 + $0x10] sm:$0xff] %v538
    %571 = vst [vmem:[#allocation2 + $0x18] sm:$0xff] %v539
    %572 = vst [vmem:[#allocation2 + $0x20] sm:$0xff] %v540
    %573 = vst [vmem:[#allocation2 + $0x28] sm:$0xff] %v541
    %574 = vst [vmem:[#allocation2 + $0x30] sm:$0xff] %v542
    %575 = vst [vmem:[#allocation2 + $0x38] sm:$0xff] %v543
    %576 = vst [vmem:[#allocation2 + $0x40] sm:$0xff] %v544
    %577 = vst [vmem:[#allocation2 + $0x48] sm:$0xff] %v545
    %578 = vst [vmem:[#allocation2 + $0x50] sm:$0xff] %v546
    %579 = vst [vmem:[#allocation2 + $0x58] sm:$0xff] %v547
    %580 = vst [vmem:[#allocation2 + $0x60] sm:$0xff] %v548
    %581 = vst [vmem:[#allocation2 + $0x68] sm:$0xff] %v549
    %582 = vst [vmem:[#allocation2 + $0x70] sm:$0xff] %v550
    %583 = vst [vmem:[#allocation2 + $0x78] sm:$0xff] %v551
    %584 = vst [vmem:[#allocation2 + $0x80] sm:$0xff] %v552
    %585 = vst [vmem:[#allocation2 + $0x88] sm:$0xff] %v553
    %586 = vst [vmem:[#allocation2 + $0x90] sm:$0xff] %v554
    %587 = vst [vmem:[#allocation2 + $0x98] sm:$0xff] %v555
    %588 = vst [vmem:[#allocation2 + $0xa0] sm:$0xff] %v556
    %589 = vst [vmem:[#allocation2 + $0xa8] sm:$0xff] %v557
    %590 = vst [vmem:[#allocation2 + $0xb0] sm:$0xff] %v558
    %591 = vst [vmem:[#allocation2 + $0xb8] sm:$0xff] %v559
    %592 = vst [vmem:[#allocation2 + $0xc0] sm:$0xff] %v560
    %593 = vst [vmem:[#allocation2 + $0xc8] sm:$0xff] %v561
    %594 = vst [vmem:[#allocation2 + $0xd0] sm:$0xff] %v562
    %595 = vst [vmem:[#allocation2 + $0xd8] sm:$0xff] %v563
    %596 = vst [vmem:[#allocation2 + $0xe0] sm:$0xff] %v564
    %597 = vst [vmem:[#allocation2 + $0xe8] sm:$0xff] %v565
    %598 = vst [vmem:[#allocation2 + $0xf0] sm:$0xff] %v566
    %599 = vst [vmem:[#allocation2 + $0xf8] sm:$0xff] %v567
    %v600 = vld [vmem:[#allocation3] sm:$0xff]
    %v601 = vld [vmem:[#allocation3 + $0x8] sm:$0xff]
    %v602 = vld [vmem:[#allocation3 + $0x10] sm:$0xff]
    %v603 = vld [vmem:[#allocation3 + $0x18] sm:$0xff]
    %v604 = vld [vmem:[#allocation3 + $0x20] sm:$0xff]
    %v605 = vld [vmem:[#allocation3 + $0x28] sm:$0xff]
    %v606 = vld [vmem:[#allocation3 + $0x30] sm:$0xff]
    %v607 = vld [vmem:[#allocation3 + $0x38] sm:$0xff]
    %v608 = vld [vmem:[#allocation3 + $0x40] sm:$0xff]
    %v609 = vld [vmem:[#allocation3 + $0x48] sm:$0xff]
    %v610 = vld [vmem:[#allocation3 + $0x50] sm:$0xff]
    %v611 = vld [vmem:[#allocation3 + $0x58] sm:$0xff]
    %v612 = vld [vmem:[#allocation3 + $0x60] sm:$0xff]
    %v613 = vld [vmem:[#allocation3 + $0x68] sm:$0xff]
    %v614 = vld [vmem:[#allocation3 + $0x70] sm:$0xff]
    %v615 = vld [vmem:[#allocation3 + $0x78] sm:$0xff]
    %v616 = vld [vmem:[#allocation3 + $0x80] sm:$0xff]
    %v617 = vld [vmem:[#allocation3 + $0x88] sm:$0xff]
    %v618 = vld [vmem:[#allocation3 + $0x90] sm:$0xff]
    %v619 = vld [vmem:[#allocation3 + $0x98] sm:$0xff]
    %v620 = vld [vmem:[#allocation3 + $0xa0] sm:$0xff]
    %v621 = vld [vmem:[#allocation3 + $0xa8] sm:$0xff]
    %v622 = vld [vmem:[#allocation3 + $0xb0] sm:$0xff]
    %v623 = vld [vmem:[#allocation3 + $0xb8] sm:$0xff]
    %v624 = vld [vmem:[#allocation3 + $0xc0] sm:$0xff]
    %v625 = vld [vmem:[#allocation3 + $0xc8] sm:$0xff]
    %v626 = vld [vmem:[#allocation3 + $0xd0] sm:$0xff]
    %v627 = vld [vmem:[#allocation3 + $0xd8] sm:$0xff]
    %v628 = vld [vmem:[#allocation3 + $0xe0] sm:$0xff]
    %v629 = vld [vmem:[#allocation3 + $0xe8] sm:$0xff]
    %v630 = vld [vmem:[#allocation3 + $0xf0] sm:$0xff]
    %v631 = vld [vmem:[#allocation3 + $0xf8] sm:$0xff]
    %v632 = vld [vmem:[#allocation7] sm:$0xff]
    %v633 = vld [vmem:[#allocation7 + $0x8] sm:$0xff]
    %v634 = vld [vmem:[#allocation7 + $0x10] sm:$0xff]
    %v635 = vld [vmem:[#allocation7 + $0x18] sm:$0xff]
    %v636 = vld [vmem:[#allocation7 + $0x20] sm:$0xff]
    %v637 = vld [vmem:[#allocation7 + $0x28] sm:$0xff]
    %v638 = vld [vmem:[#allocation7 + $0x30] sm:$0xff]
    %v639 = vld [vmem:[#allocation7 + $0x38] sm:$0xff]
    %v640 = vld [vmem:[#allocation7 + $0x40] sm:$0xff]
    %v641 = vld [vmem:[#allocation7 + $0x48] sm:$0xff]
    %v642 = vld [vmem:[#allocation7 + $0x50] sm:$0xff]
    %v643 = vld [vmem:[#allocation7 + $0x58] sm:$0xff]
    %v644 = vld [vmem:[#allocation7 + $0x60] sm:$0xff]
    %v645 = vld [vmem:[#allocation7 + $0x68] sm:$0xff]
    %v646 = vld [vmem:[#allocation7 + $0x70] sm:$0xff]
    %v647 = vld [vmem:[#allocation7 + $0x78] sm:$0xff]
    %v648 = vunpack.c.0.s8 %v632
    %v649 = vunpack.c.0.s8 %v633
    %v650 = vunpack.c.1.s8 %v632
    %v651 = vunpack.c.1.s8 %v633
    %v652 = vunpack.c.2.s8 %v632
    %v653 = vunpack.c.2.s8 %v633
    %v654 = vunpack.c.3.s8 %v632
    %v655 = vunpack.c.3.s8 %v633
    %v656 = vunpack.c.0.s8 %v634
    %v657 = vunpack.c.0.s8 %v635
    %v658 = vunpack.c.1.s8 %v634
    %v659 = vunpack.c.1.s8 %v635
    %v660 = vunpack.c.2.s8 %v634
    %v661 = vunpack.c.2.s8 %v635
    %v662 = vunpack.c.3.s8 %v634
    %v663 = vunpack.c.3.s8 %v635
    %v664 = vunpack.c.0.s8 %v636
    %v665 = vunpack.c.0.s8 %v637
    %v666 = vunpack.c.1.s8 %v636
    %v667 = vunpack.c.1.s8 %v637
    %v668 = vunpack.c.2.s8 %v636
    %v669 = vunpack.c.2.s8 %v637
    %v670 = vunpack.c.3.s8 %v636
    %v671 = vunpack.c.3.s8 %v637
    %v672 = vunpack.c.0.s8 %v638
    %v673 = vunpack.c.0.s8 %v639
    %v674 = vunpack.c.1.s8 %v638
    %v675 = vunpack.c.1.s8 %v639
    %v676 = vunpack.c.2.s8 %v638
    %v677 = vunpack.c.2.s8 %v639
    %v678 = vunpack.c.3.s8 %v638
    %v679 = vunpack.c.3.s8 %v639
    %v680 = vunpack.c.0.s8 %v640
    %v681 = vunpack.c.0.s8 %v641
    %v682 = vunpack.c.1.s8 %v640
    %v683 = vunpack.c.1.s8 %v641
    %v684 = vunpack.c.2.s8 %v640
    %v685 = vunpack.c.2.s8 %v641
    %v686 = vunpack.c.3.s8 %v640
    %v687 = vunpack.c.3.s8 %v641
    %v688 = vunpack.c.0.s8 %v642
    %v689 = vunpack.c.0.s8 %v643
    %v690 = vunpack.c.1.s8 %v642
    %v691 = vunpack.c.1.s8 %v643
    %v692 = vunpack.c.2.s8 %v642
    %v693 = vunpack.c.2.s8 %v643
    %v694 = vunpack.c.3.s8 %v642
    %v695 = vunpack.c.3.s8 %v643
    %v696 = vunpack.c.0.s8 %v644
    %v697 = vunpack.c.0.s8 %v645
    %v698 = vunpack.c.1.s8 %v644
    %v699 = vunpack.c.1.s8 %v645
    %v700 = vunpack.c.2.s8 %v644
    %v701 = vunpack.c.2.s8 %v645
    %v702 = vunpack.c.3.s8 %v644
    %v703 = vunpack.c.3.s8 %v645
    %v704 = vunpack.c.0.s8 %v646
    %v705 = vunpack.c.0.s8 %v647
    %v706 = vunpack.c.1.s8 %v646
    %v707 = vunpack.c.1.s8 %v647
    %v708 = vunpack.c.2.s8 %v646
    %v709 = vunpack.c.2.s8 %v647
    %v710 = vunpack.c.3.s8 %v646
    %v711 = vunpack.c.3.s8 %v647
    %v712 = vcvt.s32.f32 %v648
    %v713 = vcvt.s32.f32 %v649
    %v714 = vcvt.s32.f32 %v650
    %v715 = vcvt.s32.f32 %v651
    %v716 = vcvt.s32.f32 %v652
    %v717 = vcvt.s32.f32 %v653
    %v718 = vcvt.s32.f32 %v654
    %v719 = vcvt.s32.f32 %v655
    %v720 = vcvt.s32.f32 %v656
    %v721 = vcvt.s32.f32 %v657
    %v722 = vcvt.s32.f32 %v658
    %v723 = vcvt.s32.f32 %v659
    %v724 = vcvt.s32.f32 %v660
    %v725 = vcvt.s32.f32 %v661
    %v726 = vcvt.s32.f32 %v662
    %v727 = vcvt.s32.f32 %v663
    %v728 = vcvt.s32.f32 %v664
    %v729 = vcvt.s32.f32 %v665
    %v730 = vcvt.s32.f32 %v666
    %v731 = vcvt.s32.f32 %v667
    %v732 = vcvt.s32.f32 %v668
    %v733 = vcvt.s32.f32 %v669
    %v734 = vcvt.s32.f32 %v670
    %v735 = vcvt.s32.f32 %v671
    %v736 = vcvt.s32.f32 %v672
    %v737 = vcvt.s32.f32 %v673
    %v738 = vcvt.s32.f32 %v674
    %v739 = vcvt.s32.f32 %v675
    %v740 = vcvt.s32.f32 %v676
    %v741 = vcvt.s32.f32 %v677
    %v742 = vcvt.s32.f32 %v678
    %v743 = vcvt.s32.f32 %v679
    %v744 = vcvt.s32.f32 %v680
    %v745 = vcvt.s32.f32 %v681
    %v746 = vcvt.s32.f32 %v682
    %v747 = vcvt.s32.f32 %v683
    %v748 = vcvt.s32.f32 %v684
    %v749 = vcvt.s32.f32 %v685
    %v750 = vcvt.s32.f32 %v686
    %v751 = vcvt.s32.f32 %v687
    %v752 = vcvt.s32.f32 %v688
    %v753 = vcvt.s32.f32 %v689
    %v754 = vcvt.s32.f32 %v690
    %v755 = vcvt.s32.f32 %v691
    %v756 = vcvt.s32.f32 %v692
    %v757 = vcvt.s32.f32 %v693
    %v758 = vcvt.s32.f32 %v694
    %v759 = vcvt.s32.f32 %v695
    %v760 = vcvt.s32.f32 %v696
    %v761 = vcvt.s32.f32 %v697
    %v762 = vcvt.s32.f32 %v698
    %v763 = vcvt.s32.f32 %v699
    %v764 = vcvt.s32.f32 %v700
    %v765 = vcvt.s32.f32 %v701
    %v766 = vcvt.s32.f32 %v702
    %v767 = vcvt.s32.f32 %v703
    %v768 = vcvt.s32.f32 %v704
    %v769 = vcvt.s32.f32 %v705
    %v770 = vcvt.s32.f32 %v706
    %v771 = vcvt.s32.f32 %v707
    %v772 = vcvt.s32.f32 %v708
    %v773 = vcvt.s32.f32 %v709
    %v774 = vcvt.s32.f32 %v710
    %v775 = vcvt.s32.f32 %v711
    %v776 = vadd.f32 %v712, %v713
    %777 = vadd.xlane.f32.xlu0 %v776
    %v778 = vpop.xlane.xlu0 %777
    %v779 = vadd.f32 %v714, %v715
    %780 = vadd.xlane.f32.xlu0 %v779
    %v781 = vpop.xlane.xlu0 %780
    %v782 = vadd.f32 %v716, %v717
    %783 = vadd.xlane.f32.xlu0 %v782
    %v784 = vpop.xlane.xlu0 %783
    %v785 = vadd.f32 %v718, %v719
    %786 = vadd.xlane.f32.xlu0 %v785
    %v787 = vpop.xlane.xlu0 %786
    %v788 = vadd.f32 %v720, %v721
    %789 = vadd.xlane.f32.xlu0 %v788
    %v790 = vpop.xlane.xlu0 %789
    %v791 = vadd.f32 %v722, %v723
    %792 = vadd.xlane.f32.xlu0 %v791
    %v793 = vpop.xlane.xlu0 %792
    %v794 = vadd.f32 %v724, %v725
    %795 = vadd.xlane.f32.xlu0 %v794
    %v796 = vpop.xlane.xlu0 %795
    %v797 = vadd.f32 %v726, %v727
    %798 = vadd.xlane.f32.xlu0 %v797
    %v799 = vpop.xlane.xlu0 %798
    %v800 = vadd.f32 %v728, %v729
    %801 = vadd.xlane.f32.xlu0 %v800
    %v802 = vpop.xlane.xlu0 %801
    %v803 = vadd.f32 %v730, %v731
    %804 = vadd.xlane.f32.xlu0 %v803
    %v805 = vpop.xlane.xlu0 %804
    %v806 = vadd.f32 %v732, %v733
    %807 = vadd.xlane.f32.xlu0 %v806
    %v808 = vpop.xlane.xlu0 %807
    %v809 = vadd.f32 %v734, %v735
    %810 = vadd.xlane.f32.xlu0 %v809
    %v811 = vpop.xlane.xlu0 %810
    %v812 = vadd.f32 %v736, %v737
    %813 = vadd.xlane.f32.xlu0 %v812
    %v814 = vpop.xlane.xlu0 %813
    %v815 = vadd.f32 %v738, %v739
    %816 = vadd.xlane.f32.xlu0 %v815
    %v817 = vpop.xlane.xlu0 %816
    %v818 = vadd.f32 %v740, %v741
    %819 = vadd.xlane.f32.xlu0 %v818
    %v820 = vpop.xlane.xlu0 %819
    %v821 = vadd.f32 %v742, %v743
    %822 = vadd.xlane.f32.xlu0 %v821
    %v823 = vpop.xlane.xlu0 %822
    %v824 = vadd.f32 %v744, %v745
    %825 = vadd.xlane.f32.xlu0 %v824
    %v826 = vpop.xlane.xlu0 %825
    %v827 = vadd.f32 %v746, %v747
    %828 = vadd.xlane.f32.xlu0 %v827
    %v829 = vpop.xlane.xlu0 %828
    %v830 = vadd.f32 %v748, %v749
    %831 = vadd.xlane.f32.xlu0 %v830
    %v832 = vpop.xlane.xlu0 %831
    %v833 = vadd.f32 %v750, %v751
    %834 = vadd.xlane.f32.xlu0 %v833
    %v835 = vpop.xlane.xlu0 %834
    %v836 = vadd.f32 %v752, %v753
    %837 = vadd.xlane.f32.xlu0 %v836
    %v838 = vpop.xlane.xlu0 %837
    %v839 = vadd.f32 %v754, %v755
    %840 = vadd.xlane.f32.xlu0 %v839
    %v841 = vpop.xlane.xlu0 %840
    %v842 = vadd.f32 %v756, %v757
    %843 = vadd.xlane.f32.xlu0 %v842
    %v844 = vpop.xlane.xlu0 %843
    %v845 = vadd.f32 %v758, %v759
    %846 = vadd.xlane.f32.xlu0 %v845
    %v847 = vpop.xlane.xlu0 %846
    %v848 = vadd.f32 %v760, %v761
    %849 = vadd.xlane.f32.xlu0 %v848
    %v850 = vpop.xlane.xlu0 %849
    %v851 = vadd.f32 %v762, %v763
    %852 = vadd.xlane.f32.xlu0 %v851
    %v853 = vpop.xlane.xlu0 %852
    %v854 = vadd.f32 %v764, %v765
    %855 = vadd.xlane.f32.xlu0 %v854
    %v856 = vpop.xlane.xlu0 %855
    %v857 = vadd.f32 %v766, %v767
    %858 = vadd.xlane.f32.xlu0 %v857
    %v859 = vpop.xlane.xlu0 %858
    %v860 = vadd.f32 %v768, %v769
    %861 = vadd.xlane.f32.xlu0 %v860
    %v862 = vpop.xlane.xlu0 %861
    %v863 = vadd.f32 %v770, %v771
    %864 = vadd.xlane.f32.xlu0 %v863
    %v865 = vpop.xlane.xlu0 %864
    %v866 = vadd.f32 %v772, %v773
    %867 = vadd.xlane.f32.xlu0 %v866
    %v868 = vpop.xlane.xlu0 %867
    %v869 = vadd.f32 %v774, %v775
    %870 = vadd.xlane.f32.xlu0 %v869
    %v871 = vpop.xlane.xlu0 %870
    %v872 = vadd.f32 %v600, %v778
    %v873 = vadd.f32 %v601, %v781
    %v874 = vadd.f32 %v602, %v784
    %v875 = vadd.f32 %v603, %v787
    %v876 = vadd.f32 %v604, %v790
    %v877 = vadd.f32 %v605, %v793
    %v878 = vadd.f32 %v606, %v796
    %v879 = vadd.f32 %v607, %v799
    %v880 = vadd.f32 %v608, %v802
    %v881 = vadd.f32 %v609, %v805
    %v882 = vadd.f32 %v610, %v808
    %v883 = vadd.f32 %v611, %v811
    %v884 = vadd.f32 %v612, %v814
    %v885 = vadd.f32 %v613, %v817
    %v886 = vadd.f32 %v614, %v820
    %v887 = vadd.f32 %v615, %v823
    %v888 = vadd.f32 %v616, %v826
    %v889 = vadd.f32 %v617, %v829
    %v890 = vadd.f32 %v618, %v832
    %v891 = vadd.f32 %v619, %v835
    %v892 = vadd.f32 %v620, %v838
    %v893 = vadd.f32 %v621, %v841
    %v894 = vadd.f32 %v622, %v844
    %v895 = vadd.f32 %v623, %v847
    %v896 = vadd.f32 %v624, %v850
    %v897 = vadd.f32 %v625, %v853
    %v898 = vadd.f32 %v626, %v856
    %v899 = vadd.f32 %v627, %v859
    %v900 = vadd.f32 %v628, %v862
    %v901 = vadd.f32 %v629, %v865
    %v902 = vadd.f32 %v630, %v868
    %v903 = vadd.f32 %v631, %v871
    %vm904 = vcmask 7168
    %905 = vst.msk [vmem:[#allocation3] sm:$0xff] %vm904, %v872
    %906 = vst.msk [vmem:[#allocation3 + $0x8] sm:$0xff] %vm904, %v873
    %907 = vst.msk [vmem:[#allocation3 + $0x10] sm:$0xff] %vm904, %v874
    %908 = vst.msk [vmem:[#allocation3 + $0x18] sm:$0xff] %vm904, %v875
    %909 = vst.msk [vmem:[#allocation3 + $0x20] sm:$0xff] %vm904, %v876
    %910 = vst.msk [vmem:[#allocation3 + $0x28] sm:$0xff] %vm904, %v877
    %911 = vst.msk [vmem:[#allocation3 + $0x30] sm:$0xff] %vm904, %v878
    %912 = vst.msk [vmem:[#allocation3 + $0x38] sm:$0xff] %vm904, %v879
    %913 = vst.msk [vmem:[#allocation3 + $0x40] sm:$0xff] %vm904, %v880
    %914 = vst.msk [vmem:[#allocation3 + $0x48] sm:$0xff] %vm904, %v881
    %915 = vst.msk [vmem:[#allocation3 + $0x50] sm:$0xff] %vm904, %v882
    %916 = vst.msk [vmem:[#allocation3 + $0x58] sm:$0xff] %vm904, %v883
    %917 = vst.msk [vmem:[#allocation3 + $0x60] sm:$0xff] %vm904, %v884
    %918 = vst.msk [vmem:[#allocation3 + $0x68] sm:$0xff] %vm904, %v885
    %919 = vst.msk [vmem:[#allocation3 + $0x70] sm:$0xff] %vm904, %v886
    %920 = vst.msk [vmem:[#allocation3 + $0x78] sm:$0xff] %vm904, %v887
    %921 = vst.msk [vmem:[#allocation3 + $0x80] sm:$0xff] %vm904, %v888
    %922 = vst.msk [vmem:[#allocation3 + $0x88] sm:$0xff] %vm904, %v889
    %923 = vst.msk [vmem:[#allocation3 + $0x90] sm:$0xff] %vm904, %v890
    %924 = vst.msk [vmem:[#allocation3 + $0x98] sm:$0xff] %vm904, %v891
    %925 = vst.msk [vmem:[#allocation3 + $0xa0] sm:$0xff] %vm904, %v892
    %926 = vst.msk [vmem:[#allocation3 + $0xa8] sm:$0xff] %vm904, %v893
    %927 = vst.msk [vmem:[#allocation3 + $0xb0] sm:$0xff] %vm904, %v894
    %928 = vst.msk [vmem:[#allocation3 + $0xb8] sm:$0xff] %vm904, %v895
    %929 = vst.msk [vmem:[#allocation3 + $0xc0] sm:$0xff] %vm904, %v896
    %930 = vst.msk [vmem:[#allocation3 + $0xc8] sm:$0xff] %vm904, %v897
    %931 = vst.msk [vmem:[#allocation3 + $0xd0] sm:$0xff] %vm904, %v898
    %932 = vst.msk [vmem:[#allocation3 + $0xd8] sm:$0xff] %vm904, %v899
    %933 = vst.msk [vmem:[#allocation3 + $0xe0] sm:$0xff] %vm904, %v900
    %934 = vst.msk [vmem:[#allocation3 + $0xe8] sm:$0xff] %vm904, %v901
    %935 = vst.msk [vmem:[#allocation3 + $0xf0] sm:$0xff] %vm904, %v902
    %936 = vst.msk [vmem:[#allocation3 + $0xf8] sm:$0xff] %vm904, %v903
    // Predicated region
    $region46: #{graphsage_forward.2} parent=1 // pred_check
      %p937 = pneg %p93
    $region47: #{graphsage_forward.2} parent=1 // pred_check_branch
      %939 = sbr.rel (%p937) target = $region49
    $region48: #{graphsage_forward.2} parent=1 // pred_region
      %v940 = vld [vmem:[#allocation3] sm:$0xff]
      %v941 = vld [vmem:[#allocation3 + $0x8] sm:$0xff]
      %v942 = vld [vmem:[#allocation3 + $0x10] sm:$0xff]
      %v943 = vld [vmem:[#allocation3 + $0x18] sm:$0xff]
      %v944 = vld [vmem:[#allocation3 + $0x20] sm:$0xff]
      %v945 = vld [vmem:[#allocation3 + $0x28] sm:$0xff]
      %v946 = vld [vmem:[#allocation3 + $0x30] sm:$0xff]
      %v947 = vld [vmem:[#allocation3 + $0x38] sm:$0xff]
      %v948 = vld [vmem:[#allocation3 + $0x40] sm:$0xff]
      %v949 = vld [vmem:[#allocation3 + $0x48] sm:$0xff]
      %v950 = vld [vmem:[#allocation3 + $0x50] sm:$0xff]
      %v951 = vld [vmem:[#allocation3 + $0x58] sm:$0xff]
      %v952 = vld [vmem:[#allocation3 + $0x60] sm:$0xff]
      %v953 = vld [vmem:[#allocation3 + $0x68] sm:$0xff]
      %v954 = vld [vmem:[#allocation3 + $0x70] sm:$0xff]
      %v955 = vld [vmem:[#allocation3 + $0x78] sm:$0xff]
      %v956 = vld [vmem:[#allocation3 + $0x80] sm:$0xff]
      %v957 = vld [vmem:[#allocation3 + $0x88] sm:$0xff]
      %v958 = vld [vmem:[#allocation3 + $0x90] sm:$0xff]
      %v959 = vld [vmem:[#allocation3 + $0x98] sm:$0xff]
      %v960 = vld [vmem:[#allocation3 + $0xa0] sm:$0xff]
      %v961 = vld [vmem:[#allocation3 + $0xa8] sm:$0xff]
      %v962 = vld [vmem:[#allocation3 + $0xb0] sm:$0xff]
      %v963 = vld [vmem:[#allocation3 + $0xb8] sm:$0xff]
      %v964 = vld [vmem:[#allocation3 + $0xc0] sm:$0xff]
      %v965 = vld [vmem:[#allocation3 + $0xc8] sm:$0xff]
      %v966 = vld [vmem:[#allocation3 + $0xd0] sm:$0xff]
      %v967 = vld [vmem:[#allocation3 + $0xd8] sm:$0xff]
      %v968 = vld [vmem:[#allocation3 + $0xe0] sm:$0xff]
      %v969 = vld [vmem:[#allocation3 + $0xe8] sm:$0xff]
      %v970 = vld [vmem:[#allocation3 + $0xf0] sm:$0xff]
      %v971 = vld [vmem:[#allocation3 + $0xf8] sm:$0xff]
      %v972 = vadd.f32 %v940, 1.0
      %v973 = vadd.f32 %v941, 1.0
      %v974 = vadd.f32 %v942, 1.0
      %v975 = vadd.f32 %v943, 1.0
      %v976 = vadd.f32 %v944, 1.0
      %v977 = vadd.f32 %v945, 1.0
      %v978 = vadd.f32 %v946, 1.0
      %v979 = vadd.f32 %v947, 1.0
      %v980 = vadd.f32 %v948, 1.0
      %v981 = vadd.f32 %v949, 1.0
      %v982 = vadd.f32 %v950, 1.0
      %v983 = vadd.f32 %v951, 1.0
      %v984 = vadd.f32 %v952, 1.0
      %v985 = vadd.f32 %v953, 1.0
      %v986 = vadd.f32 %v954, 1.0
      %v987 = vadd.f32 %v955, 1.0
      %v988 = vadd.f32 %v956, 1.0
      %v989 = vadd.f32 %v957, 1.0
      %v990 = vadd.f32 %v958, 1.0
      %v991 = vadd.f32 %v959, 1.0
      %v992 = vadd.f32 %v960, 1.0
      %v993 = vadd.f32 %v961, 1.0
      %v994 = vadd.f32 %v962, 1.0
      %v995 = vadd.f32 %v963, 1.0
      %v996 = vadd.f32 %v964, 1.0
      %v997 = vadd.f32 %v965, 1.0
      %v998 = vadd.f32 %v966, 1.0
      %v999 = vadd.f32 %v967, 1.0
      %v1000 = vadd.f32 %v968, 1.0
      %v1001 = vadd.f32 %v969, 1.0
      %v1002 = vadd.f32 %v970, 1.0
      %v1003 = vadd.f32 %v971, 1.0
      %v1004 = vrcp.pop %v972
      %v1005 = vmul.f32 1.0, %v1004
      %v1006 = vrcp.pop %v973
      %v1007 = vmul.f32 1.0, %v1006
      %v1008 = vrcp.pop %v974
      %v1009 = vmul.f32 1.0, %v1008
      %v1010 = vrcp.pop %v975
      %v1011 = vmul.f32 1.0, %v1010
      %v1012 = vrcp.pop %v976
      %v1013 = vmul.f32 1.0, %v1012
      %v1014 = vrcp.pop %v977
      %v1015 = vmul.f32 1.0, %v1014
      %v1016 = vrcp.pop %v978
      %v1017 = vmul.f32 1.0, %v1016
      %v1018 = vrcp.pop %v979
      %v1019 = vmul.f32 1.0, %v1018
      %v1020 = vrcp.pop %v980
      %v1021 = vmul.f32 1.0, %v1020
      %v1022 = vrcp.pop %v981
      %v1023 = vmul.f32 1.0, %v1022
      %v1024 = vrcp.pop %v982
      %v1025 = vmul.f32 1.0, %v1024
      %v1026 = vrcp.pop %v983
      %v1027 = vmul.f32 1.0, %v1026
      %v1028 = vrcp.pop %v984
      %v1029 = vmul.f32 1.0, %v1028
      %v1030 = vrcp.pop %v985
      %v1031 = vmul.f32 1.0, %v1030
      %v1032 = vrcp.pop %v986
      %v1033 = vmul.f32 1.0, %v1032
      %v1034 = vrcp.pop %v987
      %v1035 = vmul.f32 1.0, %v1034
      %v1036 = vrcp.pop %v988
      %v1037 = vmul.f32 1.0, %v1036
      %v1038 = vrcp.pop %v989
      %v1039 = vmul.f32 1.0, %v1038
      %v1040 = vrcp.pop %v990
      %v1041 = vmul.f32 1.0, %v1040
      %v1042 = vrcp.pop %v991
      %v1043 = vmul.f32 1.0, %v1042
      %v1044 = vrcp.pop %v992
      %v1045 = vmul.f32 1.0, %v1044
      %v1046 = vrcp.pop %v993
      %v1047 = vmul.f32 1.0, %v1046
      %v1048 = vrcp.pop %v994
      %v1049 = vmul.f32 1.0, %v1048
      %v1050 = vrcp.pop %v995
      %v1051 = vmul.f32 1.0, %v1050
      %v1052 = vrcp.pop %v996
      %v1053 = vmul.f32 1.0, %v1052
      %v1054 = vrcp.pop %v997
      %v1055 = vmul.f32 1.0, %v1054
      %v1056 = vrcp.pop %v998
      %v1057 = vmul.f32 1.0, %v1056
      %v1058 = vrcp.pop %v999
      %v1059 = vmul.f32 1.0, %v1058
      %v1060 = vrcp.pop %v1000
      %v1061 = vmul.f32 1.0, %v1060
      %v1062 = vrcp.pop %v1001
      %v1063 = vmul.f32 1.0, %v1062
      %v1064 = vrcp.pop %v1002
      %v1065 = vmul.f32 1.0, %v1064
      %v1066 = vrcp.pop %v1003
      %v1067 = vmul.f32 1.0, %v1066
      %1068 = vst.msk [vmem:[#allocation14] sm:$0xff] %vm904, %v1005
      %1069 = vst.msk [vmem:[#allocation14 + $0x8] sm:$0xff] %vm904, %v1007
      %1070 = vst.msk [vmem:[#allocation14 + $0x10] sm:$0xff] %vm904, %v1009
      %1071 = vst.msk [vmem:[#allocation14 + $0x18] sm:$0xff] %vm904, %v1011
      %1072 = vst.msk [vmem:[#allocation14 + $0x20] sm:$0xff] %vm904, %v1013
      %1073 = vst.msk [vmem:[#allocation14 + $0x28] sm:$0xff] %vm904, %v1015
      %1074 = vst.msk [vmem:[#allocation14 + $0x30] sm:$0xff] %vm904, %v1017
      %1075 = vst.msk [vmem:[#allocation14 + $0x38] sm:$0xff] %vm904, %v1019
      %1076 = vst.msk [vmem:[#allocation14 + $0x40] sm:$0xff] %vm904, %v1021
      %1077 = vst.msk [vmem:[#allocation14 + $0x48] sm:$0xff] %vm904, %v1023
      %1078 = vst.msk [vmem:[#allocation14 + $0x50] sm:$0xff] %vm904, %v1025
      %1079 = vst.msk [vmem:[#allocation14 + $0x58] sm:$0xff] %vm904, %v1027
      %1080 = vst.msk [vmem:[#allocation14 + $0x60] sm:$0xff] %vm904, %v1029
      %1081 = vst.msk [vmem:[#allocation14 + $0x68] sm:$0xff] %vm904, %v1031
      %1082 = vst.msk [vmem:[#allocation14 + $0x70] sm:$0xff] %vm904, %v1033
      %1083 = vst.msk [vmem:[#allocation14 + $0x78] sm:$0xff] %vm904, %v1035
      %1084 = vst.msk [vmem:[#allocation14 + $0x80] sm:$0xff] %vm904, %v1037
      %1085 = vst.msk [vmem:[#allocation14 + $0x88] sm:$0xff] %vm904, %v1039
      %1086 = vst.msk [vmem:[#allocation14 + $0x90] sm:$0xff] %vm904, %v1041
      %1087 = vst.msk [vmem:[#allocation14 + $0x98] sm:$0xff] %vm904, %v1043
      %1088 = vst.msk [vmem:[#allocation14 + $0xa0] sm:$0xff] %vm904, %v1045
      %1089 = vst.msk [vmem:[#allocation14 + $0xa8] sm:$0xff] %vm904, %v1047
      %1090 = vst.msk [vmem:[#allocation14 + $0xb0] sm:$0xff] %vm904, %v1049
      %1091 = vst.msk [vmem:[#allocation14 + $0xb8] sm:$0xff] %vm904, %v1051
      %1092 = vst.msk [vmem:[#allocation14 + $0xc0] sm:$0xff] %vm904, %v1053
      %1093 = vst.msk [vmem:[#allocation14 + $0xc8] sm:$0xff] %vm904, %v1055
      %1094 = vst.msk [vmem:[#allocation14 + $0xd0] sm:$0xff] %vm904, %v1057
      %1095 = vst.msk [vmem:[#allocation14 + $0xd8] sm:$0xff] %vm904, %v1059
      %1096 = vst.msk [vmem:[#allocation14 + $0xe0] sm:$0xff] %vm904, %v1061
      %1097 = vst.msk [vmem:[#allocation14 + $0xe8] sm:$0xff] %vm904, %v1063
      %1098 = vst.msk [vmem:[#allocation14 + $0xf0] sm:$0xff] %vm904, %v1065
      %1099 = vst.msk [vmem:[#allocation14 + $0xf8] sm:$0xff] %vm904, %v1067
      %v1100 = vld [vmem:[#allocation2] sm:$0xff]
      %v1101 = vld [vmem:[#allocation2 + $0x8] sm:$0xff]
      %v1102 = vld [vmem:[#allocation2 + $0x10] sm:$0xff]
      %v1103 = vld [vmem:[#allocation2 + $0x18] sm:$0xff]
      %v1104 = vld [vmem:[#allocation2 + $0x20] sm:$0xff]
      %v1105 = vld [vmem:[#allocation2 + $0x28] sm:$0xff]
      %v1106 = vld [vmem:[#allocation2 + $0x30] sm:$0xff]
      %v1107 = vld [vmem:[#allocation2 + $0x38] sm:$0xff]
      %v1108 = vld [vmem:[#allocation2 + $0x40] sm:$0xff]
      %v1109 = vld [vmem:[#allocation2 + $0x48] sm:$0xff]
      %v1110 = vld [vmem:[#allocation2 + $0x50] sm:$0xff]
      %v1111 = vld [vmem:[#allocation2 + $0x58] sm:$0xff]
      %v1112 = vld [vmem:[#allocation2 + $0x60] sm:$0xff]
      %v1113 = vld [vmem:[#allocation2 + $0x68] sm:$0xff]
      %v1114 = vld [vmem:[#allocation2 + $0x70] sm:$0xff]
      %v1115 = vld [vmem:[#allocation2 + $0x78] sm:$0xff]
      %v1116 = vld [vmem:[#allocation2 + $0x80] sm:$0xff]
      %v1117 = vld [vmem:[#allocation2 + $0x88] sm:$0xff]
      %v1118 = vld [vmem:[#allocation2 + $0x90] sm:$0xff]
      %v1119 = vld [vmem:[#allocation2 + $0x98] sm:$0xff]
      %v1120 = vld [vmem:[#allocation2 + $0xa0] sm:$0xff]
      %v1121 = vld [vmem:[#allocation2 + $0xa8] sm:$0xff]
      %v1122 = vld [vmem:[#allocation2 + $0xb0] sm:$0xff]
      %v1123 = vld [vmem:[#allocation2 + $0xb8] sm:$0xff]
      %v1124 = vld [vmem:[#allocation2 + $0xc0] sm:$0xff]
      %v1125 = vld [vmem:[#allocation2 + $0xc8] sm:$0xff]
      %v1126 = vld [vmem:[#allocation2 + $0xd0] sm:$0xff]
      %v1127 = vld [vmem:[#allocation2 + $0xd8] sm:$0xff]
      %v1128 = vld [vmem:[#allocation2 + $0xe0] sm:$0xff]
      %v1129 = vld [vmem:[#allocation2 + $0xe8] sm:$0xff]
      %v1130 = vld [vmem:[#allocation2 + $0xf0] sm:$0xff]
      %v1131 = vld [vmem:[#allocation2 + $0xf8] sm:$0xff]
      %1133 = vset.pattern.permute.xlu0 0
      %1134 = vperm.xlu0 %1133, %v1005
      %v1135 = vpop.permute.xlu0 %1134
      %1138 = vset.pattern.permute.xlu0 0
      %1139 = vperm.xlu0 %1138, %v1007
      %v1140 = vpop.permute.xlu0 %1139
      %1143 = vset.pattern.permute.xlu0 0
      %1144 = vperm.xlu0 %1143, %v1009
      %v1145 = vpop.permute.xlu0 %1144
      %1148 = vset.pattern.permute.xlu0 0
      %1149 = vperm.xlu0 %1148, %v1011
      %v1150 = vpop.permute.xlu0 %1149
      %1153 = vset.pattern.permute.xlu0 0
      %1154 = vperm.xlu0 %1153, %v1013
      %v1155 = vpop.permute.xlu0 %1154
      %1158 = vset.pattern.permute.xlu0 0
      %1159 = vperm.xlu0 %1158, %v1015
      %v1160 = vpop.permute.xlu0 %1159
      %1163 = vset.pattern.permute.xlu0 0
      %1164 = vperm.xlu0 %1163, %v1017
      %v1165 = vpop.permute.xlu0 %1164
      %1168 = vset.pattern.permute.xlu0 0
      %1169 = vperm.xlu0 %1168, %v1019
      %v1170 = vpop.permute.xlu0 %1169
      %1173 = vset.pattern.permute.xlu0 0
      %1174 = vperm.xlu0 %1173, %v1021
      %v1175 = vpop.permute.xlu0 %1174
      %1178 = vset.pattern.permute.xlu0 0
      %1179 = vperm.xlu0 %1178, %v1023
      %v1180 = vpop.permute.xlu0 %1179
      %1183 = vset.pattern.permute.xlu0 0
      %1184 = vperm.xlu0 %1183, %v1025
      %v1185 = vpop.permute.xlu0 %1184
      %1188 = vset.pattern.permute.xlu0 0
      %1189 = vperm.xlu0 %1188, %v1027
      %v1190 = vpop.permute.xlu0 %1189
      %1193 = vset.pattern.permute.xlu0 0
      %1194 = vperm.xlu0 %1193, %v1029
      %v1195 = vpop.permute.xlu0 %1194
      %1198 = vset.pattern.permute.xlu0 0
      %1199 = vperm.xlu0 %1198, %v1031
      %v1200 = vpop.permute.xlu0 %1199
      %1203 = vset.pattern.permute.xlu0 0
      %1204 = vperm.xlu0 %1203, %v1033
      %v1205 = vpop.permute.xlu0 %1204
      %1208 = vset.pattern.permute.xlu0 0
      %1209 = vperm.xlu0 %1208, %v1035
      %v1210 = vpop.permute.xlu0 %1209
      %1213 = vset.pattern.permute.xlu0 0
      %1214 = vperm.xlu0 %1213, %v1037
      %v1215 = vpop.permute.xlu0 %1214
      %1218 = vset.pattern.permute.xlu0 0
      %1219 = vperm.xlu0 %1218, %v1039
      %v1220 = vpop.permute.xlu0 %1219
      %1223 = vset.pattern.permute.xlu0 0
      %1224 = vperm.xlu0 %1223, %v1041
      %v1225 = vpop.permute.xlu0 %1224
      %1228 = vset.pattern.permute.xlu0 0
      %1229 = vperm.xlu0 %1228, %v1043
      %v1230 = vpop.permute.xlu0 %1229
      %1233 = vset.pattern.permute.xlu0 0
      %1234 = vperm.xlu0 %1233, %v1045
      %v1235 = vpop.permute.xlu0 %1234
      %1238 = vset.pattern.permute.xlu0 0
      %1239 = vperm.xlu0 %1238, %v1047
      %v1240 = vpop.permute.xlu0 %1239
      %1243 = vset.pattern.permute.xlu0 0
      %1244 = vperm.xlu0 %1243, %v1049
      %v1245 = vpop.permute.xlu0 %1244
      %1248 = vset.pattern.permute.xlu0 0
      %1249 = vperm.xlu0 %1248, %v1051
      %v1250 = vpop.permute.xlu0 %1249
      %1253 = vset.pattern.permute.xlu0 0
      %1254 = vperm.xlu0 %1253, %v1053
      %v1255 = vpop.permute.xlu0 %1254
      %1258 = vset.pattern.permute.xlu0 0
      %1259 = vperm.xlu0 %1258, %v1055
      %v1260 = vpop.permute.xlu0 %1259
      %1263 = vset.pattern.permute.xlu0 0
      %1264 = vperm.xlu0 %1263, %v1057
      %v1265 = vpop.permute.xlu0 %1264
      %1268 = vset.pattern.permute.xlu0 0
      %1269 = vperm.xlu0 %1268, %v1059
      %v1270 = vpop.permute.xlu0 %1269
      %1273 = vset.pattern.permute.xlu0 0
      %1274 = vperm.xlu0 %1273, %v1061
      %v1275 = vpop.permute.xlu0 %1274
      %1278 = vset.pattern.permute.xlu0 0
      %1279 = vperm.xlu0 %1278, %v1063
      %v1280 = vpop.permute.xlu0 %1279
      %1283 = vset.pattern.permute.xlu0 0
      %1284 = vperm.xlu0 %1283, %v1065
      %v1285 = vpop.permute.xlu0 %1284
      %1288 = vset.pattern.permute.xlu0 0
      %1289 = vperm.xlu0 %1288, %v1067
      %v1290 = vpop.permute.xlu0 %1289
      %v1292 = vmul.f32 %v1100, %v1135
      %v1293 = vmul.f32 %v1101, %v1140
      %v1294 = vmul.f32 %v1102, %v1145
      %v1295 = vmul.f32 %v1103, %v1150
      %v1296 = vmul.f32 %v1104, %v1155
      %v1297 = vmul.f32 %v1105, %v1160
      %v1298 = vmul.f32 %v1106, %v1165
      %v1299 = vmul.f32 %v1107, %v1170
      %v1300 = vmul.f32 %v1108, %v1175
      %v1301 = vmul.f32 %v1109, %v1180
      %v1302 = vmul.f32 %v1110, %v1185
      %v1303 = vmul.f32 %v1111, %v1190
      %v1304 = vmul.f32 %v1112, %v1195
      %v1305 = vmul.f32 %v1113, %v1200
      %v1306 = vmul.f32 %v1114, %v1205
      %v1307 = vmul.f32 %v1115, %v1210
      %v1308 = vmul.f32 %v1116, %v1215
      %v1309 = vmul.f32 %v1117, %v1220
      %v1310 = vmul.f32 %v1118, %v1225
      %v1311 = vmul.f32 %v1119, %v1230
      %v1312 = vmul.f32 %v1120, %v1235
      %v1313 = vmul.f32 %v1121, %v1240
      %v1314 = vmul.f32 %v1122, %v1245
      %v1315 = vmul.f32 %v1123, %v1250
      %v1316 = vmul.f32 %v1124, %v1255
      %v1317 = vmul.f32 %v1125, %v1260
      %v1318 = vmul.f32 %v1126, %v1265
      %v1319 = vmul.f32 %v1127, %v1270
      %v1320 = vmul.f32 %v1128, %v1275
      %v1321 = vmul.f32 %v1129, %v1280
      %v1322 = vmul.f32 %v1130, %v1285
      %v1323 = vmul.f32 %v1131, %v1290
      %v1324 = vpack.c.bf16 %v1293, %v1292
      %v1325 = vpack.c.bf16 %v1295, %v1294
      %v1326 = vpack.c.bf16 %v1297, %v1296
      %v1327 = vpack.c.bf16 %v1299, %v1298
      %v1328 = vpack.c.bf16 %v1301, %v1300
      %v1329 = vpack.c.bf16 %v1303, %v1302
      %v1330 = vpack.c.bf16 %v1305, %v1304
      %v1331 = vpack.c.bf16 %v1307, %v1306
      %v1332 = vpack.c.bf16 %v1309, %v1308
      %v1333 = vpack.c.bf16 %v1311, %v1310
      %v1334 = vpack.c.bf16 %v1313, %v1312
      %v1335 = vpack.c.bf16 %v1315, %v1314
      %v1336 = vpack.c.bf16 %v1317, %v1316
      %v1337 = vpack.c.bf16 %v1319, %v1318
      %v1338 = vpack.c.bf16 %v1321, %v1320
      %v1339 = vpack.c.bf16 %v1323, %v1322
      %v1340 = vld [vmem:[#allocation4] sm:$0xf]
      %v1341 = vld [vmem:[#allocation4 + $0x4] sm:$0xf]
      %v1342 = vld [vmem:[#allocation4 + $0x8] sm:$0xf]
      %v1343 = vld [vmem:[#allocation4 + $0xc] sm:$0xf]
      %v1344 = vld [vmem:[#allocation4 + $0x10] sm:$0xf]
      %v1345 = vld [vmem:[#allocation4 + $0x14] sm:$0xf]
      %v1346 = vld [vmem:[#allocation4 + $0x18] sm:$0xf]
      %v1347 = vld [vmem:[#allocation4 + $0x1c] sm:$0xf]
      %v1348 = vld [vmem:[#allocation4 + $0x20] sm:$0xf]
      %v1349 = vld [vmem:[#allocation4 + $0x24] sm:$0xf]
      %v1350 = vld [vmem:[#allocation4 + $0x28] sm:$0xf]
      %v1351 = vld [vmem:[#allocation4 + $0x2c] sm:$0xf]
      %v1352 = vld [vmem:[#allocation4 + $0x30] sm:$0xf]
      %v1353 = vld [vmem:[#allocation4 + $0x34] sm:$0xf]
      %v1354 = vld [vmem:[#allocation4 + $0x38] sm:$0xf]
      %v1355 = vld [vmem:[#allocation4 + $0x3c] sm:$0xf]
      %v1356 = vld [vmem:[#allocation4 + $0x40] sm:$0xf]
      %v1357 = vld [vmem:[#allocation4 + $0x44] sm:$0xf]
      %v1358 = vld [vmem:[#allocation4 + $0x48] sm:$0xf]
      %v1359 = vld [vmem:[#allocation4 + $0x4c] sm:$0xf]
      %v1360 = vld [vmem:[#allocation4 + $0x50] sm:$0xf]
      %v1361 = vld [vmem:[#allocation4 + $0x54] sm:$0xf]
      %v1362 = vld [vmem:[#allocation4 + $0x58] sm:$0xf]
      %v1363 = vld [vmem:[#allocation4 + $0x5c] sm:$0xf]
      %v1364 = vld [vmem:[#allocation4 + $0x60] sm:$0xf]
      %v1365 = vld [vmem:[#allocation4 + $0x64] sm:$0xf]
      %v1366 = vld [vmem:[#allocation4 + $0x68] sm:$0xf]
      %v1367 = vld [vmem:[#allocation4 + $0x6c] sm:$0xf]
      %v1368 = vld [vmem:[#allocation4 + $0x70] sm:$0xf]
      %v1369 = vld [vmem:[#allocation4 + $0x74] sm:$0xf]
      %v1370 = vld [vmem:[#allocation4 + $0x78] sm:$0xf]
      %v1371 = vld [vmem:[#allocation4 + $0x7c] sm:$0xf]
      %v1372 = vld [vmem:[#allocation10] sm:$0xf]
      %v1373 = vld [vmem:[#allocation10 + $0x4] sm:$0xf]
      %v1374 = vld [vmem:[#allocation10 + $0x8] sm:$0xf]
      %v1375 = vld [vmem:[#allocation10 + $0xc] sm:$0xf]
      %v1376 = vld [vmem:[#allocation10 + $0x10] sm:$0xf]
      %v1377 = vld [vmem:[#allocation10 + $0x14] sm:$0xf]
      %v1378 = vld [vmem:[#allocation10 + $0x18] sm:$0xf]
      %v1379 = vld [vmem:[#allocation10 + $0x1c] sm:$0xf]
      %v1380 = vld [vmem:[#allocation10 + $0x20] sm:$0xf]
      %v1381 = vld [vmem:[#allocation10 + $0x24] sm:$0xf]
      %v1382 = vld [vmem:[#allocation10 + $0x28] sm:$0xf]
      %v1383 = vld [vmem:[#allocation10 + $0x2c] sm:$0xf]
      %v1384 = vld [vmem:[#allocation10 + $0x30] sm:$0xf]
      %v1385 = vld [vmem:[#allocation10 + $0x34] sm:$0xf]
      %v1386 = vld [vmem:[#allocation10 + $0x38] sm:$0xf]
      %v1387 = vld [vmem:[#allocation10 + $0x3c] sm:$0xf]
      %v1388 = vld [vmem:[#allocation12] sm:$0xf]
      %v1389 = vld [vmem:[#allocation12 + $0x4] sm:$0xf]
      %v1390 = vld [vmem:[#allocation12 + $0x8] sm:$0xf]
      %v1391 = vld [vmem:[#allocation12 + $0xc] sm:$0xf]
      %v1392 = vld [vmem:[#allocation12 + $0x10] sm:$0xf]
      %v1393 = vld [vmem:[#allocation12 + $0x14] sm:$0xf]
      %v1394 = vld [vmem:[#allocation12 + $0x18] sm:$0xf]
      %v1395 = vld [vmem:[#allocation12 + $0x1c] sm:$0xf]
      %v1396 = vld [vmem:[#allocation12 + $0x20] sm:$0xf]
      %v1397 = vld [vmem:[#allocation12 + $0x24] sm:$0xf]
      %v1398 = vld [vmem:[#allocation12 + $0x28] sm:$0xf]
      %v1399 = vld [vmem:[#allocation12 + $0x2c] sm:$0xf]
      %v1400 = vld [vmem:[#allocation12 + $0x30] sm:$0xf]
      %v1401 = vld [vmem:[#allocation12 + $0x34] sm:$0xf]
      %v1402 = vld [vmem:[#allocation12 + $0x38] sm:$0xf]
      %v1403 = vld [vmem:[#allocation12 + $0x3c] sm:$0xf]
      %v1420 = vunpack.c.l.b16 %v1388
      %v1421 = vunpack.c.l.b16 %v1389
      %v1422 = vunpack.c.l.b16 %v1390
      %v1423 = vunpack.c.l.b16 %v1391
      %v1424 = vunpack.c.l.b16 %v1392
      %v1425 = vunpack.c.l.b16 %v1393
      %v1426 = vunpack.c.l.b16 %v1394
      %v1427 = vunpack.c.l.b16 %v1395
      %v1428 = vunpack.c.l.b16 %v1396
      %v1429 = vunpack.c.l.b16 %v1397
      %v1430 = vunpack.c.l.b16 %v1398
      %v1431 = vunpack.c.l.b16 %v1399
      %v1432 = vunpack.c.l.b16 %v1400
      %v1433 = vunpack.c.l.b16 %v1401
      %v1434 = vunpack.c.l.b16 %v1402
      %v1435 = vunpack.c.l.b16 %v1403
      %v1436 = vpack.c.b16 %v1421, %v1420
      %v1437 = vpack.c.b16 %v1423, %v1422
      %v1438 = vpack.c.b16 %v1425, %v1424
      %v1439 = vpack.c.b16 %v1427, %v1426
      %v1440 = vpack.c.b16 %v1429, %v1428
      %v1441 = vpack.c.b16 %v1431, %v1430
      %v1442 = vpack.c.b16 %v1433, %v1432
      %v1443 = vpack.c.b16 %v1435, %v1434
      %1452 = vmatprep.subr.bf16.mxu0 0
      %1453 = vmatpush1.bf16.msra.mxu0 %v1436
      %1454 = vmatprep.subr.bf16.mxu0 0
      %1455 = vmatpush1.bf16.msra.mxu0 %v1437
      %1456 = vmatprep.subr.bf16.mxu0 0
      %1457 = vmatpush1.bf16.msra.mxu0 %v1438
      %1458 = vmatprep.subr.bf16.mxu0 0
      %1459 = vmatpush1.bf16.msra.mxu0 %v1439
      %1460 = vmatprep.subr.bf16.mxu0 0
      %1461 = vmatpush1.bf16.msra.mxu0 %v1440
      %1462 = vmatprep.subr.bf16.mxu0 0
      %1463 = vmatpush1.bf16.msra.mxu0 %v1441
      %1464 = vmatprep.subr.bf16.mxu0 0
      %1465 = vmatpush1.bf16.msra.mxu0 %v1442
      %1466 = vmatprep.subr.bf16.mxu0 0
      %1467 = vmatpush1.bf16.msra.mxu0 %v1443
      %1468 = vmatprep.subr.bf16.mxu0 0
      %1469 = vmatpush1.bf16.msra.mxu0 0
      %1470 = vmatprep.subr.bf16.mxu0 0
      %1471 = vmatpush1.bf16.msra.mxu0 0
      %1472 = vmatprep.subr.bf16.mxu0 0
      %1473 = vmatpush1.bf16.msra.mxu0 0
      %1474 = vmatprep.subr.bf16.mxu0 0
      %1475 = vmatpush1.bf16.msra.mxu0 0
      %1476 = vmatprep.subr.bf16.mxu0 0
      %1477 = vmatpush1.bf16.msra.mxu0 0
      %1478 = vmatprep.subr.bf16.mxu0 0
      %1479 = vmatpush1.bf16.msra.mxu0 0
      %1480 = vmatprep.subr.bf16.mxu0 0
      %1481 = vmatpush1.bf16.msra.mxu0 0
      %1482 = vmatprep.subr.bf16.mxu0 0
      %1483 = vmatpush1.bf16.msra.mxu0 0
      %1484 = vmatprep.mubr.bf16.mxu0 0
      %1485 = vmatmul.mubr.bf16.gmra.mrb[0].mxu0 %v1324
      %v1486 = vpop.f32.mrb[0].mxu0
      %v1487 = vadd.f32 0.0, %v1486
      %v1488 = vpop.f32.mrb[0].mxu0
      %v1489 = vpop.f32.mrb[0].mxu0
      %v1490 = vadd.f32 0.0, %v1489
      %v1491 = vpop.f32.mrb[0].mxu0
      %1492 = vmatprep.mubr.bf16.mxu0 0
      %1493 = vmatmul.mubr.bf16.gmra.mrb[0].mxu0 %v1325
      %v1494 = vpop.f32.mrb[0].mxu0
      %v1495 = vadd.f32 0.0, %v1494
      %v1496 = vpop.f32.mrb[0].mxu0
      %v1497 = vpop.f32.mrb[0].mxu0
      %v1498 = vadd.f32 0.0, %v1497
      %v1499 = vpop.f32.mrb[0].mxu0
      %1500 = vmatprep.mubr.bf16.mxu0 0
      %1501 = vmatmul.mubr.bf16.gmra.mrb[0].mxu0 %v1326
      %v1502 = vpop.f32.mrb[0].mxu0
      %v1503 = vadd.f32 0.0, %v1502
      %v1504 = vpop.f32.mrb[0].mxu0
      %v1505 = vpop.f32.mrb[0].mxu0
      %v1506 = vadd.f32 0.0, %v1505
      %v1507 = vpop.f32.mrb[0].mxu0
      %1508 = vmatprep.mubr.bf16.mxu0 0
      %1509 = vmatmul.mubr.bf16.gmra.mrb[0].mxu0 %v1327
      %v1510 = vpop.f32.mrb[0].mxu0
      %v1511 = vadd.f32 0.0, %v1510
      %v1512 = vpop.f32.mrb[0].mxu0
      %v1513 = vpop.f32.mrb[0].mxu0
      %v1514 = vadd.f32 0.0, %v1513
      %v1515 = vpop.f32.mrb[0].mxu0
      %1516 = vmatprep.mubr.bf16.mxu0 0
      %1517 = vmatmul.mubr.bf16.gmra.mrb[0].mxu0 %v1328
      %v1518 = vpop.f32.mrb[0].mxu0
      %v1519 = vadd.f32 0.0, %v1518
      %v1520 = vpop.f32.mrb[0].mxu0
      %v1521 = vpop.f32.mrb[0].mxu0
      %v1522 = vadd.f32 0.0, %v1521
      %v1523 = vpop.f32.mrb[0].mxu0
      %1524 = vmatprep.mubr.bf16.mxu0 0
      %1525 = vmatmul.mubr.bf16.gmra.mrb[0].mxu0 %v1329
      %v1526 = vpop.f32.mrb[0].mxu0
      %v1527 = vadd.f32 0.0, %v1526
      %v1528 = vpop.f32.mrb[0].mxu0
      %v1529 = vpop.f32.mrb[0].mxu0
      %v1530 = vadd.f32 0.0, %v1529
      %v1531 = vpop.f32.mrb[0].mxu0
      %1532 = vmatprep.mubr.bf16.mxu0 0
      %1533 = vmatmul.mubr.bf16.gmra.mrb[0].mxu0 %v1330
      %v1534 = vpop.f32.mrb[0].mxu0
      %v1535 = vadd.f32 0.0, %v1534
      %v1536 = vpop.f32.mrb[0].mxu0
      %v1537 = vpop.f32.mrb[0].mxu0
      %v1538 = vadd.f32 0.0, %v1537
      %v1539 = vpop.f32.mrb[0].mxu0
      %1540 = vmatprep.mubr.bf16.mxu0 0
      %1541 = vmatmul.mubr.bf16.gmra.mrb[0].mxu0 %v1331
      %v1542 = vpop.f32.mrb[0].mxu0
      %v1543 = vadd.f32 0.0, %v1542
      %v1544 = vpop.f32.mrb[0].mxu0
      %v1545 = vpop.f32.mrb[0].mxu0
      %v1546 = vadd.f32 0.0, %v1545
      %v1547 = vpop.f32.mrb[0].mxu0
      %1548 = vmatprep.mubr.bf16.mxu0 0
      %1549 = vmatmul.mubr.bf16.gmra.mrb[0].mxu0 %v1332
      %v1550 = vpop.f32.mrb[0].mxu0
      %v1551 = vadd.f32 0.0, %v1550
      %v1552 = vpop.f32.mrb[0].mxu0
      %v1553 = vpop.f32.mrb[0].mxu0
      %v1554 = vadd.f32 0.0, %v1553
      %v1555 = vpop.f32.mrb[0].mxu0
      %1556 = vmatprep.mubr.bf16.mxu0 0
      %1557 = vmatmul.mubr.bf16.gmra.mrb[0].mxu0 %v1333
      %v1558 = vpop.f32.mrb[0].mxu0
      %v1559 = vadd.f32 0.0, %v1558
      %v1560 = vpop.f32.mrb[0].mxu0
      %v1561 = vpop.f32.mrb[0].mxu0
      %v1562 = vadd.f32 0.0, %v1561
      %v1563 = vpop.f32.mrb[0].mxu0
      %1564 = vmatprep.mubr.bf16.mxu0 0
      %1565 = vmatmul.mubr.bf16.gmra.mrb[0].mxu0 %v1334
      %v1566 = vpop.f32.mrb[0].mxu0
      %v1567 = vadd.f32 0.0, %v1566
      %v1568 = vpop.f32.mrb[0].mxu0
      %v1569 = vpop.f32.mrb[0].mxu0
      %v1570 = vadd.f32 0.0, %v1569
      %v1571 = vpop.f32.mrb[0].mxu0
      %1572 = vmatprep.mubr.bf16.mxu0 0
      %1573 = vmatmul.mubr.bf16.gmra.mrb[0].mxu0 %v1335
      %v1574 = vpop.f32.mrb[0].mxu0
      %v1575 = vadd.f32 0.0, %v1574
      %v1576 = vpop.f32.mrb[0].mxu0
      %v1577 = vpop.f32.mrb[0].mxu0
      %v1578 = vadd.f32 0.0, %v1577
      %v1579 = vpop.f32.mrb[0].mxu0
      %1580 = vmatprep.mubr.bf16.mxu0 0
      %1581 = vmatmul.mubr.bf16.gmra.mrb[0].mxu0 %v1336
      %v1582 = vpop.f32.mrb[0].mxu0
      %v1583 = vadd.f32 0.0, %v1582
      %v1584 = vpop.f32.mrb[0].mxu0
      %v1585 = vpop.f32.mrb[0].mxu0
      %v1586 = vadd.f32 0.0, %v1585
      %v1587 = vpop.f32.mrb[0].mxu0
      %1588 = vmatprep.mubr.bf16.mxu0 0
      %1589 = vmatmul.mubr.bf16.gmra.mrb[0].mxu0 %v1337
      %v1590 = vpop.f32.mrb[0].mxu0
      %v1591 = vadd.f32 0.0, %v1590
      %v1592 = vpop.f32.mrb[0].mxu0
      %v1593 = vpop.f32.mrb[0].mxu0
      %v1594 = vadd.f32 0.0, %v1593
      %v1595 = vpop.f32.mrb[0].mxu0
      %1596 = vmatprep.mubr.bf16.mxu0 0
      %1597 = vmatmul.mubr.bf16.gmra.mrb[0].mxu0 %v1338
      %v1598 = vpop.f32.mrb[0].mxu0
      %v1599 = vadd.f32 0.0, %v1598
      %v1600 = vpop.f32.mrb[0].mxu0
      %v1601 = vpop.f32.mrb[0].mxu0
      %v1602 = vadd.f32 0.0, %v1601
      %v1603 = vpop.f32.mrb[0].mxu0
      %1604 = vmatprep.mubr.bf16.mxu0 0
      %1605 = vmatmul.mubr.bf16.gmra.mrb[0].mxu0 %v1339
      %v1606 = vpop.f32.mrb[0].mxu0
      %v1607 = vadd.f32 0.0, %v1606
      %v1608 = vpop.f32.mrb[0].mxu0
      %v1609 = vpop.f32.mrb[0].mxu0
      %v1610 = vadd.f32 0.0, %v1609
      %v1611 = vpop.f32.mrb[0].mxu0
      %1612 = vdwg.mxu0
      %v1645 = vunpack.c.l.b16 %v1340
      %v1646 = vunpack.c.l.b16 %v1341
      %v1647 = vunpack.c.l.b16 %v1342
      %v1648 = vunpack.c.l.b16 %v1343
      %v1649 = vunpack.c.l.b16 %v1344
      %v1650 = vunpack.c.l.b16 %v1345
      %v1651 = vunpack.c.l.b16 %v1346
      %v1652 = vunpack.c.l.b16 %v1347
      %v1653 = vunpack.c.l.b16 %v1348
      %v1654 = vunpack.c.l.b16 %v1349
      %v1655 = vunpack.c.l.b16 %v1350
      %v1656 = vunpack.c.l.b16 %v1351
      %v1657 = vunpack.c.l.b16 %v1352
      %v1658 = vunpack.c.l.b16 %v1353
      %v1659 = vunpack.c.l.b16 %v1354
      %v1660 = vunpack.c.l.b16 %v1355
      %v1661 = vunpack.c.l.b16 %v1356
      %v1662 = vunpack.c.l.b16 %v1357
      %v1663 = vunpack.c.l.b16 %v1358
      %v1664 = vunpack.c.l.b16 %v1359
      %v1665 = vunpack.c.l.b16 %v1360
      %v1666 = vunpack.c.l.b16 %v1361
      %v1667 = vunpack.c.l.b16 %v1362
      %v1668 = vunpack.c.l.b16 %v1363
      %v1669 = vunpack.c.l.b16 %v1364
      %v1670 = vunpack.c.l.b16 %v1365
      %v1671 = vunpack.c.l.b16 %v1366
      %v1672 = vunpack.c.l.b16 %v1367
      %v1673 = vunpack.c.l.b16 %v1368
      %v1674 = vunpack.c.l.b16 %v1369
      %v1675 = vunpack.c.l.b16 %v1370
      %v1676 = vunpack.c.l.b16 %v1371
      %v1677 = vpack.c.b16 %v1646, %v1645
      %v1678 = vpack.c.b16 %v1648, %v1647
      %v1679 = vpack.c.b16 %v1650, %v1649
      %v1680 = vpack.c.b16 %v1652, %v1651
      %v1681 = vpack.c.b16 %v1654, %v1653
      %v1682 = vpack.c.b16 %v1656, %v1655
      %v1683 = vpack.c.b16 %v1658, %v1657
      %v1684 = vpack.c.b16 %v1660, %v1659
      %v1685 = vpack.c.b16 %v1662, %v1661
      %v1686 = vpack.c.b16 %v1664, %v1663
      %v1687 = vpack.c.b16 %v1666, %v1665
      %v1688 = vpack.c.b16 %v1668, %v1667
      %v1689 = vpack.c.b16 %v1670, %v1669
      %v1690 = vpack.c.b16 %v1672, %v1671
      %v1691 = vpack.c.b16 %v1674, %v1673
      %v1692 = vpack.c.b16 %v1676, %v1675
      %v1725 = vunpack.c.l.b16 %v1372
      %v1726 = vunpack.c.l.b16 %v1373
      %v1727 = vunpack.c.l.b16 %v1374
      %v1728 = vunpack.c.l.b16 %v1375
      %v1729 = vunpack.c.l.b16 %v1376
      %v1730 = vunpack.c.l.b16 %v1377
      %v1731 = vunpack.c.l.b16 %v1378
      %v1732 = vunpack.c.l.b16 %v1379
      %v1733 = vunpack.c.l.b16 %v1380
      %v1734 = vunpack.c.l.b16 %v1381
      %v1735 = vunpack.c.l.b16 %v1382
      %v1736 = vunpack.c.l.b16 %v1383
      %v1737 = vunpack.c.l.b16 %v1384
      %v1738 = vunpack.c.l.b16 %v1385
      %v1739 = vunpack.c.l.b16 %v1386
      %v1740 = vunpack.c.l.b16 %v1387
      %v1741 = vpack.c.b16 %v1726, %v1725
      %v1742 = vpack.c.b16 %v1728, %v1727
      %v1743 = vpack.c.b16 %v1730, %v1729
      %v1744 = vpack.c.b16 %v1732, %v1731
      %v1745 = vpack.c.b16 %v1734, %v1733
      %v1746 = vpack.c.b16 %v1736, %v1735
      %v1747 = vpack.c.b16 %v1738, %v1737
      %v1748 = vpack.c.b16 %v1740, %v1739
      %1757 = vmatprep.subr.bf16.mxu0 0
      %1758 = vmatpush1.bf16.msra.mxu0 %v1741
      %1759 = vmatprep.subr.bf16.mxu0 0
      %1760 = vmatpush1.bf16.msra.mxu0 %v1742
      %1761 = vmatprep.subr.bf16.mxu0 0
      %1762 = vmatpush1.bf16.msra.mxu0 %v1743
      %1763 = vmatprep.subr.bf16.mxu0 0
      %1764 = vmatpush1.bf16.msra.mxu0 %v1744
      %1765 = vmatprep.subr.bf16.mxu0 0
      %1766 = vmatpush1.bf16.msra.mxu0 %v1745
      %1767 = vmatprep.subr.bf16.mxu0 0
      %1768 = vmatpush1.bf16.msra.mxu0 %v1746
      %1769 = vmatprep.subr.bf16.mxu0 0
      %1770 = vmatpush1.bf16.msra.mxu0 %v1747
      %1771 = vmatprep.subr.bf16.mxu0 0
      %1772 = vmatpush1.bf16.msra.mxu0 %v1748
      %1773 = vmatprep.subr.bf16.mxu0 0
      %1774 = vmatpush1.bf16.msra.mxu0 0
      %1775 = vmatprep.subr.bf16.mxu0 0
      %1776 = vmatpush1.bf16.msra.mxu0 0
      %1777 = vmatprep.subr.bf16.mxu0 0
      %1778 = vmatpush1.bf16.msra.mxu0 0
      %1779 = vmatprep.subr.bf16.mxu0 0
      %1780 = vmatpush1.bf16.msra.mxu0 0
      %1781 = vmatprep.subr.bf16.mxu0 0
      %1782 = vmatpush1.bf16.msra.mxu0 0
      %1783 = vmatprep.subr.bf16.mxu0 0
      %1784 = vmatpush1.bf16.msra.mxu0 0
      %1785 = vmatprep.subr.bf16.mxu0 0
      %1786 = vmatpush1.bf16.msra.mxu0 0
      %1787 = vmatprep.subr.bf16.mxu0 0
      %1788 = vmatpush1.bf16.msra.mxu0 0
      %1789 = vmatprep.mubr.bf16.mxu0 0
      %1790 = vmatmul.mubr.bf16.gmra.mrb[0].mxu0 %v1677
      %v1791 = vpop.f32.mrb[0].mxu0
      %v1792 = vadd.f32 %v1487, %v1791
      %v1793 = vpop.f32.mrb[0].mxu0
      %v1794 = vpop.f32.mrb[0].mxu0
      %v1795 = vadd.f32 %v1490, %v1794
      %v1796 = vpop.f32.mrb[0].mxu0
      %1797 = vmatprep.mubr.bf16.mxu0 0
      %1798 = vmatmul.mubr.bf16.gmra.mrb[0].mxu0 %v1678
      %v1799 = vpop.f32.mrb[0].mxu0
      %v1800 = vadd.f32 %v1495, %v1799
      %v1801 = vpop.f32.mrb[0].mxu0
      %v1802 = vpop.f32.mrb[0].mxu0
      %v1803 = vadd.f32 %v1498, %v1802
      %v1804 = vpop.f32.mrb[0].mxu0
      %1805 = vmatprep.mubr.bf16.mxu0 0
      %1806 = vmatmul.mubr.bf16.gmra.mrb[0].mxu0 %v1679
      %v1807 = vpop.f32.mrb[0].mxu0
      %v1808 = vadd.f32 %v1503, %v1807
      %v1809 = vpop.f32.mrb[0].mxu0
      %v1810 = vpop.f32.mrb[0].mxu0
      %v1811 = vadd.f32 %v1506, %v1810
      %v1812 = vpop.f32.mrb[0].mxu0
      %1813 = vmatprep.mubr.bf16.mxu0 0
      %1814 = vmatmul.mubr.bf16.gmra.mrb[0].mxu0 %v1680
      %v1815 = vpop.f32.mrb[0].mxu0
      %v1816 = vadd.f32 %v1511, %v1815
      %v1817 = vpop.f32.mrb[0].mxu0
      %v1818 = vpop.f32.mrb[0].mxu0
      %v1819 = vadd.f32 %v1514, %v1818
      %v1820 = vpop.f32.mrb[0].mxu0
      %1821 = vmatprep.mubr.bf16.mxu0 0
      %1822 = vmatmul.mubr.bf16.gmra.mrb[0].mxu0 %v1681
      %v1823 = vpop.f32.mrb[0].mxu0
      %v1824 = vadd.f32 %v1519, %v1823
      %v1825 = vpop.f32.mrb[0].mxu0
      %v1826 = vpop.f32.mrb[0].mxu0
      %v1827 = vadd.f32 %v1522, %v1826
      %v1828 = vpop.f32.mrb[0].mxu0
      %1829 = vmatprep.mubr.bf16.mxu0 0
      %1830 = vmatmul.mubr.bf16.gmra.mrb[0].mxu0 %v1682
      %v1831 = vpop.f32.mrb[0].mxu0
      %v1832 = vadd.f32 %v1527, %v1831
      %v1833 = vpop.f32.mrb[0].mxu0
      %v1834 = vpop.f32.mrb[0].mxu0
      %v1835 = vadd.f32 %v1530, %v1834
      %v1836 = vpop.f32.mrb[0].mxu0
      %1837 = vmatprep.mubr.bf16.mxu0 0
      %1838 = vmatmul.mubr.bf16.gmra.mrb[0].mxu0 %v1683
      %v1839 = vpop.f32.mrb[0].mxu0
      %v1840 = vadd.f32 %v1535, %v1839
      %v1841 = vpop.f32.mrb[0].mxu0
      %v1842 = vpop.f32.mrb[0].mxu0
      %v1843 = vadd.f32 %v1538, %v1842
      %v1844 = vpop.f32.mrb[0].mxu0
      %1845 = vmatprep.mubr.bf16.mxu0 0
      %1846 = vmatmul.mubr.bf16.gmra.mrb[0].mxu0 %v1684
      %v1847 = vpop.f32.mrb[0].mxu0
      %v1848 = vadd.f32 %v1543, %v1847
      %v1849 = vpop.f32.mrb[0].mxu0
      %v1850 = vpop.f32.mrb[0].mxu0
      %v1851 = vadd.f32 %v1546, %v1850
      %v1852 = vpop.f32.mrb[0].mxu0
      %1853 = vmatprep.mubr.bf16.mxu0 0
      %1854 = vmatmul.mubr.bf16.gmra.mrb[0].mxu0 %v1685
      %v1855 = vpop.f32.mrb[0].mxu0
      %v1856 = vadd.f32 %v1551, %v1855
      %v1857 = vpop.f32.mrb[0].mxu0
      %v1858 = vpop.f32.mrb[0].mxu0
      %v1859 = vadd.f32 %v1554, %v1858
      %v1860 = vpop.f32.mrb[0].mxu0
      %1861 = vmatprep.mubr.bf16.mxu0 0
      %1862 = vmatmul.mubr.bf16.gmra.mrb[0].mxu0 %v1686
      %v1863 = vpop.f32.mrb[0].mxu0
      %v1864 = vadd.f32 %v1559, %v1863
      %v1865 = vpop.f32.mrb[0].mxu0
      %v1866 = vpop.f32.mrb[0].mxu0
      %v1867 = vadd.f32 %v1562, %v1866
      %v1868 = vpop.f32.mrb[0].mxu0
      %1869 = vmatprep.mubr.bf16.mxu0 0
      %1870 = vmatmul.mubr.bf16.gmra.mrb[0].mxu0 %v1687
      %v1871 = vpop.f32.mrb[0].mxu0
      %v1872 = vadd.f32 %v1567, %v1871
      %v1873 = vpop.f32.mrb[0].mxu0
      %v1874 = vpop.f32.mrb[0].mxu0
      %v1875 = vadd.f32 %v1570, %v1874
      %v1876 = vpop.f32.mrb[0].mxu0
      %1877 = vmatprep.mubr.bf16.mxu0 0
      %1878 = vmatmul.mubr.bf16.gmra.mrb[0].mxu0 %v1688
      %v1879 = vpop.f32.mrb[0].mxu0
      %v1880 = vadd.f32 %v1575, %v1879
      %v1881 = vpop.f32.mrb[0].mxu0
      %v1882 = vpop.f32.mrb[0].mxu0
      %v1883 = vadd.f32 %v1578, %v1882
      %v1884 = vpop.f32.mrb[0].mxu0
      %1885 = vmatprep.mubr.bf16.mxu0 0
      %1886 = vmatmul.mubr.bf16.gmra.mrb[0].mxu0 %v1689
      %v1887 = vpop.f32.mrb[0].mxu0
      %v1888 = vadd.f32 %v1583, %v1887
      %v1889 = vpop.f32.mrb[0].mxu0
      %v1890 = vpop.f32.mrb[0].mxu0
      %v1891 = vadd.f32 %v1586, %v1890
      %v1892 = vpop.f32.mrb[0].mxu0
      %1893 = vmatprep.mubr.bf16.mxu0 0
      %1894 = vmatmul.mubr.bf16.gmra.mrb[0].mxu0 %v1690
      %v1895 = vpop.f32.mrb[0].mxu0
      %v1896 = vadd.f32 %v1591, %v1895
      %v1897 = vpop.f32.mrb[0].mxu0
      %v1898 = vpop.f32.mrb[0].mxu0
      %v1899 = vadd.f32 %v1594, %v1898
      %v1900 = vpop.f32.mrb[0].mxu0
      %1901 = vmatprep.mubr.bf16.mxu0 0
      %1902 = vmatmul.mubr.bf16.gmra.mrb[0].mxu0 %v1691
      %v1903 = vpop.f32.mrb[0].mxu0
      %v1904 = vadd.f32 %v1599, %v1903
      %v1905 = vpop.f32.mrb[0].mxu0
      %v1906 = vpop.f32.mrb[0].mxu0
      %v1907 = vadd.f32 %v1602, %v1906
      %v1908 = vpop.f32.mrb[0].mxu0
      %1909 = vmatprep.mubr.bf16.mxu0 0
      %1910 = vmatmul.mubr.bf16.gmra.mrb[0].mxu0 %v1692
      %v1911 = vpop.f32.mrb[0].mxu0
      %v1912 = vadd.f32 %v1607, %v1911
      %v1913 = vpop.f32.mrb[0].mxu0
      %v1914 = vpop.f32.mrb[0].mxu0
      %v1915 = vadd.f32 %v1610, %v1914
      %v1916 = vpop.f32.mrb[0].mxu0
      %1917 = vdwg.mxu0
      %v1918 = vmax.f32 %v1792, 0.0
      %v1919 = vmax.f32 %v1795, 0.0
      %v1920 = vmax.f32 %v1800, 0.0
      %v1921 = vmax.f32 %v1803, 0.0
      %v1922 = vmax.f32 %v1808, 0.0
      %v1923 = vmax.f32 %v1811, 0.0
      %v1924 = vmax.f32 %v1816, 0.0
      %v1925 = vmax.f32 %v1819, 0.0
      %v1926 = vmax.f32 %v1824, 0.0
      %v1927 = vmax.f32 %v1827, 0.0
      %v1928 = vmax.f32 %v1832, 0.0
      %v1929 = vmax.f32 %v1835, 0.0
      %v1930 = vmax.f32 %v1840, 0.0
      %v1931 = vmax.f32 %v1843, 0.0
      %v1932 = vmax.f32 %v1848, 0.0
      %v1933 = vmax.f32 %v1851, 0.0
      %v1934 = vmax.f32 %v1856, 0.0
      %v1935 = vmax.f32 %v1859, 0.0
      %v1936 = vmax.f32 %v1864, 0.0
      %v1937 = vmax.f32 %v1867, 0.0
      %v1938 = vmax.f32 %v1872, 0.0
      %v1939 = vmax.f32 %v1875, 0.0
      %v1940 = vmax.f32 %v1880, 0.0
      %v1941 = vmax.f32 %v1883, 0.0
      %v1942 = vmax.f32 %v1888, 0.0
      %v1943 = vmax.f32 %v1891, 0.0
      %v1944 = vmax.f32 %v1896, 0.0
      %v1945 = vmax.f32 %v1899, 0.0
      %v1946 = vmax.f32 %v1904, 0.0
      %v1947 = vmax.f32 %v1907, 0.0
      %v1948 = vmax.f32 %v1912, 0.0
      %v1949 = vmax.f32 %v1915, 0.0
      %v1950 = vpack.c.bf16 %v1919, %v1918
      %v1951 = vpack.c.bf16 %v1921, %v1920
      %v1952 = vpack.c.bf16 %v1923, %v1922
      %v1953 = vpack.c.bf16 %v1925, %v1924
      %v1954 = vpack.c.bf16 %v1927, %v1926
      %v1955 = vpack.c.bf16 %v1929, %v1928
      %v1956 = vpack.c.bf16 %v1931, %v1930
      %v1957 = vpack.c.bf16 %v1933, %v1932
      %v1958 = vpack.c.bf16 %v1935, %v1934
      %v1959 = vpack.c.bf16 %v1937, %v1936
      %v1960 = vpack.c.bf16 %v1939, %v1938
      %v1961 = vpack.c.bf16 %v1941, %v1940
      %v1962 = vpack.c.bf16 %v1943, %v1942
      %v1963 = vpack.c.bf16 %v1945, %v1944
      %v1964 = vpack.c.bf16 %v1947, %v1946
      %v1965 = vpack.c.bf16 %v1949, %v1948
      %v1982 = vunpack.c.l.b16 %v1950
      %v1983 = vunpack.c.h.b16 %v1950
      %v1984 = vunpack.c.l.b16 %v1951
      %v1985 = vunpack.c.h.b16 %v1951
      %v1986 = vunpack.c.l.b16 %v1952
      %v1987 = vunpack.c.h.b16 %v1952
      %v1988 = vunpack.c.l.b16 %v1953
      %v1989 = vunpack.c.h.b16 %v1953
      %v1990 = vunpack.c.l.b16 %v1954
      %v1991 = vunpack.c.h.b16 %v1954
      %v1992 = vunpack.c.l.b16 %v1955
      %v1993 = vunpack.c.h.b16 %v1955
      %v1994 = vunpack.c.l.b16 %v1956
      %v1995 = vunpack.c.h.b16 %v1956
      %v1996 = vunpack.c.l.b16 %v1957
      %v1997 = vunpack.c.h.b16 %v1957
      %v1998 = vunpack.c.l.b16 %v1958
      %v1999 = vunpack.c.h.b16 %v1958
      %v2000 = vunpack.c.l.b16 %v1959
      %v2001 = vunpack.c.h.b16 %v1959
      %v2002 = vunpack.c.l.b16 %v1960
      %v2003 = vunpack.c.h.b16 %v1960
      %v2004 = vunpack.c.l.b16 %v1961
      %v2005 = vunpack.c.h.b16 %v1961
      %v2006 = vunpack.c.l.b16 %v1962
      %v2007 = vunpack.c.h.b16 %v1962
      %v2008 = vunpack.c.l.b16 %v1963
      %v2009 = vunpack.c.h.b16 %v1963
      %v2010 = vunpack.c.l.b16 %v1964
      %v2011 = vunpack.c.h.b16 %v1964
      %v2012 = vunpack.c.l.b16 %v1965
      %v2013 = vunpack.c.h.b16 %v1965
      %v2014 = vpack.c.b16 %v1982, %v1982
      %v2015 = vpack.c.b16 %v1983, %v1983
      %v2016 = vpack.c.b16 %v1984, %v1984
      %v2017 = vpack.c.b16 %v1985, %v1985
      %v2018 = vpack.c.b16 %v1986, %v1986
      %v2019 = vpack.c.b16 %v1987, %v1987
      %v2020 = vpack.c.b16 %v1988, %v1988
      %v2021 = vpack.c.b16 %v1989, %v1989
      %v2022 = vpack.c.b16 %v1990, %v1990
      %v2023 = vpack.c.b16 %v1991, %v1991
      %v2024 = vpack.c.b16 %v1992, %v1992
      %v2025 = vpack.c.b16 %v1993, %v1993
      %v2026 = vpack.c.b16 %v1994, %v1994
      %v2027 = vpack.c.b16 %v1995, %v1995
      %v2028 = vpack.c.b16 %v1996, %v1996
      %v2029 = vpack.c.b16 %v1997, %v1997
      %v2030 = vpack.c.b16 %v1998, %v1998
      %v2031 = vpack.c.b16 %v1999, %v1999
      %v2032 = vpack.c.b16 %v2000, %v2000
      %v2033 = vpack.c.b16 %v2001, %v2001
      %v2034 = vpack.c.b16 %v2002, %v2002
      %v2035 = vpack.c.b16 %v2003, %v2003
      %v2036 = vpack.c.b16 %v2004, %v2004
      %v2037 = vpack.c.b16 %v2005, %v2005
      %v2038 = vpack.c.b16 %v2006, %v2006
      %v2039 = vpack.c.b16 %v2007, %v2007
      %v2040 = vpack.c.b16 %v2008, %v2008
      %v2041 = vpack.c.b16 %v2009, %v2009
      %v2042 = vpack.c.b16 %v2010, %v2010
      %v2043 = vpack.c.b16 %v2011, %v2011
      %v2044 = vpack.c.b16 %v2012, %v2012
      %v2045 = vpack.c.b16 %v2013, %v2013
      %2078 = vst [vmem:[#allocation13] sm:$0xf] %v2014
      %2079 = vst [vmem:[#allocation13 + $0x4] sm:$0xf] %v2015
      %2080 = vst [vmem:[#allocation13 + $0x8] sm:$0xf] %v2016
      %2081 = vst [vmem:[#allocation13 + $0xc] sm:$0xf] %v2017
      %2082 = vst [vmem:[#allocation13 + $0x10] sm:$0xf] %v2018
      %2083 = vst [vmem:[#allocation13 + $0x14] sm:$0xf] %v2019
      %2084 = vst [vmem:[#allocation13 + $0x18] sm:$0xf] %v2020
      %2085 = vst [vmem:[#allocation13 + $0x1c] sm:$0xf] %v2021
      %2086 = vst [vmem:[#allocation13 + $0x20] sm:$0xf] %v2022
      %2087 = vst [vmem:[#allocation13 + $0x24] sm:$0xf] %v2023
      %2088 = vst [vmem:[#allocation13 + $0x28] sm:$0xf] %v2024
      %2089 = vst [vmem:[#allocation13 + $0x2c] sm:$0xf] %v2025
      %2090 = vst [vmem:[#allocation13 + $0x30] sm:$0xf] %v2026
      %2091 = vst [vmem:[#allocation13 + $0x34] sm:$0xf] %v2027
      %2092 = vst [vmem:[#allocation13 + $0x38] sm:$0xf] %v2028
      %2093 = vst [vmem:[#allocation13 + $0x3c] sm:$0xf] %v2029
      %2094 = vst [vmem:[#allocation13 + $0x40] sm:$0xf] %v2030
      %2095 = vst [vmem:[#allocation13 + $0x44] sm:$0xf] %v2031
      %2096 = vst [vmem:[#allocation13 + $0x48] sm:$0xf] %v2032
      %2097 = vst [vmem:[#allocation13 + $0x4c] sm:$0xf] %v2033
      %2098 = vst [vmem:[#allocation13 + $0x50] sm:$0xf] %v2034
      %2099 = vst [vmem:[#allocation13 + $0x54] sm:$0xf] %v2035
      %2100 = vst [vmem:[#allocation13 + $0x58] sm:$0xf] %v2036
      %2101 = vst [vmem:[#allocation13 + $0x5c] sm:$0xf] %v2037
      %2102 = vst [vmem:[#allocation13 + $0x60] sm:$0xf] %v2038
      %2103 = vst [vmem:[#allocation13 + $0x64] sm:$0xf] %v2039
      %2104 = vst [vmem:[#allocation13 + $0x68] sm:$0xf] %v2040
      %2105 = vst [vmem:[#allocation13 + $0x6c] sm:$0xf] %v2041
      %2106 = vst [vmem:[#allocation13 + $0x70] sm:$0xf] %v2042
      %2107 = vst [vmem:[#allocation13 + $0x74] sm:$0xf] %v2043
      %2108 = vst [vmem:[#allocation13 + $0x78] sm:$0xf] %v2044
      %2109 = vst [vmem:[#allocation13 + $0x7c] sm:$0xf] %v2045
    $region49: #{graphsage_forward.2} parent=1 // pred_fallthru
      _
    // Predicated region
    $region50: #{graphsage_forward.2} parent=1 // pred_check
      _
    $region51: #{graphsage_forward.2} parent=1 // pred_check_branch
      %2111 = sbr.rel (0) target = $region53
    $region52: #{graphsage_forward.2} parent=1 // pred_region
      %s2113 = ssub.s32 2048, 2048
      %2114 = vsyncadd [#allocation6], %s2113
      %s2115 = sshll.u32 [#allocation13], 4
      %s2116 = int_to_ptr.vmem [resolvable:$true] %s2115
      %2121 = dma.vmem_to_hbm [thread:$0]  %s2116, 2048, %s5, [#allocation6], 64, 64, 4
    $region53: #{graphsage_forward.2} parent=1 // pred_fallthru
      _
    // Predicated region
    $region54: #{graphsage_forward.2} parent=1 // pred_check
      _
    $region55: #{graphsage_forward.2} parent=1 // pred_check_branch
      %2123 = sbr.rel (0) target = $region57
    $region56: #{graphsage_forward.2} parent=1 // pred_region
      %s2125 = ssub.s32 4096, 4096
      %2126 = vsyncadd [#allocation15], %s2125
      %s2127 = sshll.u32 [#allocation14], 4
      %s2128 = int_to_ptr.vmem [resolvable:$true] %s2127
      %2133 = dma.vmem_to_hbm [thread:$0]  %s2128, 4096, %s6, [#allocation15], 128, 128, 8
    $region57: #{graphsage_forward.2} parent=1 // pred_fallthru
      _
    // Predicated region
    $region58: #{graphsage_forward.2} parent=1 // pred_check
      _
    $region59: #{graphsage_forward.2} parent=1 // pred_check_branch
      %2135 = sbr.rel (0) target = $region61
    $region60: #{graphsage_forward.2} parent=1 // pred_region
      %2136 = dma.done [#allocation6], 2048
    $region61: #{graphsage_forward.2} parent=1 // pred_fallthru
      _
    // Predicated region
    $region62: #{graphsage_forward.2} parent=1 // pred_check
      _
    $region63: #{graphsage_forward.2} parent=1 // pred_check_branch
      %2138 = sbr.rel (0) target = $region65
    $region64: #{graphsage_forward.2} parent=1 // pred_region
      %2139 = dma.done [#allocation15], 4096
    $region65: #{graphsage_forward.2} parent=1 // pred_fallthru
      _
    %2140 = vsyncpa [#allocation5], 1
    %2141 = vsyncpa [#allocation8], 1
    %2142 = vsyncpa [#allocation11], 1
    %2143 = vsyncpa [#allocation6], 1
    %2144 = vsyncpa [#allocation15], 1

</llo_original>
